<compile_context>
chip_gen: v7x
topology: tpu7x:2x2x1
jax: 0.10.0
libtpu: 0.0.40
codegen_flags: <defaults>
</compile_context>

<pallas_src>
import numpy as np

import jax
import jax.numpy as jnp
from jax.experimental import pallas as pl
from jax.experimental.pallas import tpu as pltpu

K = 16            # kernel_size
PAD = K // 2      # padding = kernel_size // 2


def _lapped_conv_kernel(x_ref, b_ref, o_ref, s_ref):
    # x_ref: VMEM (H, W)              one un-padded input sample (N, C squeezed)
    # b_ref: VMEM (K, TW+2*PAD, TW)   shift-invariant band operand (constant)
    # o_ref: VMEM (H, W)              output (== conv output minus last row/col)
    # s_ref: VMEM (H+2*PAD, W+2*PAD)  f32 scratch: sample with zero halo
    H, W = o_ref.shape
    _, tin, tw = b_ref.shape
    n_wt = W // tw
    cdt = b_ref.dtype                     # MXU operand dtype (f32 or bf16)

    # Rebuild only the thin zero halo every step (~16*(H+W) elems, negligible).
    # Deliberately NOT gated on program_id == 0: on a megacore part each core
    # has its own scratch and may never see grid step 0.
    s_ref[:PAD, :] = jnp.zeros((PAD, W + 2 * PAD), s_ref.dtype)
    s_ref[PAD + H:, :] = jnp.zeros((PAD, W + 2 * PAD), s_ref.dtype)
    s_ref[PAD:PAD + H, :PAD] = jnp.zeros((H, PAD), s_ref.dtype)
    s_ref[PAD:PAD + H, PAD + W:] = jnp.zeros((H, PAD), s_ref.dtype)
    # Interior copy (one pass over the sample; ~3% of MXU time at production
    # sizes - kept for simplicity of the halo handling).
    s_ref[PAD:PAD + H, PAD:PAD + W] = x_ref[...].astype(s_ref.dtype)

    # out[i, c+j] = sum_p sum_m s[p+i, c+m] * B[p, m, j]
    # with B[p, m, j] = w[p, m-j] inside the 16-wide band, else 0.
    # Per lane tile: 16 MXU matmuls with contraction length TW+16 (band only),
    # f32 accumulation held in vregs/VMEM temporaries.
    for wt in range(n_wt):
        c = wt * tw
        acc = jnp.zeros((H, tw), jnp.float32)
        for p in range(K):                         # static slices, unrolled
            lhs = s_ref[p:p + H, c:c + tin].astype(cdt)
            acc = acc + jnp.dot(lhs, b_ref[p],
                                preferred_element_type=jnp.float32)
        o_ref[:, c:c + tw] = acc.astype(o_ref.dtype)


def _build_band(w, tin, tw):
    """w: (K, K) -> B: (K, tin, tw), B[p, m, j] = w[p, m - j] inside the band.

    Encodes the W-direction correlation of the conv for ONE lane tile; the band
    is shift-invariant so the same block is reused by every tile, and the
    lane-direction zero padding is supplied by the haloed scratch.
    """
    m = jnp.arange(tin)[:, None]
    j = jnp.arange(tw)[None, :]
    q = m - j                                      # tap index into w's 2nd axis
    valid = (q >= 0) & (q < K)
    qc = jnp.clip(q, 0, K - 1)
    return jnp.where(valid[None, :, :], w[:, qc], 0.0)


def _band_spec(tin, tw, single_buffer):
    if single_buffer:
        # Constant index map -> no reason to double-buffer this operand.
        return pl.BlockSpec((K, tin, tw), lambda n: (0, 0, 0),
                            pipeline_mode=pl.Buffered(1))
    return pl.BlockSpec((K, tin, tw), lambda n: (0, 0, 0))


def _pallas_conv(x, band, tin, tw, vmem_limit, single_buffer):
    N, _, H, W = x.shape
    return pl.pallas_call(
        _lapped_conv_kernel,
        out_shape=jax.ShapeDtypeStruct((N, 1, H, W), x.dtype),
        grid=(N,),
        in_specs=[
            # one un-padded sample per grid step; N and C axes squeezed away
            pl.BlockSpec((None, None, H, W), lambda n: (n, 0, 0, 0)),
            # constant band operand, fetched once
            _band_spec(tin, tw, single_buffer),
        ],
        out_specs=pl.BlockSpec((None, None, H, W), lambda n: (n, 0, 0, 0)),
        scratch_shapes=[pltpu.VMEM((H + 2 * PAD, W + 2 * PAD), jnp.float32)],
        compiler_params=pltpu.CompilerParams(
            dimension_semantics=("parallel",),
            vmem_limit_bytes=vmem_limit),
    )(x, band)


def lapped_transform(x, w, *, compute_dtype=jnp.float32, lane_tile=256):
    """x: (N, 1, H, W) f32, w: (K, K) f32 -> (N, 1, H, W) f32.

    compute_dtype: dtype of the MXU operands (band + LHS slices).  bfloat16
      gives ~2-3x MXU throughput at ~1e-2 accuracy; accumulation is always f32.
    lane_tile: preferred output lane-tile width (256 for v6e/v7x MXU; use 128
      on v5e).  Falls back to 128, then to the full width for small/unaligned W.
    """
    N, C, H, W = x.shape
    assert C == 1, "LappedTransform uses a single-channel conv"

    if W >= lane_tile and W % lane_tile == 0:
        tw = lane_tile
    elif W >= 128 and W % 128 == 0:
        tw = 128
    else:
        tw = W       # small / non-128-multiple widths: one (possibly masked) tile
    tin = tw + 2 * PAD

    band = _build_band(jnp.asarray(w, jnp.float32), tin, tw).astype(compute_dtype)

    # Size the scoped-VMEM limit from the real per-step footprint (the default
    # scoped limit is only 16/32 MiB on v5e/v6e).
    bpe = np.dtype(compute_dtype).itemsize
    xbytes = H * W * x.dtype.itemsize
    need = (2 * 2 * xbytes                         # double-buffered in/out blocks
            + 2 * K * tin * tw * bpe               # band (worst case 2 buffers)
            + (H + 2 * PAD) * (W + 2 * PAD) * 4    # halo scratch
            + 6 * H * tw * 4)                      # accumulator / temp headroom
    vmem_limit = int(min(max(need * 5 // 4, 32 * 1024 * 1024), 100 * 1024 * 1024))

    try:
        return _pallas_conv(x, band, tin, tw, vmem_limit, single_buffer=True)
    except Exception:  # pipeline_mode=Buffered(1) unsupported on this jax build
        return _pallas_conv(x, band, tin, tw, vmem_limit, single_buffer=False)


def _reference(x, w):
    # Plain-JAX reference: same semantics as the PyTorch forward.
    y = jax.lax.conv_general_dilated(
        x, w.reshape(1, 1, K, K),
        window_strides=(1, 1),
        padding=[(PAD, PAD), (PAD, PAD)],
        dimension_numbers=("NCHW", "OIHW", "NCHW"),
        precision=jax.lax.Precision.HIGHEST,
    )
    return y[:, :, :-1, :-1]


if __name__ == "__main__":
    key = jax.random.PRNGKey(0)
    kw, kd = jax.random.split(key)
    # Deterministic synthetic conv weight ((out=1, in=1, K, K) -> (K, K)).
    w = (jax.random.uniform(kw, (K, K), dtype=jnp.float32) - 0.5) * (2.0 / K)

    # Small shapes consistent with the module; includes non-square, H not a
    # multiple of 8, and a W exercising the 128-wide lane-tiling path.
    shapes = [(2, 1, 16, 16), (2, 1, 20, 24), (1, 1, 24, 384)]
    for shape in shapes:
        kd, kx = jax.random.split(kd)
        x = jax.random.normal(kx, shape, dtype=jnp.float32)
        out = jax.block_until_ready(lapped_transform(x, w))
        ref = _reference(x, w)
        assert out.shape == x.shape, (out.shape, x.shape)
        assert jnp.allclose(out, ref, atol=1e-4, rtol=1e-4), f"f32 mismatch {shape}"

    # bf16 MXU-operand / f32-accumulation fast path (looser tolerance).
    kd, kx = jax.random.split(kd)
    x = jax.random.normal(kx, (2, 1, 16, 16), dtype=jnp.float32)
    out = jax.block_until_ready(lapped_transform(x, w, compute_dtype=jnp.bfloat16))
    ref = _reference(x, w)
    assert jnp.allclose(out, ref, atol=5e-2, rtol=5e-2), "bf16 mismatch"

    print("KERNEL_OK")
</pallas_src>

<mosaic_0001>
module attributes {stable_mosaic.version = 11 : i64} {
  func.func @_lapped_conv_kernel(%arg0: i32, %arg1: memref<1x1x16x16xf32, #tpu.memory_space<vmem>>, %arg2: memref<16x32x16xf32, #tpu.memory_space<vmem>>, %arg3: memref<1x1x16x16xf32, #tpu.memory_space<vmem>>, %arg4: memref<32x32xf32, #tpu.memory_space<vmem>>) attributes {dimension_semantics = [#tpu.dimension_semantics<parallel>], iteration_bounds = array<i64: 2>, scalar_prefetch = 0 : i64, scratch_operands = 1 : i64, tpu.core_type = #tpu.core_type<tc>, window_params = [{transform_indices = @transform_0, window_bounds = array<i64: 1, 1, 16, 16>}, {pipeline_mode = #tpu.pipeline_mode<synchronous>, transform_indices = @transform_1, window_bounds = array<i64: 16, 32, 16>}, {transform_indices = @transform_2, window_bounds = array<i64: 1, 1, 16, 16>}]} {
    %cst = arith.constant 0.000000e+00 : f32
    %0 = vector.broadcast %cst : f32 to vector<8x32xf32>
    %c0 = arith.constant 0 : index
    %c0_0 = arith.constant 0 : index
    %1 = vector.load %arg4[%c0, %c0_0] : memref<32x32xf32, #tpu.memory_space<vmem>>, vector<8x32xf32>
    tpu.vector_store %arg4[%c0, %c0_0], %0 {strides = array<i32>} : memref<32x32xf32, #tpu.memory_space<vmem>>, vector<8x32xf32>,
    %cst_1 = arith.constant 0.000000e+00 : f32
    %2 = vector.broadcast %cst_1 : f32 to vector<8x32xf32>
    %c24 = arith.constant 24 : index
    %c0_2 = arith.constant 0 : index
    %3 = vector.load %arg4[%c24, %c0_2] : memref<32x32xf32, #tpu.memory_space<vmem>>, vector<8x32xf32>
    tpu.vector_store %arg4[%c24, %c0_2], %2 {strides = array<i32>} : memref<32x32xf32, #tpu.memory_space<vmem>>, vector<8x32xf32>,
    %cst_3 = arith.constant 0.000000e+00 : f32
    %4 = vector.broadcast %cst_3 : f32 to vector<16x8xf32>
    %c8 = arith.constant 8 : index
    %c0_4 = arith.constant 0 : index
    %5 = vector.load %arg4[%c8, %c0_4] : memref<32x32xf32, #tpu.memory_space<vmem>>, vector<16x8xf32>
    tpu.vector_store %arg4[%c8, %c0_4], %4 {strides = array<i32>} : memref<32x32xf32, #tpu.memory_space<vmem>>, vector<16x8xf32>,
    %cst_5 = arith.constant 0.000000e+00 : f32
    %6 = vector.broadcast %cst_5 : f32 to vector<16x8xf32>
    %c8_6 = arith.constant 8 : index
    %c24_7 = arith.constant 24 : index
    %7 = vector.load %arg4[%c8_6, %c24_7] : memref<32x32xf32, #tpu.memory_space<vmem>>, vector<16x8xf32>
    tpu.vector_store %arg4[%c8_6, %c24_7], %6 {strides = array<i32>} : memref<32x32xf32, #tpu.memory_space<vmem>>, vector<16x8xf32>,
    %c0_8 = arith.constant 0 : index
    %c0_9 = arith.constant 0 : index
    %c0_10 = arith.constant 0 : index
    %c0_11 = arith.constant 0 : index
    %8 = vector.load %arg1[%c0_8, %c0_9, %c0_10, %c0_11] : memref<1x1x16x16xf32, #tpu.memory_space<vmem>>, vector<1x1x16x16xf32>
    %9 = vector.shape_cast %8 : vector<1x1x16x16xf32> to vector<16x16xf32>
    %c8_12 = arith.constant 8 : index
    %c8_13 = arith.constant 8 : index
    %10 = vector.load %arg4[%c8_12, %c8_13] : memref<32x32xf32, #tpu.memory_space<vmem>>, vector<16x16xf32>
    tpu.vector_store %arg4[%c8_12, %c8_13], %9 {strides = array<i32>} : memref<32x32xf32, #tpu.memory_space<vmem>>, vector<16x16xf32>,
    %cst_14 = arith.constant 0.000000e+00 : f32
    %11 = vector.broadcast %cst_14 : f32 to vector<16x16xf32>
    %c0_15 = arith.constant 0 : index
    %c0_16 = arith.constant 0 : index
    %12 = vector.load %arg4[%c0_15, %c0_16] : memref<32x32xf32, #tpu.memory_space<vmem>>, vector<16x32xf32>
    %c0_17 = arith.constant 0 : index
    %c0_18 = arith.constant 0 : index
    %c0_19 = arith.constant 0 : index
    %13 = vector.load %arg2[%c0_17, %c0_18, %c0_19] : memref<16x32x16xf32, #tpu.memory_space<vmem>>, vector<1x32x16xf32>
    %14 = vector.shape_cast %13 : vector<1x32x16xf32> to vector<32x16xf32>
    %cst_20 = arith.constant dense<0.000000e+00> : vector<16x16xf32>
    %15 = tpu.matmul %12, %14, %cst_20 {dimension_numbers = #tpu.dot_dimension_numbers<[1], [0], [0], [1], [0, 0, 1, 1], [], []>} : vector<16x32xf32>, vector<32x16xf32>, vector<16x16xf32> -> vector<16x16xf32>
    %16 = arith.addf %11, %15 : vector<16x16xf32>
    %c1 = arith.constant 1 : index
    %c0_21 = arith.constant 0 : index
    %17 = vector.load %arg4[%c1, %c0_21] : memref<32x32xf32, #tpu.memory_space<vmem>>, vector<16x32xf32>
    %c1_22 = arith.constant 1 : index
    %c0_23 = arith.constant 0 : index
    %c0_24 = arith.constant 0 : index
    %18 = vector.load %arg2[%c1_22, %c0_23, %c0_24] : memref<16x32x16xf32, #tpu.memory_space<vmem>>, vector<1x32x16xf32>
    %19 = vector.shape_cast %18 : vector<1x32x16xf32> to vector<32x16xf32>
    %cst_25 = arith.constant dense<0.000000e+00> : vector<16x16xf32>
    %20 = tpu.matmul %17, %19, %cst_25 {dimension_numbers = #tpu.dot_dimension_numbers<[1], [0], [0], [1], [0, 0, 1, 1], [], []>} : vector<16x32xf32>, vector<32x16xf32>, vector<16x16xf32> -> vector<16x16xf32>
    %21 = arith.addf %16, %20 : vector<16x16xf32>
    %c2 = arith.constant 2 : index
    %c0_26 = arith.constant 0 : index
    %22 = vector.load %arg4[%c2, %c0_26] : memref<32x32xf32, #tpu.memory_space<vmem>>, vector<16x32xf32>
    %c2_27 = arith.constant 2 : index
    %c0_28 = arith.constant 0 : index
    %c0_29 = arith.constant 0 : index
    %23 = vector.load %arg2[%c2_27, %c0_28, %c0_29] : memref<16x32x16xf32, #tpu.memory_space<vmem>>, vector<1x32x16xf32>
    %24 = vector.shape_cast %23 : vector<1x32x16xf32> to vector<32x16xf32>
    %cst_30 = arith.constant dense<0.000000e+00> : vector<16x16xf32>
    %25 = tpu.matmul %22, %24, %cst_30 {dimension_numbers = #tpu.dot_dimension_numbers<[1], [0], [0], [1], [0, 0, 1, 1], [], []>} : vector<16x32xf32>, vector<32x16xf32>, vector<16x16xf32> -> vector<16x16xf32>
    %26 = arith.addf %21, %25 : vector<16x16xf32>
    %c3 = arith.constant 3 : index
    %c0_31 = arith.constant 0 : index
    %27 = vector.load %arg4[%c3, %c0_31] : memref<32x32xf32, #tpu.memory_space<vmem>>, vector<16x32xf32>
    %c3_32 = arith.constant 3 : index
    %c0_33 = arith.constant 0 : index
    %c0_34 = arith.constant 0 : index
    %28 = vector.load %arg2[%c3_32, %c0_33, %c0_34] : memref<16x32x16xf32, #tpu.memory_space<vmem>>, vector<1x32x16xf32>
    %29 = vector.shape_cast %28 : vector<1x32x16xf32> to vector<32x16xf32>
    %cst_35 = arith.constant dense<0.000000e+00> : vector<16x16xf32>
    %30 = tpu.matmul %27, %29, %cst_35 {dimension_numbers = #tpu.dot_dimension_numbers<[1], [0], [0], [1], [0, 0, 1, 1], [], []>} : vector<16x32xf32>, vector<32x16xf32>, vector<16x16xf32> -> vector<16x16xf32>
    %31 = arith.addf %26, %30 : vector<16x16xf32>
    %c4 = arith.constant 4 : index
    %c0_36 = arith.constant 0 : index
    %32 = vector.load %arg4[%c4, %c0_36] : memref<32x32xf32, #tpu.memory_space<vmem>>, vector<16x32xf32>
    %c4_37 = arith.constant 4 : index
    %c0_38 = arith.constant 0 : index
    %c0_39 = arith.constant 0 : index
    %33 = vector.load %arg2[%c4_37, %c0_38, %c0_39] : memref<16x32x16xf32, #tpu.memory_space<vmem>>, vector<1x32x16xf32>
    %34 = vector.shape_cast %33 : vector<1x32x16xf32> to vector<32x16xf32>
    %cst_40 = arith.constant dense<0.000000e+00> : vector<16x16xf32>
    %35 = tpu.matmul %32, %34, %cst_40 {dimension_numbers = #tpu.dot_dimension_numbers<[1], [0], [0], [1], [0, 0, 1, 1], [], []>} : vector<16x32xf32>, vector<32x16xf32>, vector<16x16xf32> -> vector<16x16xf32>
    %36 = arith.addf %31, %35 : vector<16x16xf32>
    %c5 = arith.constant 5 : index
    %c0_41 = arith.constant 0 : index
    %37 = vector.load %arg4[%c5, %c0_41] : memref<32x32xf32, #tpu.memory_space<vmem>>, vector<16x32xf32>
    %c5_42 = arith.constant 5 : index
    %c0_43 = arith.constant 0 : index
    %c0_44 = arith.constant 0 : index
    %38 = vector.load %arg2[%c5_42, %c0_43, %c0_44] : memref<16x32x16xf32, #tpu.memory_space<vmem>>, vector<1x32x16xf32>
    %39 = vector.shape_cast %38 : vector<1x32x16xf32> to vector<32x16xf32>
    %cst_45 = arith.constant dense<0.000000e+00> : vector<16x16xf32>
    %40 = tpu.matmul %37, %39, %cst_45 {dimension_numbers = #tpu.dot_dimension_numbers<[1], [0], [0], [1], [0, 0, 1, 1], [], []>} : vector<16x32xf32>, vector<32x16xf32>, vector<16x16xf32> -> vector<16x16xf32>
    %41 = arith.addf %36, %40 : vector<16x16xf32>
    %c6 = arith.constant 6 : index
    %c0_46 = arith.constant 0 : index
    %42 = vector.load %arg4[%c6, %c0_46] : memref<32x32xf32, #tpu.memory_space<vmem>>, vector<16x32xf32>
    %c6_47 = arith.constant 6 : index
    %c0_48 = arith.constant 0 : index
    %c0_49 = arith.constant 0 : index
    %43 = vector.load %arg2[%c6_47, %c0_48, %c0_49] : memref<16x32x16xf32, #tpu.memory_space<vmem>>, vector<1x32x16xf32>
    %44 = vector.shape_cast %43 : vector<1x32x16xf32> to vector<32x16xf32>
    %cst_50 = arith.constant dense<0.000000e+00> : vector<16x16xf32>
    %45 = tpu.matmul %42, %44, %cst_50 {dimension_numbers = #tpu.dot_dimension_numbers<[1], [0], [0], [1], [0, 0, 1, 1], [], []>} : vector<16x32xf32>, vector<32x16xf32>, vector<16x16xf32> -> vector<16x16xf32>
    %46 = arith.addf %41, %45 : vector<16x16xf32>
    %c7 = arith.constant 7 : index
    %c0_51 = arith.constant 0 : index
    %47 = vector.load %arg4[%c7, %c0_51] : memref<32x32xf32, #tpu.memory_space<vmem>>, vector<16x32xf32>
    %c7_52 = arith.constant 7 : index
    %c0_53 = arith.constant 0 : index
    %c0_54 = arith.constant 0 : index
    %48 = vector.load %arg2[%c7_52, %c0_53, %c0_54] : memref<16x32x16xf32, #tpu.memory_space<vmem>>, vector<1x32x16xf32>
    %49 = vector.shape_cast %48 : vector<1x32x16xf32> to vector<32x16xf32>
    %cst_55 = arith.constant dense<0.000000e+00> : vector<16x16xf32>
    %50 = tpu.matmul %47, %49, %cst_55 {dimension_numbers = #tpu.dot_dimension_numbers<[1], [0], [0], [1], [0, 0, 1, 1], [], []>} : vector<16x32xf32>, vector<32x16xf32>, vector<16x16xf32> -> vector<16x16xf32>
    %51 = arith.addf %46, %50 : vector<16x16xf32>
    %c8_56 = arith.constant 8 : index
    %c0_57 = arith.constant 0 : index
    %52 = vector.load %arg4[%c8_56, %c0_57] : memref<32x32xf32, #tpu.memory_space<vmem>>, vector<16x32xf32>
    %c8_58 = arith.constant 8 : index
    %c0_59 = arith.constant 0 : index
    %c0_60 = arith.constant 0 : index
    %53 = vector.load %arg2[%c8_58, %c0_59, %c0_60] : memref<16x32x16xf32, #tpu.memory_space<vmem>>, vector<1x32x16xf32>
    %54 = vector.shape_cast %53 : vector<1x32x16xf32> to vector<32x16xf32>
    %cst_61 = arith.constant dense<0.000000e+00> : vector<16x16xf32>
    %55 = tpu.matmul %52, %54, %cst_61 {dimension_numbers = #tpu.dot_dimension_numbers<[1], [0], [0], [1], [0, 0, 1, 1], [], []>} : vector<16x32xf32>, vector<32x16xf32>, vector<16x16xf32> -> vector<16x16xf32>
    %56 = arith.addf %51, %55 : vector<16x16xf32>
    %c9 = arith.constant 9 : index
    %c0_62 = arith.constant 0 : index
    %57 = vector.load %arg4[%c9, %c0_62] : memref<32x32xf32, #tpu.memory_space<vmem>>, vector<16x32xf32>
    %c9_63 = arith.constant 9 : index
    %c0_64 = arith.constant 0 : index
    %c0_65 = arith.constant 0 : index
    %58 = vector.load %arg2[%c9_63, %c0_64, %c0_65] : memref<16x32x16xf32, #tpu.memory_space<vmem>>, vector<1x32x16xf32>
    %59 = vector.shape_cast %58 : vector<1x32x16xf32> to vector<32x16xf32>
    %cst_66 = arith.constant dense<0.000000e+00> : vector<16x16xf32>
    %60 = tpu.matmul %57, %59, %cst_66 {dimension_numbers = #tpu.dot_dimension_numbers<[1], [0], [0], [1], [0, 0, 1, 1], [], []>} : vector<16x32xf32>, vector<32x16xf32>, vector<16x16xf32> -> vector<16x16xf32>
    %61 = arith.addf %56, %60 : vector<16x16xf32>
    %c10 = arith.constant 10 : index
    %c0_67 = arith.constant 0 : index
    %62 = vector.load %arg4[%c10, %c0_67] : memref<32x32xf32, #tpu.memory_space<vmem>>, vector<16x32xf32>
    %c10_68 = arith.constant 10 : index
    %c0_69 = arith.constant 0 : index
    %c0_70 = arith.constant 0 : index
    %63 = vector.load %arg2[%c10_68, %c0_69, %c0_70] : memref<16x32x16xf32, #tpu.memory_space<vmem>>, vector<1x32x16xf32>
    %64 = vector.shape_cast %63 : vector<1x32x16xf32> to vector<32x16xf32>
    %cst_71 = arith.constant dense<0.000000e+00> : vector<16x16xf32>
    %65 = tpu.matmul %62, %64, %cst_71 {dimension_numbers = #tpu.dot_dimension_numbers<[1], [0], [0], [1], [0, 0, 1, 1], [], []>} : vector<16x32xf32>, vector<32x16xf32>, vector<16x16xf32> -> vector<16x16xf32>
    %66 = arith.addf %61, %65 : vector<16x16xf32>
    %c11 = arith.constant 11 : index
    %c0_72 = arith.constant 0 : index
    %67 = vector.load %arg4[%c11, %c0_72] : memref<32x32xf32, #tpu.memory_space<vmem>>, vector<16x32xf32>
    %c11_73 = arith.constant 11 : index
    %c0_74 = arith.constant 0 : index
    %c0_75 = arith.constant 0 : index
    %68 = vector.load %arg2[%c11_73, %c0_74, %c0_75] : memref<16x32x16xf32, #tpu.memory_space<vmem>>, vector<1x32x16xf32>
    %69 = vector.shape_cast %68 : vector<1x32x16xf32> to vector<32x16xf32>
    %cst_76 = arith.constant dense<0.000000e+00> : vector<16x16xf32>
    %70 = tpu.matmul %67, %69, %cst_76 {dimension_numbers = #tpu.dot_dimension_numbers<[1], [0], [0], [1], [0, 0, 1, 1], [], []>} : vector<16x32xf32>, vector<32x16xf32>, vector<16x16xf32> -> vector<16x16xf32>
    %71 = arith.addf %66, %70 : vector<16x16xf32>
    %c12 = arith.constant 12 : index
    %c0_77 = arith.constant 0 : index
    %72 = vector.load %arg4[%c12, %c0_77] : memref<32x32xf32, #tpu.memory_space<vmem>>, vector<16x32xf32>
    %c12_78 = arith.constant 12 : index
    %c0_79 = arith.constant 0 : index
    %c0_80 = arith.constant 0 : index
    %73 = vector.load %arg2[%c12_78, %c0_79, %c0_80] : memref<16x32x16xf32, #tpu.memory_space<vmem>>, vector<1x32x16xf32>
    %74 = vector.shape_cast %73 : vector<1x32x16xf32> to vector<32x16xf32>
    %cst_81 = arith.constant dense<0.000000e+00> : vector<16x16xf32>
    %75 = tpu.matmul %72, %74, %cst_81 {dimension_numbers = #tpu.dot_dimension_numbers<[1], [0], [0], [1], [0, 0, 1, 1], [], []>} : vector<16x32xf32>, vector<32x16xf32>, vector<16x16xf32> -> vector<16x16xf32>
    %76 = arith.addf %71, %75 : vector<16x16xf32>
    %c13 = arith.constant 13 : index
    %c0_82 = arith.constant 0 : index
    %77 = vector.load %arg4[%c13, %c0_82] : memref<32x32xf32, #tpu.memory_space<vmem>>, vector<16x32xf32>
    %c13_83 = arith.constant 13 : index
    %c0_84 = arith.constant 0 : index
    %c0_85 = arith.constant 0 : index
    %78 = vector.load %arg2[%c13_83, %c0_84, %c0_85] : memref<16x32x16xf32, #tpu.memory_space<vmem>>, vector<1x32x16xf32>
    %79 = vector.shape_cast %78 : vector<1x32x16xf32> to vector<32x16xf32>
    %cst_86 = arith.constant dense<0.000000e+00> : vector<16x16xf32>
    %80 = tpu.matmul %77, %79, %cst_86 {dimension_numbers = #tpu.dot_dimension_numbers<[1], [0], [0], [1], [0, 0, 1, 1], [], []>} : vector<16x32xf32>, vector<32x16xf32>, vector<16x16xf32> -> vector<16x16xf32>
    %81 = arith.addf %76, %80 : vector<16x16xf32>
    %c14 = arith.constant 14 : index
    %c0_87 = arith.constant 0 : index
    %82 = vector.load %arg4[%c14, %c0_87] : memref<32x32xf32, #tpu.memory_space<vmem>>, vector<16x32xf32>
    %c14_88 = arith.constant 14 : index
    %c0_89 = arith.constant 0 : index
    %c0_90 = arith.constant 0 : index
    %83 = vector.load %arg2[%c14_88, %c0_89, %c0_90] : memref<16x32x16xf32, #tpu.memory_space<vmem>>, vector<1x32x16xf32>
    %84 = vector.shape_cast %83 : vector<1x32x16xf32> to vector<32x16xf32>
    %cst_91 = arith.constant dense<0.000000e+00> : vector<16x16xf32>
    %85 = tpu.matmul %82, %84, %cst_91 {dimension_numbers = #tpu.dot_dimension_numbers<[1], [0], [0], [1], [0, 0, 1, 1], [], []>} : vector<16x32xf32>, vector<32x16xf32>, vector<16x16xf32> -> vector<16x16xf32>
    %86 = arith.addf %81, %85 : vector<16x16xf32>
    %c15 = arith.constant 15 : index
    %c0_92 = arith.constant 0 : index
    %87 = vector.load %arg4[%c15, %c0_92] : memref<32x32xf32, #tpu.memory_space<vmem>>, vector<16x32xf32>
    %c15_93 = arith.constant 15 : index
    %c0_94 = arith.constant 0 : index
    %c0_95 = arith.constant 0 : index
    %88 = vector.load %arg2[%c15_93, %c0_94, %c0_95] : memref<16x32x16xf32, #tpu.memory_space<vmem>>, vector<1x32x16xf32>
    %89 = vector.shape_cast %88 : vector<1x32x16xf32> to vector<32x16xf32>
    %cst_96 = arith.constant dense<0.000000e+00> : vector<16x16xf32>
    %90 = tpu.matmul %87, %89, %cst_96 {dimension_numbers = #tpu.dot_dimension_numbers<[1], [0], [0], [1], [0, 0, 1, 1], [], []>} : vector<16x32xf32>, vector<32x16xf32>, vector<16x16xf32> -> vector<16x16xf32>
    %91 = arith.addf %86, %90 : vector<16x16xf32>
    %c0_97 = arith.constant 0 : index
    %c0_98 = arith.constant 0 : index
    %c0_99 = arith.constant 0 : index
    %c0_100 = arith.constant 0 : index
    %92 = vector.load %arg3[%c0_97, %c0_98, %c0_99, %c0_100] : memref<1x1x16x16xf32, #tpu.memory_space<vmem>>, vector<1x1x16x16xf32>
    %93 = vector.shape_cast %92 : vector<1x1x16x16xf32> to vector<16x16xf32>
    %94 = vector.shape_cast %91 : vector<16x16xf32> to vector<1x1x16x16xf32>
    tpu.vector_store %arg3[%c0_97, %c0_98, %c0_99, %c0_100], %94 {strides = array<i32>} : memref<1x1x16x16xf32, #tpu.memory_space<vmem>>, vector<1x1x16x16xf32>,
    return
  }
  func.func @transform_0(%arg0: i32) -> (i32, i32, i32, i32) {
    %c0_i32 = arith.constant 0 : i32
    %c0_i32_0 = arith.constant 0 : i32
    %c0_i32_1 = arith.constant 0 : i32
    %c0_i32_2 = arith.constant 0 : i32
    return %arg0, %c0_i32, %c0_i32_0, %c0_i32_1 : i32, i32, i32, i32
  }
  func.func @transform_1(%arg0: i32) -> (i32, i32, i32) {
    %c0_i32 = arith.constant 0 : i32
    %c0_i32_0 = arith.constant 0 : i32
    %c0_i32_1 = arith.constant 0 : i32
    %c0_i32_2 = arith.constant 0 : i32
    return %c0_i32, %c0_i32_0, %c0_i32_1 : i32, i32, i32
  }
  func.func @transform_2(%arg0: i32) -> (i32, i32, i32, i32) {
    %c0_i32 = arith.constant 0 : i32
    %c0_i32_0 = arith.constant 0 : i32
    %c0_i32_1 = arith.constant 0 : i32
    %c0_i32_2 = arith.constant 0 : i32
    return %arg0, %c0_i32, %c0_i32_0, %c0_i32_1 : i32, i32, i32, i32
  }
}

module attributes {stable_mosaic.version = 11 : i64} {
  func.func @_lapped_conv_kernel(%arg0: i32, %arg1: memref<1x1x16x16xf32, #tpu.memory_space<vmem>>, %arg2: memref<16x32x16xf32, #tpu.memory_space<vmem>>, %arg3: memref<1x1x16x16xf32, #tpu.memory_space<vmem>>, %arg4: memref<32x32xf32, #tpu.memory_space<vmem>>) attributes {dimension_semantics = [#tpu.dimension_semantics<parallel>], iteration_bounds = array<i64: 2>, scalar_prefetch = 0 : i64, scratch_operands = 1 : i64, tpu.core_type = #tpu.core_type<tc>, window_params = [{transform_indices = @transform_0, window_bounds = array<i64: 1, 1, 16, 16>}, {pipeline_mode = #tpu.pipeline_mode<synchronous>, transform_indices = @transform_1, window_bounds = array<i64: 16, 32, 16>}, {transform_indices = @transform_2, window_bounds = array<i64: 1, 1, 16, 16>}]} {
    %cst = arith.constant 0.000000e+00 : f32
    %0 = vector.broadcast %cst : f32 to vector<8x32xf32>
    %c0 = arith.constant 0 : index
    %c0_0 = arith.constant 0 : index
    %1 = vector.load %arg4[%c0, %c0_0] : memref<32x32xf32, #tpu.memory_space<vmem>>, vector<8x32xf32>
    tpu.vector_store %arg4[%c0, %c0_0], %0 {strides = array<i32>} : memref<32x32xf32, #tpu.memory_space<vmem>>, vector<8x32xf32>,
    %cst_1 = arith.constant 0.000000e+00 : f32
    %2 = vector.broadcast %cst_1 : f32 to vector<8x32xf32>
    %c24 = arith.constant 24 : index
    %c0_2 = arith.constant 0 : index
    %3 = vector.load %arg4[%c24, %c0_2] : memref<32x32xf32, #tpu.memory_space<vmem>>, vector<8x32xf32>
    tpu.vector_store %arg4[%c24, %c0_2], %2 {strides = array<i32>} : memref<32x32xf32, #tpu.memory_space<vmem>>, vector<8x32xf32>,
    %cst_3 = arith.constant 0.000000e+00 : f32
    %4 = vector.broadcast %cst_3 : f32 to vector<16x8xf32>
    %c8 = arith.constant 8 : index
    %c0_4 = arith.constant 0 : index
    %5 = vector.load %arg4[%c8, %c0_4] : memref<32x32xf32, #tpu.memory_space<vmem>>, vector<16x8xf32>
    tpu.vector_store %arg4[%c8, %c0_4], %4 {strides = array<i32>} : memref<32x32xf32, #tpu.memory_space<vmem>>, vector<16x8xf32>,
    %cst_5 = arith.constant 0.000000e+00 : f32
    %6 = vector.broadcast %cst_5 : f32 to vector<16x8xf32>
    %c8_6 = arith.constant 8 : index
    %c24_7 = arith.constant 24 : index
    %7 = vector.load %arg4[%c8_6, %c24_7] : memref<32x32xf32, #tpu.memory_space<vmem>>, vector<16x8xf32>
    tpu.vector_store %arg4[%c8_6, %c24_7], %6 {strides = array<i32>} : memref<32x32xf32, #tpu.memory_space<vmem>>, vector<16x8xf32>,
    %c0_8 = arith.constant 0 : index
    %c0_9 = arith.constant 0 : index
    %c0_10 = arith.constant 0 : index
    %c0_11 = arith.constant 0 : index
    %8 = vector.load %arg1[%c0_8, %c0_9, %c0_10, %c0_11] : memref<1x1x16x16xf32, #tpu.memory_space<vmem>>, vector<1x1x16x16xf32>
    %9 = vector.shape_cast %8 : vector<1x1x16x16xf32> to vector<16x16xf32>
    %c8_12 = arith.constant 8 : index
    %c8_13 = arith.constant 8 : index
    %10 = vector.load %arg4[%c8_12, %c8_13] : memref<32x32xf32, #tpu.memory_space<vmem>>, vector<16x16xf32>
    tpu.vector_store %arg4[%c8_12, %c8_13], %9 {strides = array<i32>} : memref<32x32xf32, #tpu.memory_space<vmem>>, vector<16x16xf32>,
    %cst_14 = arith.constant 0.000000e+00 : f32
    %11 = vector.broadcast %cst_14 : f32 to vector<16x16xf32>
    %c0_15 = arith.constant 0 : index
    %c0_16 = arith.constant 0 : index
    %12 = vector.load %arg4[%c0_15, %c0_16] : memref<32x32xf32, #tpu.memory_space<vmem>>, vector<16x32xf32>
    %c0_17 = arith.constant 0 : index
    %c0_18 = arith.constant 0 : index
    %c0_19 = arith.constant 0 : index
    %13 = vector.load %arg2[%c0_17, %c0_18, %c0_19] : memref<16x32x16xf32, #tpu.memory_space<vmem>>, vector<1x32x16xf32>
    %14 = vector.shape_cast %13 : vector<1x32x16xf32> to vector<32x16xf32>
    %cst_20 = arith.constant dense<0.000000e+00> : vector<16x16xf32>
    %15 = tpu.matmul %12, %14, %cst_20 {dimension_numbers = #tpu.dot_dimension_numbers<[1], [0], [0], [1], [0, 0, 1, 1], [], []>} : vector<16x32xf32>, vector<32x16xf32>, vector<16x16xf32> -> vector<16x16xf32>
    %16 = arith.addf %11, %15 : vector<16x16xf32>
    %c1 = arith.constant 1 : index
    %c0_21 = arith.constant 0 : index
    %17 = vector.load %arg4[%c1, %c0_21] : memref<32x32xf32, #tpu.memory_space<vmem>>, vector<16x32xf32>
    %c1_22 = arith.constant 1 : index
    %c0_23 = arith.constant 0 : index
    %c0_24 = arith.constant 0 : index
    %18 = vector.load %arg2[%c1_22, %c0_23, %c0_24] : memref<16x32x16xf32, #tpu.memory_space<vmem>>, vector<1x32x16xf32>
    %19 = vector.shape_cast %18 : vector<1x32x16xf32> to vector<32x16xf32>
    %cst_25 = arith.constant dense<0.000000e+00> : vector<16x16xf32>
    %20 = tpu.matmul %17, %19, %cst_25 {dimension_numbers = #tpu.dot_dimension_numbers<[1], [0], [0], [1], [0, 0, 1, 1], [], []>} : vector<16x32xf32>, vector<32x16xf32>, vector<16x16xf32> -> vector<16x16xf32>
    %21 = arith.addf %16, %20 : vector<16x16xf32>
    %c2 = arith.constant 2 : index
    %c0_26 = arith.constant 0 : index
    %22 = vector.load %arg4[%c2, %c0_26] : memref<32x32xf32, #tpu.memory_space<vmem>>, vector<16x32xf32>
    %c2_27 = arith.constant 2 : index
    %c0_28 = arith.constant 0 : index
    %c0_29 = arith.constant 0 : index
    %23 = vector.load %arg2[%c2_27, %c0_28, %c0_29] : memref<16x32x16xf32, #tpu.memory_space<vmem>>, vector<1x32x16xf32>
    %24 = vector.shape_cast %23 : vector<1x32x16xf32> to vector<32x16xf32>
    %cst_30 = arith.constant dense<0.000000e+00> : vector<16x16xf32>
    %25 = tpu.matmul %22, %24, %cst_30 {dimension_numbers = #tpu.dot_dimension_numbers<[1], [0], [0], [1], [0, 0, 1, 1], [], []>} : vector<16x32xf32>, vector<32x16xf32>, vector<16x16xf32> -> vector<16x16xf32>
    %26 = arith.addf %21, %25 : vector<16x16xf32>
    %c3 = arith.constant 3 : index
    %c0_31 = arith.constant 0 : index
    %27 = vector.load %arg4[%c3, %c0_31] : memref<32x32xf32, #tpu.memory_space<vmem>>, vector<16x32xf32>
    %c3_32 = arith.constant 3 : index
    %c0_33 = arith.constant 0 : index
    %c0_34 = arith.constant 0 : index
    %28 = vector.load %arg2[%c3_32, %c0_33, %c0_34] : memref<16x32x16xf32, #tpu.memory_space<vmem>>, vector<1x32x16xf32>
    %29 = vector.shape_cast %28 : vector<1x32x16xf32> to vector<32x16xf32>
    %cst_35 = arith.constant dense<0.000000e+00> : vector<16x16xf32>
    %30 = tpu.matmul %27, %29, %cst_35 {dimension_numbers = #tpu.dot_dimension_numbers<[1], [0], [0], [1], [0, 0, 1, 1], [], []>} : vector<16x32xf32>, vector<32x16xf32>, vector<16x16xf32> -> vector<16x16xf32>
    %31 = arith.addf %26, %30 : vector<16x16xf32>
    %c4 = arith.constant 4 : index
    %c0_36 = arith.constant 0 : index
    %32 = vector.load %arg4[%c4, %c0_36] : memref<32x32xf32, #tpu.memory_space<vmem>>, vector<16x32xf32>
    %c4_37 = arith.constant 4 : index
    %c0_38 = arith.constant 0 : index
    %c0_39 = arith.constant 0 : index
    %33 = vector.load %arg2[%c4_37, %c0_38, %c0_39] : memref<16x32x16xf32, #tpu.memory_space<vmem>>, vector<1x32x16xf32>
    %34 = vector.shape_cast %33 : vector<1x32x16xf32> to vector<32x16xf32>
    %cst_40 = arith.constant dense<0.000000e+00> : vector<16x16xf32>
    %35 = tpu.matmul %32, %34, %cst_40 {dimension_numbers = #tpu.dot_dimension_numbers<[1], [0], [0], [1], [0, 0, 1, 1], [], []>} : vector<16x32xf32>, vector<32x16xf32>, vector<16x16xf32> -> vector<16x16xf32>
    %36 = arith.addf %31, %35 : vector<16x16xf32>
    %c5 = arith.constant 5 : index
    %c0_41 = arith.constant 0 : index
    %37 = vector.load %arg4[%c5, %c0_41] : memref<32x32xf32, #tpu.memory_space<vmem>>, vector<16x32xf32>
    %c5_42 = arith.constant 5 : index
    %c0_43 = arith.constant 0 : index
    %c0_44 = arith.constant 0 : index
    %38 = vector.load %arg2[%c5_42, %c0_43, %c0_44] : memref<16x32x16xf32, #tpu.memory_space<vmem>>, vector<1x32x16xf32>
    %39 = vector.shape_cast %38 : vector<1x32x16xf32> to vector<32x16xf32>
    %cst_45 = arith.constant dense<0.000000e+00> : vector<16x16xf32>
    %40 = tpu.matmul %37, %39, %cst_45 {dimension_numbers = #tpu.dot_dimension_numbers<[1], [0], [0], [1], [0, 0, 1, 1], [], []>} : vector<16x32xf32>, vector<32x16xf32>, vector<16x16xf32> -> vector<16x16xf32>
    %41 = arith.addf %36, %40 : vector<16x16xf32>
    %c6 = arith.constant 6 : index
    %c0_46 = arith.constant 0 : index
    %42 = vector.load %arg4[%c6, %c0_46] : memref<32x32xf32, #tpu.memory_space<vmem>>, vector<16x32xf32>
    %c6_47 = arith.constant 6 : index
    %c0_48 = arith.constant 0 : index
    %c0_49 = arith.constant 0 : index
    %43 = vector.load %arg2[%c6_47, %c0_48, %c0_49] : memref<16x32x16xf32, #tpu.memory_space<vmem>>, vector<1x32x16xf32>
    %44 = vector.shape_cast %43 : vector<1x32x16xf32> to vector<32x16xf32>
    %cst_50 = arith.constant dense<0.000000e+00> : vector<16x16xf32>
    %45 = tpu.matmul %42, %44, %cst_50 {dimension_numbers = #tpu.dot_dimension_numbers<[1], [0], [0], [1], [0, 0, 1, 1], [], []>} : vector<16x32xf32>, vector<32x16xf32>, vector<16x16xf32> -> vector<16x16xf32>
    %46 = arith.addf %41, %45 : vector<16x16xf32>
    %c7 = arith.constant 7 : index
    %c0_51 = arith.constant 0 : index
    %47 = vector.load %arg4[%c7, %c0_51] : memref<32x32xf32, #tpu.memory_space<vmem>>, vector<16x32xf32>
    %c7_52 = arith.constant 7 : index
    %c0_53 = arith.constant 0 : index
    %c0_54 = arith.constant 0 : index
    %48 = vector.load %arg2[%c7_52, %c0_53, %c0_54] : memref<16x32x16xf32, #tpu.memory_space<vmem>>, vector<1x32x16xf32>
    %49 = vector.shape_cast %48 : vector<1x32x16xf32> to vector<32x16xf32>
    %cst_55 = arith.constant dense<0.000000e+00> : vector<16x16xf32>
    %50 = tpu.matmul %47, %49, %cst_55 {dimension_numbers = #tpu.dot_dimension_numbers<[1], [0], [0], [1], [0, 0, 1, 1], [], []>} : vector<16x32xf32>, vector<32x16xf32>, vector<16x16xf32> -> vector<16x16xf32>
    %51 = arith.addf %46, %50 : vector<16x16xf32>
    %c8_56 = arith.constant 8 : index
    %c0_57 = arith.constant 0 : index
    %52 = vector.load %arg4[%c8_56, %c0_57] : memref<32x32xf32, #tpu.memory_space<vmem>>, vector<16x32xf32>
    %c8_58 = arith.constant 8 : index
    %c0_59 = arith.constant 0 : index
    %c0_60 = arith.constant 0 : index
    %53 = vector.load %arg2[%c8_58, %c0_59, %c0_60] : memref<16x32x16xf32, #tpu.memory_space<vmem>>, vector<1x32x16xf32>
    %54 = vector.shape_cast %53 : vector<1x32x16xf32> to vector<32x16xf32>
    %cst_61 = arith.constant dense<0.000000e+00> : vector<16x16xf32>
    %55 = tpu.matmul %52, %54, %cst_61 {dimension_numbers = #tpu.dot_dimension_numbers<[1], [0], [0], [1], [0, 0, 1, 1], [], []>} : vector<16x32xf32>, vector<32x16xf32>, vector<16x16xf32> -> vector<16x16xf32>
    %56 = arith.addf %51, %55 : vector<16x16xf32>
    %c9 = arith.constant 9 : index
    %c0_62 = arith.constant 0 : index
    %57 = vector.load %arg4[%c9, %c0_62] : memref<32x32xf32, #tpu.memory_space<vmem>>, vector<16x32xf32>
    %c9_63 = arith.constant 9 : index
    %c0_64 = arith.constant 0 : index
    %c0_65 = arith.constant 0 : index
    %58 = vector.load %arg2[%c9_63, %c0_64, %c0_65] : memref<16x32x16xf32, #tpu.memory_space<vmem>>, vector<1x32x16xf32>
    %59 = vector.shape_cast %58 : vector<1x32x16xf32> to vector<32x16xf32>
    %cst_66 = arith.constant dense<0.000000e+00> : vector<16x16xf32>
    %60 = tpu.matmul %57, %59, %cst_66 {dimension_numbers = #tpu.dot_dimension_numbers<[1], [0], [0], [1], [0, 0, 1, 1], [], []>} : vector<16x32xf32>, vector<32x16xf32>, vector<16x16xf32> -> vector<16x16xf32>
    %61 = arith.addf %56, %60 : vector<16x16xf32>
    %c10 = arith.constant 10 : index
    %c0_67 = arith.constant 0 : index
    %62 = vector.load %arg4[%c10, %c0_67] : memref<32x32xf32, #tpu.memory_space<vmem>>, vector<16x32xf32>
    %c10_68 = arith.constant 10 : index
    %c0_69 = arith.constant 0 : index
    %c0_70 = arith.constant 0 : index
    %63 = vector.load %arg2[%c10_68, %c0_69, %c0_70] : memref<16x32x16xf32, #tpu.memory_space<vmem>>, vector<1x32x16xf32>
    %64 = vector.shape_cast %63 : vector<1x32x16xf32> to vector<32x16xf32>
    %cst_71 = arith.constant dense<0.000000e+00> : vector<16x16xf32>
    %65 = tpu.matmul %62, %64, %cst_71 {dimension_numbers = #tpu.dot_dimension_numbers<[1], [0], [0], [1], [0, 0, 1, 1], [], []>} : vector<16x32xf32>, vector<32x16xf32>, vector<16x16xf32> -> vector<16x16xf32>
    %66 = arith.addf %61, %65 : vector<16x16xf32>
    %c11 = arith.constant 11 : index
    %c0_72 = arith.constant 0 : index
    %67 = vector.load %arg4[%c11, %c0_72] : memref<32x32xf32, #tpu.memory_space<vmem>>, vector<16x32xf32>
    %c11_73 = arith.constant 11 : index
    %c0_74 = arith.constant 0 : index
    %c0_75 = arith.constant 0 : index
    %68 = vector.load %arg2[%c11_73, %c0_74, %c0_75] : memref<16x32x16xf32, #tpu.memory_space<vmem>>, vector<1x32x16xf32>
    %69 = vector.shape_cast %68 : vector<1x32x16xf32> to vector<32x16xf32>
    %cst_76 = arith.constant dense<0.000000e+00> : vector<16x16xf32>
    %70 = tpu.matmul %67, %69, %cst_76 {dimension_numbers = #tpu.dot_dimension_numbers<[1], [0], [0], [1], [0, 0, 1, 1], [], []>} : vector<16x32xf32>, vector<32x16xf32>, vector<16x16xf32> -> vector<16x16xf32>
    %71 = arith.addf %66, %70 : vector<16x16xf32>
    %c12 = arith.constant 12 : index
    %c0_77 = arith.constant 0 : index
    %72 = vector.load %arg4[%c12, %c0_77] : memref<32x32xf32, #tpu.memory_space<vmem>>, vector<16x32xf32>
    %c12_78 = arith.constant 12 : index
    %c0_79 = arith.constant 0 : index
    %c0_80 = arith.constant 0 : index
    %73 = vector.load %arg2[%c12_78, %c0_79, %c0_80] : memref<16x32x16xf32, #tpu.memory_space<vmem>>, vector<1x32x16xf32>
    %74 = vector.shape_cast %73 : vector<1x32x16xf32> to vector<32x16xf32>
    %cst_81 = arith.constant dense<0.000000e+00> : vector<16x16xf32>
    %75 = tpu.matmul %72, %74, %cst_81 {dimension_numbers = #tpu.dot_dimension_numbers<[1], [0], [0], [1], [0, 0, 1, 1], [], []>} : vector<16x32xf32>, vector<32x16xf32>, vector<16x16xf32> -> vector<16x16xf32>
    %76 = arith.addf %71, %75 : vector<16x16xf32>
    %c13 = arith.constant 13 : index
    %c0_82 = arith.constant 0 : index
    %77 = vector.load %arg4[%c13, %c0_82] : memref<32x32xf32, #tpu.memory_space<vmem>>, vector<16x32xf32>
    %c13_83 = arith.constant 13 : index
    %c0_84 = arith.constant 0 : index
    %c0_85 = arith.constant 0 : index
    %78 = vector.load %arg2[%c13_83, %c0_84, %c0_85] : memref<16x32x16xf32, #tpu.memory_space<vmem>>, vector<1x32x16xf32>
    %79 = vector.shape_cast %78 : vector<1x32x16xf32> to vector<32x16xf32>
    %cst_86 = arith.constant dense<0.000000e+00> : vector<16x16xf32>
    %80 = tpu.matmul %77, %79, %cst_86 {dimension_numbers = #tpu.dot_dimension_numbers<[1], [0], [0], [1], [0, 0, 1, 1], [], []>} : vector<16x32xf32>, vector<32x16xf32>, vector<16x16xf32> -> vector<16x16xf32>
    %81 = arith.addf %76, %80 : vector<16x16xf32>
    %c14 = arith.constant 14 : index
    %c0_87 = arith.constant 0 : index
    %82 = vector.load %arg4[%c14, %c0_87] : memref<32x32xf32, #tpu.memory_space<vmem>>, vector<16x32xf32>
    %c14_88 = arith.constant 14 : index
    %c0_89 = arith.constant 0 : index
    %c0_90 = arith.constant 0 : index
    %83 = vector.load %arg2[%c14_88, %c0_89, %c0_90] : memref<16x32x16xf32, #tpu.memory_space<vmem>>, vector<1x32x16xf32>
    %84 = vector.shape_cast %83 : vector<1x32x16xf32> to vector<32x16xf32>
    %cst_91 = arith.constant dense<0.000000e+00> : vector<16x16xf32>
    %85 = tpu.matmul %82, %84, %cst_91 {dimension_numbers = #tpu.dot_dimension_numbers<[1], [0], [0], [1], [0, 0, 1, 1], [], []>} : vector<16x32xf32>, vector<32x16xf32>, vector<16x16xf32> -> vector<16x16xf32>
    %86 = arith.addf %81, %85 : vector<16x16xf32>
    %c15 = arith.constant 15 : index
    %c0_92 = arith.constant 0 : index
    %87 = vector.load %arg4[%c15, %c0_92] : memref<32x32xf32, #tpu.memory_space<vmem>>, vector<16x32xf32>
    %c15_93 = arith.constant 15 : index
    %c0_94 = arith.constant 0 : index
    %c0_95 = arith.constant 0 : index
    %88 = vector.load %arg2[%c15_93, %c0_94, %c0_95] : memref<16x32x16xf32, #tpu.memory_space<vmem>>, vector<1x32x16xf32>
    %89 = vector.shape_cast %88 : vector<1x32x16xf32> to vector<32x16xf32>
    %cst_96 = arith.constant dense<0.000000e+00> : vector<16x16xf32>
    %90 = tpu.matmul %87, %89, %cst_96 {dimension_numbers = #tpu.dot_dimension_numbers<[1], [0], [0], [1], [0, 0, 1, 1], [], []>} : vector<16x32xf32>, vector<32x16xf32>, vector<16x16xf32> -> vector<16x16xf32>
    %91 = arith.addf %86, %90 : vector<16x16xf32>
    %c0_97 = arith.constant 0 : index
    %c0_98 = arith.constant 0 : index
    %c0_99 = arith.constant 0 : index
    %c0_100 = arith.constant 0 : index
    %92 = vector.load %arg3[%c0_97, %c0_98, %c0_99, %c0_100] : memref<1x1x16x16xf32, #tpu.memory_space<vmem>>, vector<1x1x16x16xf32>
    %93 = vector.shape_cast %92 : vector<1x1x16x16xf32> to vector<16x16xf32>
    %94 = vector.shape_cast %91 : vector<16x16xf32> to vector<1x1x16x16xf32>
    tpu.vector_store %arg3[%c0_97, %c0_98, %c0_99, %c0_100], %94 {strides = array<i32>} : memref<1x1x16x16xf32, #tpu.memory_space<vmem>>, vector<1x1x16x16xf32>,
    return
  }
  func.func @transform_0(%arg0: i32) -> (i32, i32, i32, i32) {
    %c0_i32 = arith.constant 0 : i32
    %c0_i32_0 = arith.constant 0 : i32
    %c0_i32_1 = arith.constant 0 : i32
    %c0_i32_2 = arith.constant 0 : i32
    return %arg0, %c0_i32, %c0_i32_0, %c0_i32_1 : i32, i32, i32, i32
  }
  func.func @transform_1(%arg0: i32) -> (i32, i32, i32) {
    %c0_i32 = arith.constant 0 : i32
    %c0_i32_0 = arith.constant 0 : i32
    %c0_i32_1 = arith.constant 0 : i32
    %c0_i32_2 = arith.constant 0 : i32
    return %c0_i32, %c0_i32_0, %c0_i32_1 : i32, i32, i32
  }
  func.func @transform_2(%arg0: i32) -> (i32, i32, i32, i32) {
    %c0_i32 = arith.constant 0 : i32
    %c0_i32_0 = arith.constant 0 : i32
    %c0_i32_1 = arith.constant 0 : i32
    %c0_i32_2 = arith.constant 0 : i32
    return %arg0, %c0_i32, %c0_i32_0, %c0_i32_1 : i32, i32, i32, i32
  }
}

</mosaic_0001>

<llo_original>
// kernel: tpu_custom_call.1
$region0: #{tpu_custom_call.1}
  #allocation0 [shape = 'u32[]', space=smem, size = 0x4, offset = 0x4, fixed_abs, tag = 'smem constant byte address 0x4 - core index']
  #allocation1 [shape = 'u32[144,128]{1,0:T(1,128)}', space=vmem, size = 0x12000, scoped, tag = 'internal scratch']
  #allocation2 [shape = 'f32[32,32]{1,0:T(8,128)}', space=vmem, size = 0x4000, scoped, tag = 'scratch operand']
  %s0 = inlined_call_operand.vmem [shape: f32[2,1,16,16], index: 0, kind: input, shape index: {}]
  %s1 = inlined_call_operand.vmem [shape: f32[16,32,16], index: 1, kind: input, shape index: {}]
  %s2 = inlined_call_operand.hbm [shape: f32[2,1,16,16], index: 2, kind: output, shape index: {}]
  %s3 = sld [smem:[#allocation0]]
  $region41: #{tpu_custom_call.1} parent=0
    _
  %s5 = ssub.s32 1, %s3
  %s6 = scalar_select 0, %s5, %s3
  $region1: #{tpu_custom_call.1} parent=0
    #allocation3 [shape = 'u8[16384]{0}', space=vmem, size = 0x4000, scoped, tag = 'output window, operand 0']
    #allocation4 [shape = 's32[2]{0}', space=sflag, size = 0x8, scoped, tag = 'scoped memory for tpu_custom_call.1']
    %7 = vsyncpa [#allocation4], 0
    %s8 = scalar_lea.sflag [#allocation4], 1
    %9 = vsyncpa %s8, 0
    loop: start=0, step=1, limit=4
    $region2: #{tpu_custom_call.1} parent=1 // loop_pre_header
      _
    $region3: #{tpu_custom_call.1} parent=1 // loop_header
      %s11 = sphi 0, %s15
      %p12 = scmp.ge.s32.totalorder %s11, 4
      %s21 = sphi 0, %s23
      %s24 = sphi 0, %s21
      %s25 = sphi 0, %s24
      %s41 = sphi 0, %s25
      %s45 = sphi 0, %s45
      %s47 = sphi 0, %s45
      %s48 = sphi 0, %s47
      %s62 = sphi 0, %s48
      %s68 = sphi 0, %s70
      %s71 = sphi 0, %s68
      %s72 = sphi 0, %s71
      %s88 = sphi 0, %s72
    $region4: #{tpu_custom_call.1} parent=1 // loop_header_branch
      %14 = sbr.rel (%p12) target = $region8
    $region5: #{tpu_custom_call.1} parent=1 // loop_body
      %s16 = ssub.s32 %s11, 1
      %s17 = ssub.s32 %s11, 2
      %s18 = sadd.s32 %s11, 1
      %s19 = ssub.s32 %s11, %s18
      %p20 = scmp.eq.s32.totalorder %s19, 0
      %s22 = sadd.s32 %s21, 1
      %s23 = scalar_select %p20, %s21, %s22
      %p26 = pneg %p20
      %p27 = scmp.eq.s32.totalorder %s11, 1
      %p28 = por %p26, %p27
      %p29 = scmp.ne.s32.totalorder %s21, %s24
      %p30 = scmp.eq.s32.totalorder %s11, 0
      %p31 = por %p29, %p30
      %p32 = scmp.ne.s32.totalorder %s21, %s24
      %p33 = scmp.eq.s32.totalorder %s16, 1
      %p34 = por %p32, %p33
      %p35 = scmp.ne.s32.totalorder %s24, %s25
      %p36 = scmp.eq.s32.totalorder %s16, 0
      %p37 = por %p35, %p36
      %p38 = scmp.ne.s32.totalorder %s24, %s25
      %p39 = scmp.eq.s32.totalorder %s17, 1
      %p40 = por %p38, %p39
      %p42 = scmp.ne.s32.totalorder %s25, %s41
      %p43 = scmp.eq.s32.totalorder %s17, 0
      %p44 = por %p42, %p43
      %s46 = sadd.s32 %s45, 1
      %p49 = scmp.eq.s32.totalorder %s11, 1
      %p50 = scmp.ne.s32.totalorder %s45, %s47
      %p51 = scmp.eq.s32.totalorder %s11, 0
      %p52 = por %p50, %p51
      %p53 = scmp.ne.s32.totalorder %s45, %s47
      %p54 = scmp.eq.s32.totalorder %s16, 1
      %p55 = por %p53, %p54
      %p56 = scmp.ne.s32.totalorder %s47, %s48
      %p57 = scmp.eq.s32.totalorder %s16, 0
      %p58 = por %p56, %p57
      %p59 = scmp.ne.s32.totalorder %s47, %s48
      %p60 = scmp.eq.s32.totalorder %s17, 1
      %p61 = por %p59, %p60
      %p63 = scmp.ne.s32.totalorder %s48, %s62
      %p64 = scmp.eq.s32.totalorder %s17, 0
      %p65 = por %p63, %p64
      %s66 = ssub.s32 %s11, %s18
      %p67 = scmp.eq.s32.totalorder %s66, 0
      %s69 = sadd.s32 %s68, 1
      %s70 = scalar_select %p67, %s68, %s69
      %p73 = pneg %p67
      %p74 = scmp.eq.s32.totalorder %s11, 1
      %p75 = por %p73, %p74
      %p76 = scmp.ne.s32.totalorder %s68, %s71
      %p77 = scmp.eq.s32.totalorder %s11, 0
      %p78 = por %p76, %p77
      %p79 = scmp.ne.s32.totalorder %s68, %s71
      %p80 = scmp.eq.s32.totalorder %s16, 1
      %p81 = por %p79, %p80
      %p82 = scmp.ne.s32.totalorder %s71, %s72
      %p83 = scmp.eq.s32.totalorder %s16, 0
      %p84 = por %p82, %p83
      %p85 = scmp.ne.s32.totalorder %s71, %s72
      %p86 = scmp.eq.s32.totalorder %s17, 1
      %p87 = por %p85, %p86
      %p89 = scmp.ne.s32.totalorder %s72, %s88
      %p90 = scmp.eq.s32.totalorder %s17, 0
      %p91 = por %p89, %p90
      %p92 = scmp.le.s32.totalorder 1, %s11
      %p93 = scmp.lt.s32.totalorder %s11, 3
      %p94 = pnand %p92, %p93
      %p95 = pneg %p94
      // Predicated region
      $region9: #{tpu_custom_call.1} parent=5 // pred_check
        _
      $region10: #{tpu_custom_call.1} parent=5 // pred_check_branch
        %97 = sbr.rel (%p94) target = $region12
      $region11: #{tpu_custom_call.1} parent=5 // pred_region
        %s98 = ssub.s32 %s11, 1
        // Predicated region
        $region13: #{tpu_custom_call.1} parent=11 // pred_check
          %p99 = pneg %p58
        $region14: #{tpu_custom_call.1} parent=11 // pred_check_branch
          %101 = sbr.rel (%p99) target = $region16
        $region15: #{tpu_custom_call.1} parent=11 // pred_region
          _
        $region16: #{tpu_custom_call.1} parent=11 // pred_fallthru
          _
      $region12: #{tpu_custom_call.1} parent=5 // pred_fallthru
        _
      %p102 = scmp.lt.s32.totalorder %s11, 2
      // Predicated region
      $region17: #{tpu_custom_call.1} parent=5 // pred_check
        %p103 = pneg %p102
      $region18: #{tpu_custom_call.1} parent=5 // pred_check_branch
        %105 = sbr.rel (%p103) target = $region20
      $region19: #{tpu_custom_call.1} parent=5 // pred_region
        // Predicated region
        $region21: #{tpu_custom_call.1} parent=19 // pred_check
          %p106 = pneg %p31
        $region22: #{tpu_custom_call.1} parent=19 // pred_check_branch
          %108 = sbr.rel (%p106) target = $region24
        $region23: #{tpu_custom_call.1} parent=19 // pred_region
          %p109 = scmp.lt.s32.totalorder %s11, 1
          %s110 = scalar_select %p109, %s11, 1
          %s111 = smul.addr %s110, 2
          %s112 = smul.addr %s111, 8
          %s113 = scalar_lea.vmem %s0, %s112
        $region24: #{tpu_custom_call.1} parent=19 // pred_fallthru
          _
      $region20: #{tpu_custom_call.1} parent=5 // pred_fallthru
        _
      %p114 = scmp.le.s32.totalorder 1, %s11
      %p115 = scmp.lt.s32.totalorder %s11, 3
      %p116 = pnand %p114, %p115
      %p117 = pneg %p116
      // Predicated region
      $region25: #{tpu_custom_call.1} parent=5 // pred_check
        _
      $region26: #{tpu_custom_call.1} parent=5 // pred_check_branch
        %119 = sbr.rel (%p116) target = $region28
      $region27: #{tpu_custom_call.1} parent=5 // pred_region
        %s120 = ssub.s32 %s11, 1
        %p121 = scmp.lt.s32.totalorder %s16, 1
        %s122 = scalar_select %p121, %s16, 1
        %s123 = smul.addr %s122, 2
        %s124 = smul.addr %s123, 8
        %s125 = scalar_lea.vmem %s0, %s124
        %p126 = pneg %p37
        %p127 = pneg %p34
        %p128 = pneg %p58
        %p129 = pneg %p55
        %p130 = pneg %p84
        %p131 = pneg %p81
        %s132 = sand.u32 %s71, 1
        %s133 = scalar_lea.sflag [#allocation4], %s132
        %s134 = sand.u32 %s71, 1
        %s135 = smul.addr %s134, 16
        %s136 = scalar_lea.vmem [#allocation3], %s135
        %p137 = scmp.lt.s32.totalorder %s16, 1
        %s138 = scalar_select %p137, %s16, 1
        %s139 = smul.addr %s138, 2
        %s140 = smul.addr %s139, 8
        %s141 = scalar_lea.vmem %s0, %s140
        %vm142 = vcmask 261120
        %143 = vst.msk [vmem:[#allocation2] sm:$0xff] %vm142, 0.0
        %144 = vst.msk [vmem:[#allocation2 + $0x18] sm:$0xff] %vm142, 0.0
        %vm145 = vcmask 64512
        %146 = vst.msk [vmem:[#allocation2 + $0x8] sm:$0xff] %vm145, 0.0
        %147 = vst.msk [vmem:[#allocation2 + $0x10] sm:$0xff] %vm145, 0.0
        %vm148 = vcmask 261312
        %149 = vst.msk [vmem:[#allocation2 + $0x8] sm:$0xff] %vm148, 0.0
        %150 = vst.msk [vmem:[#allocation2 + $0x10] sm:$0xff] %vm148, 0.0
        %v151 = vld [vmem:[%s141] sm:$0xff]
        %v152 = vld [vmem:[%s141 + $0x8] sm:$0xff]
        %155 = vrot.lane.b32.xlu0 %v151, 8
        %v156 = vpop.permute.xlu0 %155
        %157 = vrot.lane.b32.xlu0 %v152, 8
        %v158 = vpop.permute.xlu0 %157
        %vm161 = vcmask 195648
        %162 = vst.msk [vmem:[#allocation2 + $0x8] sm:$0xff] %vm161, %v156
        %163 = vst.msk [vmem:[#allocation2 + $0x10] sm:$0xff] %vm161, %v158
        %v164 = vld [vmem:[#allocation2] sm:$0xff]
        %v165 = vld [vmem:[#allocation2 + $0x8] sm:$0xff]
        %v166 = vld [vmem:[%s1] sm:$0xff]
        %v167 = vld [vmem:[%s1 + $0x8] sm:$0xff]
        %v168 = vld [vmem:[%s1 + $0x10] sm:$0xff]
        %v169 = vld [vmem:[%s1 + $0x18] sm:$0xff]
        %v170 = vld [vmem:[#allocation2 + $0x1] sm:$0xff]
        %v171 = vld [vmem:[#allocation2 + $0x9] sm:$0xff]
        %s172 = scalar_lea.vmem %s1, 32
        %v173 = vld [vmem:[%s172] sm:$0xff]
        %v174 = vld [vmem:[%s172 + $0x8] sm:$0xff]
        %v175 = vld [vmem:[%s172 + $0x10] sm:$0xff]
        %v176 = vld [vmem:[%s172 + $0x18] sm:$0xff]
        %v178 = vsel %vm142, %v170, 0
        %v181 = vsel %vm142, %v171, 0
        %183 = vmatprep.subr.mxu0 0.0
        %184 = vmatpush1.msra.mxu0 %v173
        %185 = vmatprep.subr.mxu0 0.0
        %186 = vmatpush1.msra.mxu0 %v174
        %187 = vmatprep.subr.mxu0 0.0
        %188 = vmatpush1.msra.mxu0 %v175
        %189 = vmatprep.subr.mxu0 0.0
        %190 = vmatpush1.msra.mxu0 %v176
        %191 = vmatprep.subr.mxu0 0.0
        %192 = vmatpush1.msra.mxu0 0.0
        %193 = vmatprep.subr.mxu0 0.0
        %194 = vmatpush1.msra.mxu0 0.0
        %195 = vmatprep.subr.mxu0 0.0
        %196 = vmatpush1.msra.mxu0 0.0
        %197 = vmatprep.subr.mxu0 0.0
        %198 = vmatpush1.msra.mxu0 0.0
        %199 = vmatprep.subr.mxu0 0.0
        %200 = vmatpush1.msra.mxu0 0.0
        %201 = vmatprep.subr.mxu0 0.0
        %202 = vmatpush1.msra.mxu0 0.0
        %203 = vmatprep.subr.mxu0 0.0
        %204 = vmatpush1.msra.mxu0 0.0
        %205 = vmatprep.subr.mxu0 0.0
        %206 = vmatpush1.msra.mxu0 0.0
        %207 = vmatprep.subr.mxu0 0.0
        %208 = vmatpush1.msra.mxu0 0.0
        %209 = vmatprep.subr.mxu0 0.0
        %210 = vmatpush1.msra.mxu0 0.0
        %211 = vmatprep.subr.mxu0 0.0
        %212 = vmatpush1.msra.mxu0 0.0
        %213 = vmatprep.subr.mxu0 0.0
        %214 = vmatpush1.msra.mxu0 0.0
        %215 = vmatprep.subr.mxu0 0.0
        %216 = vmatpush1.msra.mxu0 0.0
        %217 = vmatprep.subr.mxu0 0.0
        %218 = vmatpush1.msra.mxu0 0.0
        %219 = vmatprep.subr.mxu0 0.0
        %220 = vmatpush1.msra.mxu0 0.0
        %221 = vmatprep.subr.mxu0 0.0
        %222 = vmatpush1.msra.mxu0 0.0
        %223 = vmatprep.subr.mxu0 0.0
        %224 = vmatpush1.msra.mxu0 0.0
        %225 = vmatprep.subr.mxu0 0.0
        %226 = vmatpush1.msra.mxu0 0.0
        %227 = vmatprep.subr.mxu0 0.0
        %228 = vmatpush1.msra.mxu0 0.0
        %229 = vmatprep.subr.mxu0 0.0
        %230 = vmatpush1.msra.mxu0 0.0
        %231 = vmatprep.subr.mxu0 0.0
        %232 = vmatpush1.msra.mxu0 0.0
        %233 = vmatprep.subr.mxu0 0.0
        %234 = vmatpush1.msra.mxu0 0.0
        %235 = vmatprep.subr.mxu0 0.0
        %236 = vmatpush1.msra.mxu0 0.0
        %237 = vmatprep.subr.mxu0 0.0
        %238 = vmatpush1.msra.mxu0 0.0
        %239 = vmatprep.subr.mxu0 0.0
        %240 = vmatpush1.msra.mxu0 0.0
        %241 = vmatprep.subr.mxu0 0.0
        %242 = vmatpush1.msra.mxu0 0.0
        %243 = vmatprep.subr.mxu0 0.0
        %244 = vmatpush1.msra.mxu0 0.0
        %245 = vmatprep.subr.mxu0 0.0
        %246 = vmatpush1.msra.mxu0 0.0
        %247 = vmatprep.mubr.f32.mxu0 0.0
        %248 = vmatmul.mubr.f32.gmra.mrb[0].mxu0 %v178
        %v249 = vpop.f32.mrb[0].mxu0
        %v250 = vadd.f32 0.0, %v249
        %v251 = vpop.f32.mrb[0].mxu0
        %252 = vmatprep.mubr.f32.mxu0 0.0
        %253 = vmatmul.mubr.f32.gmra.mrb[0].mxu0 %v181
        %v254 = vpop.f32.mrb[0].mxu0
        %v255 = vadd.f32 0.0, %v254
        %v256 = vpop.f32.mrb[0].mxu0
        %257 = vdwg.mxu0
        %v259 = vsel %vm142, %v164, 0
        %v262 = vsel %vm142, %v165, 0
        %264 = vmatprep.subr.mxu0 0.0
        %265 = vmatpush1.msra.mxu0 %v166
        %266 = vmatprep.subr.mxu0 0.0
        %267 = vmatpush1.msra.mxu0 %v167
        %268 = vmatprep.subr.mxu0 0.0
        %269 = vmatpush1.msra.mxu0 %v168
        %270 = vmatprep.subr.mxu0 0.0
        %271 = vmatpush1.msra.mxu0 %v169
        %272 = vmatprep.subr.mxu0 0.0
        %273 = vmatpush1.msra.mxu0 0.0
        %274 = vmatprep.subr.mxu0 0.0
        %275 = vmatpush1.msra.mxu0 0.0
        %276 = vmatprep.subr.mxu0 0.0
        %277 = vmatpush1.msra.mxu0 0.0
        %278 = vmatprep.subr.mxu0 0.0
        %279 = vmatpush1.msra.mxu0 0.0
        %280 = vmatprep.subr.mxu0 0.0
        %281 = vmatpush1.msra.mxu0 0.0
        %282 = vmatprep.subr.mxu0 0.0
        %283 = vmatpush1.msra.mxu0 0.0
        %284 = vmatprep.subr.mxu0 0.0
        %285 = vmatpush1.msra.mxu0 0.0
        %286 = vmatprep.subr.mxu0 0.0
        %287 = vmatpush1.msra.mxu0 0.0
        %288 = vmatprep.subr.mxu0 0.0
        %289 = vmatpush1.msra.mxu0 0.0
        %290 = vmatprep.subr.mxu0 0.0
        %291 = vmatpush1.msra.mxu0 0.0
        %292 = vmatprep.subr.mxu0 0.0
        %293 = vmatpush1.msra.mxu0 0.0
        %294 = vmatprep.subr.mxu0 0.0
        %295 = vmatpush1.msra.mxu0 0.0
        %296 = vmatprep.subr.mxu0 0.0
        %297 = vmatpush1.msra.mxu0 0.0
        %298 = vmatprep.subr.mxu0 0.0
        %299 = vmatpush1.msra.mxu0 0.0
        %300 = vmatprep.subr.mxu0 0.0
        %301 = vmatpush1.msra.mxu0 0.0
        %302 = vmatprep.subr.mxu0 0.0
        %303 = vmatpush1.msra.mxu0 0.0
        %304 = vmatprep.subr.mxu0 0.0
        %305 = vmatpush1.msra.mxu0 0.0
        %306 = vmatprep.subr.mxu0 0.0
        %307 = vmatpush1.msra.mxu0 0.0
        %308 = vmatprep.subr.mxu0 0.0
        %309 = vmatpush1.msra.mxu0 0.0
        %310 = vmatprep.subr.mxu0 0.0
        %311 = vmatpush1.msra.mxu0 0.0
        %312 = vmatprep.subr.mxu0 0.0
        %313 = vmatpush1.msra.mxu0 0.0
        %314 = vmatprep.subr.mxu0 0.0
        %315 = vmatpush1.msra.mxu0 0.0
        %316 = vmatprep.subr.mxu0 0.0
        %317 = vmatpush1.msra.mxu0 0.0
        %318 = vmatprep.subr.mxu0 0.0
        %319 = vmatpush1.msra.mxu0 0.0
        %320 = vmatprep.subr.mxu0 0.0
        %321 = vmatpush1.msra.mxu0 0.0
        %322 = vmatprep.subr.mxu0 0.0
        %323 = vmatpush1.msra.mxu0 0.0
        %324 = vmatprep.subr.mxu0 0.0
        %325 = vmatpush1.msra.mxu0 0.0
        %326 = vmatprep.subr.mxu0 0.0
        %327 = vmatpush1.msra.mxu0 0.0
        %328 = vmatprep.mubr.f32.mxu0 0.0
        %329 = vmatmul.mubr.f32.gmra.mrb[0].mxu0 %v259
        %v330 = vpop.f32.mrb[0].mxu0
        %v331 = vadd.f32 %v250, %v330
        %v332 = vpop.f32.mrb[0].mxu0
        %333 = vmatprep.mubr.f32.mxu0 0.0
        %334 = vmatmul.mubr.f32.gmra.mrb[0].mxu0 %v262
        %v335 = vpop.f32.mrb[0].mxu0
        %v336 = vadd.f32 %v255, %v335
        %v337 = vpop.f32.mrb[0].mxu0
        %338 = vdwg.mxu0
        %v339 = vld [vmem:[#allocation2 + $0x2] sm:$0xff]
        %v340 = vld [vmem:[#allocation2 + $0xa] sm:$0xff]
        %s341 = scalar_lea.vmem %s1, 64
        %v342 = vld [vmem:[%s341] sm:$0xff]
        %v343 = vld [vmem:[%s341 + $0x8] sm:$0xff]
        %v344 = vld [vmem:[%s341 + $0x10] sm:$0xff]
        %v345 = vld [vmem:[%s341 + $0x18] sm:$0xff]
        %v347 = vsel %vm142, %v339, 0
        %v350 = vsel %vm142, %v340, 0
        %352 = vmatprep.subr.mxu0 0.0
        %353 = vmatpush1.msra.mxu0 %v342
        %354 = vmatprep.subr.mxu0 0.0
        %355 = vmatpush1.msra.mxu0 %v343
        %356 = vmatprep.subr.mxu0 0.0
        %357 = vmatpush1.msra.mxu0 %v344
        %358 = vmatprep.subr.mxu0 0.0
        %359 = vmatpush1.msra.mxu0 %v345
        %360 = vmatprep.subr.mxu0 0.0
        %361 = vmatpush1.msra.mxu0 0.0
        %362 = vmatprep.subr.mxu0 0.0
        %363 = vmatpush1.msra.mxu0 0.0
        %364 = vmatprep.subr.mxu0 0.0
        %365 = vmatpush1.msra.mxu0 0.0
        %366 = vmatprep.subr.mxu0 0.0
        %367 = vmatpush1.msra.mxu0 0.0
        %368 = vmatprep.subr.mxu0 0.0
        %369 = vmatpush1.msra.mxu0 0.0
        %370 = vmatprep.subr.mxu0 0.0
        %371 = vmatpush1.msra.mxu0 0.0
        %372 = vmatprep.subr.mxu0 0.0
        %373 = vmatpush1.msra.mxu0 0.0
        %374 = vmatprep.subr.mxu0 0.0
        %375 = vmatpush1.msra.mxu0 0.0
        %376 = vmatprep.subr.mxu0 0.0
        %377 = vmatpush1.msra.mxu0 0.0
        %378 = vmatprep.subr.mxu0 0.0
        %379 = vmatpush1.msra.mxu0 0.0
        %380 = vmatprep.subr.mxu0 0.0
        %381 = vmatpush1.msra.mxu0 0.0
        %382 = vmatprep.subr.mxu0 0.0
        %383 = vmatpush1.msra.mxu0 0.0
        %384 = vmatprep.subr.mxu0 0.0
        %385 = vmatpush1.msra.mxu0 0.0
        %386 = vmatprep.subr.mxu0 0.0
        %387 = vmatpush1.msra.mxu0 0.0
        %388 = vmatprep.subr.mxu0 0.0
        %389 = vmatpush1.msra.mxu0 0.0
        %390 = vmatprep.subr.mxu0 0.0
        %391 = vmatpush1.msra.mxu0 0.0
        %392 = vmatprep.subr.mxu0 0.0
        %393 = vmatpush1.msra.mxu0 0.0
        %394 = vmatprep.subr.mxu0 0.0
        %395 = vmatpush1.msra.mxu0 0.0
        %396 = vmatprep.subr.mxu0 0.0
        %397 = vmatpush1.msra.mxu0 0.0
        %398 = vmatprep.subr.mxu0 0.0
        %399 = vmatpush1.msra.mxu0 0.0
        %400 = vmatprep.subr.mxu0 0.0
        %401 = vmatpush1.msra.mxu0 0.0
        %402 = vmatprep.subr.mxu0 0.0
        %403 = vmatpush1.msra.mxu0 0.0
        %404 = vmatprep.subr.mxu0 0.0
        %405 = vmatpush1.msra.mxu0 0.0
        %406 = vmatprep.subr.mxu0 0.0
        %407 = vmatpush1.msra.mxu0 0.0
        %408 = vmatprep.subr.mxu0 0.0
        %409 = vmatpush1.msra.mxu0 0.0
        %410 = vmatprep.subr.mxu0 0.0
        %411 = vmatpush1.msra.mxu0 0.0
        %412 = vmatprep.subr.mxu0 0.0
        %413 = vmatpush1.msra.mxu0 0.0
        %414 = vmatprep.subr.mxu0 0.0
        %415 = vmatpush1.msra.mxu0 0.0
        %416 = vmatprep.mubr.f32.mxu0 0.0
        %417 = vmatmul.mubr.f32.gmra.mrb[0].mxu0 %v347
        %v418 = vpop.f32.mrb[0].mxu0
        %v419 = vadd.f32 0.0, %v418
        %v420 = vpop.f32.mrb[0].mxu0
        %421 = vmatprep.mubr.f32.mxu0 0.0
        %422 = vmatmul.mubr.f32.gmra.mrb[0].mxu0 %v350
        %v423 = vpop.f32.mrb[0].mxu0
        %v424 = vadd.f32 0.0, %v423
        %v425 = vpop.f32.mrb[0].mxu0
        %426 = vdwg.mxu0
        %v427 = vadd.f32 %v331, %v419
        %v428 = vadd.f32 %v336, %v424
        %v429 = vld [vmem:[#allocation2 + $0x3] sm:$0xff]
        %v430 = vld [vmem:[#allocation2 + $0xb] sm:$0xff]
        %s431 = scalar_lea.vmem %s1, 96
        %v432 = vld [vmem:[%s431] sm:$0xff]
        %v433 = vld [vmem:[%s431 + $0x8] sm:$0xff]
        %v434 = vld [vmem:[%s431 + $0x10] sm:$0xff]
        %v435 = vld [vmem:[%s431 + $0x18] sm:$0xff]
        %v437 = vsel %vm142, %v429, 0
        %v440 = vsel %vm142, %v430, 0
        %442 = vmatprep.subr.mxu0 0.0
        %443 = vmatpush1.msra.mxu0 %v432
        %444 = vmatprep.subr.mxu0 0.0
        %445 = vmatpush1.msra.mxu0 %v433
        %446 = vmatprep.subr.mxu0 0.0
        %447 = vmatpush1.msra.mxu0 %v434
        %448 = vmatprep.subr.mxu0 0.0
        %449 = vmatpush1.msra.mxu0 %v435
        %450 = vmatprep.subr.mxu0 0.0
        %451 = vmatpush1.msra.mxu0 0.0
        %452 = vmatprep.subr.mxu0 0.0
        %453 = vmatpush1.msra.mxu0 0.0
        %454 = vmatprep.subr.mxu0 0.0
        %455 = vmatpush1.msra.mxu0 0.0
        %456 = vmatprep.subr.mxu0 0.0
        %457 = vmatpush1.msra.mxu0 0.0
        %458 = vmatprep.subr.mxu0 0.0
        %459 = vmatpush1.msra.mxu0 0.0
        %460 = vmatprep.subr.mxu0 0.0
        %461 = vmatpush1.msra.mxu0 0.0
        %462 = vmatprep.subr.mxu0 0.0
        %463 = vmatpush1.msra.mxu0 0.0
        %464 = vmatprep.subr.mxu0 0.0
        %465 = vmatpush1.msra.mxu0 0.0
        %466 = vmatprep.subr.mxu0 0.0
        %467 = vmatpush1.msra.mxu0 0.0
        %468 = vmatprep.subr.mxu0 0.0
        %469 = vmatpush1.msra.mxu0 0.0
        %470 = vmatprep.subr.mxu0 0.0
        %471 = vmatpush1.msra.mxu0 0.0
        %472 = vmatprep.subr.mxu0 0.0
        %473 = vmatpush1.msra.mxu0 0.0
        %474 = vmatprep.subr.mxu0 0.0
        %475 = vmatpush1.msra.mxu0 0.0
        %476 = vmatprep.subr.mxu0 0.0
        %477 = vmatpush1.msra.mxu0 0.0
        %478 = vmatprep.subr.mxu0 0.0
        %479 = vmatpush1.msra.mxu0 0.0
        %480 = vmatprep.subr.mxu0 0.0
        %481 = vmatpush1.msra.mxu0 0.0
        %482 = vmatprep.subr.mxu0 0.0
        %483 = vmatpush1.msra.mxu0 0.0
        %484 = vmatprep.subr.mxu0 0.0
        %485 = vmatpush1.msra.mxu0 0.0
        %486 = vmatprep.subr.mxu0 0.0
        %487 = vmatpush1.msra.mxu0 0.0
        %488 = vmatprep.subr.mxu0 0.0
        %489 = vmatpush1.msra.mxu0 0.0
        %490 = vmatprep.subr.mxu0 0.0
        %491 = vmatpush1.msra.mxu0 0.0
        %492 = vmatprep.subr.mxu0 0.0
        %493 = vmatpush1.msra.mxu0 0.0
        %494 = vmatprep.subr.mxu0 0.0
        %495 = vmatpush1.msra.mxu0 0.0
        %496 = vmatprep.subr.mxu0 0.0
        %497 = vmatpush1.msra.mxu0 0.0
        %498 = vmatprep.subr.mxu0 0.0
        %499 = vmatpush1.msra.mxu0 0.0
        %500 = vmatprep.subr.mxu0 0.0
        %501 = vmatpush1.msra.mxu0 0.0
        %502 = vmatprep.subr.mxu0 0.0
        %503 = vmatpush1.msra.mxu0 0.0
        %504 = vmatprep.subr.mxu0 0.0
        %505 = vmatpush1.msra.mxu0 0.0
        %506 = vmatprep.mubr.f32.mxu0 0.0
        %507 = vmatmul.mubr.f32.gmra.mrb[0].mxu0 %v437
        %v508 = vpop.f32.mrb[0].mxu0
        %v509 = vadd.f32 0.0, %v508
        %v510 = vpop.f32.mrb[0].mxu0
        %511 = vmatprep.mubr.f32.mxu0 0.0
        %512 = vmatmul.mubr.f32.gmra.mrb[0].mxu0 %v440
        %v513 = vpop.f32.mrb[0].mxu0
        %v514 = vadd.f32 0.0, %v513
        %v515 = vpop.f32.mrb[0].mxu0
        %516 = vdwg.mxu0
        %v517 = vadd.f32 %v427, %v509
        %v518 = vadd.f32 %v428, %v514
        %v519 = vld [vmem:[#allocation2 + $0x4] sm:$0xff]
        %v520 = vld [vmem:[#allocation2 + $0xc] sm:$0xff]
        %s521 = scalar_lea.vmem %s1, 128
        %v522 = vld [vmem:[%s521] sm:$0xff]
        %v523 = vld [vmem:[%s521 + $0x8] sm:$0xff]
        %v524 = vld [vmem:[%s521 + $0x10] sm:$0xff]
        %v525 = vld [vmem:[%s521 + $0x18] sm:$0xff]
        %v527 = vsel %vm142, %v519, 0
        %v530 = vsel %vm142, %v520, 0
        %532 = vmatprep.subr.mxu0 0.0
        %533 = vmatpush1.msra.mxu0 %v522
        %534 = vmatprep.subr.mxu0 0.0
        %535 = vmatpush1.msra.mxu0 %v523
        %536 = vmatprep.subr.mxu0 0.0
        %537 = vmatpush1.msra.mxu0 %v524
        %538 = vmatprep.subr.mxu0 0.0
        %539 = vmatpush1.msra.mxu0 %v525
        %540 = vmatprep.subr.mxu0 0.0
        %541 = vmatpush1.msra.mxu0 0.0
        %542 = vmatprep.subr.mxu0 0.0
        %543 = vmatpush1.msra.mxu0 0.0
        %544 = vmatprep.subr.mxu0 0.0
        %545 = vmatpush1.msra.mxu0 0.0
        %546 = vmatprep.subr.mxu0 0.0
        %547 = vmatpush1.msra.mxu0 0.0
        %548 = vmatprep.subr.mxu0 0.0
        %549 = vmatpush1.msra.mxu0 0.0
        %550 = vmatprep.subr.mxu0 0.0
        %551 = vmatpush1.msra.mxu0 0.0
        %552 = vmatprep.subr.mxu0 0.0
        %553 = vmatpush1.msra.mxu0 0.0
        %554 = vmatprep.subr.mxu0 0.0
        %555 = vmatpush1.msra.mxu0 0.0
        %556 = vmatprep.subr.mxu0 0.0
        %557 = vmatpush1.msra.mxu0 0.0
        %558 = vmatprep.subr.mxu0 0.0
        %559 = vmatpush1.msra.mxu0 0.0
        %560 = vmatprep.subr.mxu0 0.0
        %561 = vmatpush1.msra.mxu0 0.0
        %562 = vmatprep.subr.mxu0 0.0
        %563 = vmatpush1.msra.mxu0 0.0
        %564 = vmatprep.subr.mxu0 0.0
        %565 = vmatpush1.msra.mxu0 0.0
        %566 = vmatprep.subr.mxu0 0.0
        %567 = vmatpush1.msra.mxu0 0.0
        %568 = vmatprep.subr.mxu0 0.0
        %569 = vmatpush1.msra.mxu0 0.0
        %570 = vmatprep.subr.mxu0 0.0
        %571 = vmatpush1.msra.mxu0 0.0
        %572 = vmatprep.subr.mxu0 0.0
        %573 = vmatpush1.msra.mxu0 0.0
        %574 = vmatprep.subr.mxu0 0.0
        %575 = vmatpush1.msra.mxu0 0.0
        %576 = vmatprep.subr.mxu0 0.0
        %577 = vmatpush1.msra.mxu0 0.0
        %578 = vmatprep.subr.mxu0 0.0
        %579 = vmatpush1.msra.mxu0 0.0
        %580 = vmatprep.subr.mxu0 0.0
        %581 = vmatpush1.msra.mxu0 0.0
        %582 = vmatprep.subr.mxu0 0.0
        %583 = vmatpush1.msra.mxu0 0.0
        %584 = vmatprep.subr.mxu0 0.0
        %585 = vmatpush1.msra.mxu0 0.0
        %586 = vmatprep.subr.mxu0 0.0
        %587 = vmatpush1.msra.mxu0 0.0
        %588 = vmatprep.subr.mxu0 0.0
        %589 = vmatpush1.msra.mxu0 0.0
        %590 = vmatprep.subr.mxu0 0.0
        %591 = vmatpush1.msra.mxu0 0.0
        %592 = vmatprep.subr.mxu0 0.0
        %593 = vmatpush1.msra.mxu0 0.0
        %594 = vmatprep.subr.mxu0 0.0
        %595 = vmatpush1.msra.mxu0 0.0
        %596 = vmatprep.mubr.f32.mxu0 0.0
        %597 = vmatmul.mubr.f32.gmra.mrb[0].mxu0 %v527
        %v598 = vpop.f32.mrb[0].mxu0
        %v599 = vadd.f32 0.0, %v598
        %v600 = vpop.f32.mrb[0].mxu0
        %601 = vmatprep.mubr.f32.mxu0 0.0
        %602 = vmatmul.mubr.f32.gmra.mrb[0].mxu0 %v530
        %v603 = vpop.f32.mrb[0].mxu0
        %v604 = vadd.f32 0.0, %v603
        %v605 = vpop.f32.mrb[0].mxu0
        %606 = vdwg.mxu0
        %v607 = vadd.f32 %v517, %v599
        %v608 = vadd.f32 %v518, %v604
        %v609 = vld [vmem:[#allocation2 + $0x5] sm:$0xff]
        %v610 = vld [vmem:[#allocation2 + $0xd] sm:$0xff]
        %s611 = scalar_lea.vmem %s1, 160
        %v612 = vld [vmem:[%s611] sm:$0xff]
        %v613 = vld [vmem:[%s611 + $0x8] sm:$0xff]
        %v614 = vld [vmem:[%s611 + $0x10] sm:$0xff]
        %v615 = vld [vmem:[%s611 + $0x18] sm:$0xff]
        %v617 = vsel %vm142, %v609, 0
        %v620 = vsel %vm142, %v610, 0
        %622 = vmatprep.subr.mxu0 0.0
        %623 = vmatpush1.msra.mxu0 %v612
        %624 = vmatprep.subr.mxu0 0.0
        %625 = vmatpush1.msra.mxu0 %v613
        %626 = vmatprep.subr.mxu0 0.0
        %627 = vmatpush1.msra.mxu0 %v614
        %628 = vmatprep.subr.mxu0 0.0
        %629 = vmatpush1.msra.mxu0 %v615
        %630 = vmatprep.subr.mxu0 0.0
        %631 = vmatpush1.msra.mxu0 0.0
        %632 = vmatprep.subr.mxu0 0.0
        %633 = vmatpush1.msra.mxu0 0.0
        %634 = vmatprep.subr.mxu0 0.0
        %635 = vmatpush1.msra.mxu0 0.0
        %636 = vmatprep.subr.mxu0 0.0
        %637 = vmatpush1.msra.mxu0 0.0
        %638 = vmatprep.subr.mxu0 0.0
        %639 = vmatpush1.msra.mxu0 0.0
        %640 = vmatprep.subr.mxu0 0.0
        %641 = vmatpush1.msra.mxu0 0.0
        %642 = vmatprep.subr.mxu0 0.0
        %643 = vmatpush1.msra.mxu0 0.0
        %644 = vmatprep.subr.mxu0 0.0
        %645 = vmatpush1.msra.mxu0 0.0
        %646 = vmatprep.subr.mxu0 0.0
        %647 = vmatpush1.msra.mxu0 0.0
        %648 = vmatprep.subr.mxu0 0.0
        %649 = vmatpush1.msra.mxu0 0.0
        %650 = vmatprep.subr.mxu0 0.0
        %651 = vmatpush1.msra.mxu0 0.0
        %652 = vmatprep.subr.mxu0 0.0
        %653 = vmatpush1.msra.mxu0 0.0
        %654 = vmatprep.subr.mxu0 0.0
        %655 = vmatpush1.msra.mxu0 0.0
        %656 = vmatprep.subr.mxu0 0.0
        %657 = vmatpush1.msra.mxu0 0.0
        %658 = vmatprep.subr.mxu0 0.0
        %659 = vmatpush1.msra.mxu0 0.0
        %660 = vmatprep.subr.mxu0 0.0
        %661 = vmatpush1.msra.mxu0 0.0
        %662 = vmatprep.subr.mxu0 0.0
        %663 = vmatpush1.msra.mxu0 0.0
        %664 = vmatprep.subr.mxu0 0.0
        %665 = vmatpush1.msra.mxu0 0.0
        %666 = vmatprep.subr.mxu0 0.0
        %667 = vmatpush1.msra.mxu0 0.0
        %668 = vmatprep.subr.mxu0 0.0
        %669 = vmatpush1.msra.mxu0 0.0
        %670 = vmatprep.subr.mxu0 0.0
        %671 = vmatpush1.msra.mxu0 0.0
        %672 = vmatprep.subr.mxu0 0.0
        %673 = vmatpush1.msra.mxu0 0.0
        %674 = vmatprep.subr.mxu0 0.0
        %675 = vmatpush1.msra.mxu0 0.0
        %676 = vmatprep.subr.mxu0 0.0
        %677 = vmatpush1.msra.mxu0 0.0
        %678 = vmatprep.subr.mxu0 0.0
        %679 = vmatpush1.msra.mxu0 0.0
        %680 = vmatprep.subr.mxu0 0.0
        %681 = vmatpush1.msra.mxu0 0.0
        %682 = vmatprep.subr.mxu0 0.0
        %683 = vmatpush1.msra.mxu0 0.0
        %684 = vmatprep.subr.mxu0 0.0
        %685 = vmatpush1.msra.mxu0 0.0
        %686 = vmatprep.mubr.f32.mxu0 0.0
        %687 = vmatmul.mubr.f32.gmra.mrb[0].mxu0 %v617
        %v688 = vpop.f32.mrb[0].mxu0
        %v689 = vadd.f32 0.0, %v688
        %v690 = vpop.f32.mrb[0].mxu0
        %691 = vmatprep.mubr.f32.mxu0 0.0
        %692 = vmatmul.mubr.f32.gmra.mrb[0].mxu0 %v620
        %v693 = vpop.f32.mrb[0].mxu0
        %v694 = vadd.f32 0.0, %v693
        %v695 = vpop.f32.mrb[0].mxu0
        %696 = vdwg.mxu0
        %v697 = vadd.f32 %v607, %v689
        %v698 = vadd.f32 %v608, %v694
        %v699 = vld [vmem:[#allocation2 + $0x6] sm:$0xff]
        %v700 = vld [vmem:[#allocation2 + $0xe] sm:$0xff]
        %s701 = scalar_lea.vmem %s1, 192
        %v702 = vld [vmem:[%s701] sm:$0xff]
        %v703 = vld [vmem:[%s701 + $0x8] sm:$0xff]
        %v704 = vld [vmem:[%s701 + $0x10] sm:$0xff]
        %v705 = vld [vmem:[%s701 + $0x18] sm:$0xff]
        %v707 = vsel %vm142, %v699, 0
        %v710 = vsel %vm142, %v700, 0
        %712 = vmatprep.subr.mxu0 0.0
        %713 = vmatpush1.msra.mxu0 %v702
        %714 = vmatprep.subr.mxu0 0.0
        %715 = vmatpush1.msra.mxu0 %v703
        %716 = vmatprep.subr.mxu0 0.0
        %717 = vmatpush1.msra.mxu0 %v704
        %718 = vmatprep.subr.mxu0 0.0
        %719 = vmatpush1.msra.mxu0 %v705
        %720 = vmatprep.subr.mxu0 0.0
        %721 = vmatpush1.msra.mxu0 0.0
        %722 = vmatprep.subr.mxu0 0.0
        %723 = vmatpush1.msra.mxu0 0.0
        %724 = vmatprep.subr.mxu0 0.0
        %725 = vmatpush1.msra.mxu0 0.0
        %726 = vmatprep.subr.mxu0 0.0
        %727 = vmatpush1.msra.mxu0 0.0
        %728 = vmatprep.subr.mxu0 0.0
        %729 = vmatpush1.msra.mxu0 0.0
        %730 = vmatprep.subr.mxu0 0.0
        %731 = vmatpush1.msra.mxu0 0.0
        %732 = vmatprep.subr.mxu0 0.0
        %733 = vmatpush1.msra.mxu0 0.0
        %734 = vmatprep.subr.mxu0 0.0
        %735 = vmatpush1.msra.mxu0 0.0
        %736 = vmatprep.subr.mxu0 0.0
        %737 = vmatpush1.msra.mxu0 0.0
        %738 = vmatprep.subr.mxu0 0.0
        %739 = vmatpush1.msra.mxu0 0.0
        %740 = vmatprep.subr.mxu0 0.0
        %741 = vmatpush1.msra.mxu0 0.0
        %742 = vmatprep.subr.mxu0 0.0
        %743 = vmatpush1.msra.mxu0 0.0
        %744 = vmatprep.subr.mxu0 0.0
        %745 = vmatpush1.msra.mxu0 0.0
        %746 = vmatprep.subr.mxu0 0.0
        %747 = vmatpush1.msra.mxu0 0.0
        %748 = vmatprep.subr.mxu0 0.0
        %749 = vmatpush1.msra.mxu0 0.0
        %750 = vmatprep.subr.mxu0 0.0
        %751 = vmatpush1.msra.mxu0 0.0
        %752 = vmatprep.subr.mxu0 0.0
        %753 = vmatpush1.msra.mxu0 0.0
        %754 = vmatprep.subr.mxu0 0.0
        %755 = vmatpush1.msra.mxu0 0.0
        %756 = vmatprep.subr.mxu0 0.0
        %757 = vmatpush1.msra.mxu0 0.0
        %758 = vmatprep.subr.mxu0 0.0
        %759 = vmatpush1.msra.mxu0 0.0
        %760 = vmatprep.subr.mxu0 0.0
        %761 = vmatpush1.msra.mxu0 0.0
        %762 = vmatprep.subr.mxu0 0.0
        %763 = vmatpush1.msra.mxu0 0.0
        %764 = vmatprep.subr.mxu0 0.0
        %765 = vmatpush1.msra.mxu0 0.0
        %766 = vmatprep.subr.mxu0 0.0
        %767 = vmatpush1.msra.mxu0 0.0
        %768 = vmatprep.subr.mxu0 0.0
        %769 = vmatpush1.msra.mxu0 0.0
        %770 = vmatprep.subr.mxu0 0.0
        %771 = vmatpush1.msra.mxu0 0.0
        %772 = vmatprep.subr.mxu0 0.0
        %773 = vmatpush1.msra.mxu0 0.0
        %774 = vmatprep.subr.mxu0 0.0
        %775 = vmatpush1.msra.mxu0 0.0
        %776 = vmatprep.mubr.f32.mxu0 0.0
        %777 = vmatmul.mubr.f32.gmra.mrb[0].mxu0 %v707
        %v778 = vpop.f32.mrb[0].mxu0
        %v779 = vadd.f32 0.0, %v778
        %v780 = vpop.f32.mrb[0].mxu0
        %781 = vmatprep.mubr.f32.mxu0 0.0
        %782 = vmatmul.mubr.f32.gmra.mrb[0].mxu0 %v710
        %v783 = vpop.f32.mrb[0].mxu0
        %v784 = vadd.f32 0.0, %v783
        %v785 = vpop.f32.mrb[0].mxu0
        %786 = vdwg.mxu0
        %v787 = vadd.f32 %v697, %v779
        %v788 = vadd.f32 %v698, %v784
        %v789 = vld [vmem:[#allocation2 + $0x7] sm:$0xff]
        %v790 = vld [vmem:[#allocation2 + $0xf] sm:$0xff]
        %s791 = scalar_lea.vmem %s1, 224
        %v792 = vld [vmem:[%s791] sm:$0xff]
        %v793 = vld [vmem:[%s791 + $0x8] sm:$0xff]
        %v794 = vld [vmem:[%s791 + $0x10] sm:$0xff]
        %v795 = vld [vmem:[%s791 + $0x18] sm:$0xff]
        %v797 = vsel %vm142, %v789, 0
        %v800 = vsel %vm142, %v790, 0
        %802 = vmatprep.subr.mxu0 0.0
        %803 = vmatpush1.msra.mxu0 %v792
        %804 = vmatprep.subr.mxu0 0.0
        %805 = vmatpush1.msra.mxu0 %v793
        %806 = vmatprep.subr.mxu0 0.0
        %807 = vmatpush1.msra.mxu0 %v794
        %808 = vmatprep.subr.mxu0 0.0
        %809 = vmatpush1.msra.mxu0 %v795
        %810 = vmatprep.subr.mxu0 0.0
        %811 = vmatpush1.msra.mxu0 0.0
        %812 = vmatprep.subr.mxu0 0.0
        %813 = vmatpush1.msra.mxu0 0.0
        %814 = vmatprep.subr.mxu0 0.0
        %815 = vmatpush1.msra.mxu0 0.0
        %816 = vmatprep.subr.mxu0 0.0
        %817 = vmatpush1.msra.mxu0 0.0
        %818 = vmatprep.subr.mxu0 0.0
        %819 = vmatpush1.msra.mxu0 0.0
        %820 = vmatprep.subr.mxu0 0.0
        %821 = vmatpush1.msra.mxu0 0.0
        %822 = vmatprep.subr.mxu0 0.0
        %823 = vmatpush1.msra.mxu0 0.0
        %824 = vmatprep.subr.mxu0 0.0
        %825 = vmatpush1.msra.mxu0 0.0
        %826 = vmatprep.subr.mxu0 0.0
        %827 = vmatpush1.msra.mxu0 0.0
        %828 = vmatprep.subr.mxu0 0.0
        %829 = vmatpush1.msra.mxu0 0.0
        %830 = vmatprep.subr.mxu0 0.0
        %831 = vmatpush1.msra.mxu0 0.0
        %832 = vmatprep.subr.mxu0 0.0
        %833 = vmatpush1.msra.mxu0 0.0
        %834 = vmatprep.subr.mxu0 0.0
        %835 = vmatpush1.msra.mxu0 0.0
        %836 = vmatprep.subr.mxu0 0.0
        %837 = vmatpush1.msra.mxu0 0.0
        %838 = vmatprep.subr.mxu0 0.0
        %839 = vmatpush1.msra.mxu0 0.0
        %840 = vmatprep.subr.mxu0 0.0
        %841 = vmatpush1.msra.mxu0 0.0
        %842 = vmatprep.subr.mxu0 0.0
        %843 = vmatpush1.msra.mxu0 0.0
        %844 = vmatprep.subr.mxu0 0.0
        %845 = vmatpush1.msra.mxu0 0.0
        %846 = vmatprep.subr.mxu0 0.0
        %847 = vmatpush1.msra.mxu0 0.0
        %848 = vmatprep.subr.mxu0 0.0
        %849 = vmatpush1.msra.mxu0 0.0
        %850 = vmatprep.subr.mxu0 0.0
        %851 = vmatpush1.msra.mxu0 0.0
        %852 = vmatprep.subr.mxu0 0.0
        %853 = vmatpush1.msra.mxu0 0.0
        %854 = vmatprep.subr.mxu0 0.0
        %855 = vmatpush1.msra.mxu0 0.0
        %856 = vmatprep.subr.mxu0 0.0
        %857 = vmatpush1.msra.mxu0 0.0
        %858 = vmatprep.subr.mxu0 0.0
        %859 = vmatpush1.msra.mxu0 0.0
        %860 = vmatprep.subr.mxu0 0.0
        %861 = vmatpush1.msra.mxu0 0.0
        %862 = vmatprep.subr.mxu0 0.0
        %863 = vmatpush1.msra.mxu0 0.0
        %864 = vmatprep.subr.mxu0 0.0
        %865 = vmatpush1.msra.mxu0 0.0
        %866 = vmatprep.mubr.f32.mxu0 0.0
        %867 = vmatmul.mubr.f32.gmra.mrb[0].mxu0 %v797
        %v868 = vpop.f32.mrb[0].mxu0
        %v869 = vadd.f32 0.0, %v868
        %v870 = vpop.f32.mrb[0].mxu0
        %871 = vmatprep.mubr.f32.mxu0 0.0
        %872 = vmatmul.mubr.f32.gmra.mrb[0].mxu0 %v800
        %v873 = vpop.f32.mrb[0].mxu0
        %v874 = vadd.f32 0.0, %v873
        %v875 = vpop.f32.mrb[0].mxu0
        %876 = vdwg.mxu0
        %v877 = vadd.f32 %v787, %v869
        %v878 = vadd.f32 %v788, %v874
        %v879 = vld [vmem:[#allocation2 + $0x8] sm:$0xff]
        %v880 = vld [vmem:[#allocation2 + $0x10] sm:$0xff]
        %s881 = scalar_lea.vmem %s1, 256
        %v882 = vld [vmem:[%s881] sm:$0xff]
        %v883 = vld [vmem:[%s881 + $0x8] sm:$0xff]
        %v884 = vld [vmem:[%s881 + $0x10] sm:$0xff]
        %v885 = vld [vmem:[%s881 + $0x18] sm:$0xff]
        %v887 = vsel %vm142, %v879, 0
        %v890 = vsel %vm142, %v880, 0
        %892 = vmatprep.subr.mxu0 0.0
        %893 = vmatpush1.msra.mxu0 %v882
        %894 = vmatprep.subr.mxu0 0.0
        %895 = vmatpush1.msra.mxu0 %v883
        %896 = vmatprep.subr.mxu0 0.0
        %897 = vmatpush1.msra.mxu0 %v884
        %898 = vmatprep.subr.mxu0 0.0
        %899 = vmatpush1.msra.mxu0 %v885
        %900 = vmatprep.subr.mxu0 0.0
        %901 = vmatpush1.msra.mxu0 0.0
        %902 = vmatprep.subr.mxu0 0.0
        %903 = vmatpush1.msra.mxu0 0.0
        %904 = vmatprep.subr.mxu0 0.0
        %905 = vmatpush1.msra.mxu0 0.0
        %906 = vmatprep.subr.mxu0 0.0
        %907 = vmatpush1.msra.mxu0 0.0
        %908 = vmatprep.subr.mxu0 0.0
        %909 = vmatpush1.msra.mxu0 0.0
        %910 = vmatprep.subr.mxu0 0.0
        %911 = vmatpush1.msra.mxu0 0.0
        %912 = vmatprep.subr.mxu0 0.0
        %913 = vmatpush1.msra.mxu0 0.0
        %914 = vmatprep.subr.mxu0 0.0
        %915 = vmatpush1.msra.mxu0 0.0
        %916 = vmatprep.subr.mxu0 0.0
        %917 = vmatpush1.msra.mxu0 0.0
        %918 = vmatprep.subr.mxu0 0.0
        %919 = vmatpush1.msra.mxu0 0.0
        %920 = vmatprep.subr.mxu0 0.0
        %921 = vmatpush1.msra.mxu0 0.0
        %922 = vmatprep.subr.mxu0 0.0
        %923 = vmatpush1.msra.mxu0 0.0
        %924 = vmatprep.subr.mxu0 0.0
        %925 = vmatpush1.msra.mxu0 0.0
        %926 = vmatprep.subr.mxu0 0.0
        %927 = vmatpush1.msra.mxu0 0.0
        %928 = vmatprep.subr.mxu0 0.0
        %929 = vmatpush1.msra.mxu0 0.0
        %930 = vmatprep.subr.mxu0 0.0
        %931 = vmatpush1.msra.mxu0 0.0
        %932 = vmatprep.subr.mxu0 0.0
        %933 = vmatpush1.msra.mxu0 0.0
        %934 = vmatprep.subr.mxu0 0.0
        %935 = vmatpush1.msra.mxu0 0.0
        %936 = vmatprep.subr.mxu0 0.0
        %937 = vmatpush1.msra.mxu0 0.0
        %938 = vmatprep.subr.mxu0 0.0
        %939 = vmatpush1.msra.mxu0 0.0
        %940 = vmatprep.subr.mxu0 0.0
        %941 = vmatpush1.msra.mxu0 0.0
        %942 = vmatprep.subr.mxu0 0.0
        %943 = vmatpush1.msra.mxu0 0.0
        %944 = vmatprep.subr.mxu0 0.0
        %945 = vmatpush1.msra.mxu0 0.0
        %946 = vmatprep.subr.mxu0 0.0
        %947 = vmatpush1.msra.mxu0 0.0
        %948 = vmatprep.subr.mxu0 0.0
        %949 = vmatpush1.msra.mxu0 0.0
        %950 = vmatprep.subr.mxu0 0.0
        %951 = vmatpush1.msra.mxu0 0.0
        %952 = vmatprep.subr.mxu0 0.0
        %953 = vmatpush1.msra.mxu0 0.0
        %954 = vmatprep.subr.mxu0 0.0
        %955 = vmatpush1.msra.mxu0 0.0
        %956 = vmatprep.mubr.f32.mxu0 0.0
        %957 = vmatmul.mubr.f32.gmra.mrb[0].mxu0 %v887
        %v958 = vpop.f32.mrb[0].mxu0
        %v959 = vadd.f32 0.0, %v958
        %v960 = vpop.f32.mrb[0].mxu0
        %961 = vmatprep.mubr.f32.mxu0 0.0
        %962 = vmatmul.mubr.f32.gmra.mrb[0].mxu0 %v890
        %v963 = vpop.f32.mrb[0].mxu0
        %v964 = vadd.f32 0.0, %v963
        %v965 = vpop.f32.mrb[0].mxu0
        %966 = vdwg.mxu0
        %v967 = vadd.f32 %v877, %v959
        %v968 = vadd.f32 %v878, %v964
        %v969 = vld [vmem:[#allocation2 + $0x9] sm:$0xff]
        %v970 = vld [vmem:[#allocation2 + $0x11] sm:$0xff]
        %s971 = scalar_lea.vmem %s1, 288
        %v972 = vld [vmem:[%s971] sm:$0xff]
        %v973 = vld [vmem:[%s971 + $0x8] sm:$0xff]
        %v974 = vld [vmem:[%s971 + $0x10] sm:$0xff]
        %v975 = vld [vmem:[%s971 + $0x18] sm:$0xff]
        %v977 = vsel %vm142, %v969, 0
        %v980 = vsel %vm142, %v970, 0
        %982 = vmatprep.subr.mxu0 0.0
        %983 = vmatpush1.msra.mxu0 %v972
        %984 = vmatprep.subr.mxu0 0.0
        %985 = vmatpush1.msra.mxu0 %v973
        %986 = vmatprep.subr.mxu0 0.0
        %987 = vmatpush1.msra.mxu0 %v974
        %988 = vmatprep.subr.mxu0 0.0
        %989 = vmatpush1.msra.mxu0 %v975
        %990 = vmatprep.subr.mxu0 0.0
        %991 = vmatpush1.msra.mxu0 0.0
        %992 = vmatprep.subr.mxu0 0.0
        %993 = vmatpush1.msra.mxu0 0.0
        %994 = vmatprep.subr.mxu0 0.0
        %995 = vmatpush1.msra.mxu0 0.0
        %996 = vmatprep.subr.mxu0 0.0
        %997 = vmatpush1.msra.mxu0 0.0
        %998 = vmatprep.subr.mxu0 0.0
        %999 = vmatpush1.msra.mxu0 0.0
        %1000 = vmatprep.subr.mxu0 0.0
        %1001 = vmatpush1.msra.mxu0 0.0
        %1002 = vmatprep.subr.mxu0 0.0
        %1003 = vmatpush1.msra.mxu0 0.0
        %1004 = vmatprep.subr.mxu0 0.0
        %1005 = vmatpush1.msra.mxu0 0.0
        %1006 = vmatprep.subr.mxu0 0.0
        %1007 = vmatpush1.msra.mxu0 0.0
        %1008 = vmatprep.subr.mxu0 0.0
        %1009 = vmatpush1.msra.mxu0 0.0
        %1010 = vmatprep.subr.mxu0 0.0
        %1011 = vmatpush1.msra.mxu0 0.0
        %1012 = vmatprep.subr.mxu0 0.0
        %1013 = vmatpush1.msra.mxu0 0.0
        %1014 = vmatprep.subr.mxu0 0.0
        %1015 = vmatpush1.msra.mxu0 0.0
        %1016 = vmatprep.subr.mxu0 0.0
        %1017 = vmatpush1.msra.mxu0 0.0
        %1018 = vmatprep.subr.mxu0 0.0
        %1019 = vmatpush1.msra.mxu0 0.0
        %1020 = vmatprep.subr.mxu0 0.0
        %1021 = vmatpush1.msra.mxu0 0.0
        %1022 = vmatprep.subr.mxu0 0.0
        %1023 = vmatpush1.msra.mxu0 0.0
        %1024 = vmatprep.subr.mxu0 0.0
        %1025 = vmatpush1.msra.mxu0 0.0
        %1026 = vmatprep.subr.mxu0 0.0
        %1027 = vmatpush1.msra.mxu0 0.0
        %1028 = vmatprep.subr.mxu0 0.0
        %1029 = vmatpush1.msra.mxu0 0.0
        %1030 = vmatprep.subr.mxu0 0.0
        %1031 = vmatpush1.msra.mxu0 0.0
        %1032 = vmatprep.subr.mxu0 0.0
        %1033 = vmatpush1.msra.mxu0 0.0
        %1034 = vmatprep.subr.mxu0 0.0
        %1035 = vmatpush1.msra.mxu0 0.0
        %1036 = vmatprep.subr.mxu0 0.0
        %1037 = vmatpush1.msra.mxu0 0.0
        %1038 = vmatprep.subr.mxu0 0.0
        %1039 = vmatpush1.msra.mxu0 0.0
        %1040 = vmatprep.subr.mxu0 0.0
        %1041 = vmatpush1.msra.mxu0 0.0
        %1042 = vmatprep.subr.mxu0 0.0
        %1043 = vmatpush1.msra.mxu0 0.0
        %1044 = vmatprep.subr.mxu0 0.0
        %1045 = vmatpush1.msra.mxu0 0.0
        %1046 = vmatprep.mubr.f32.mxu0 0.0
        %1047 = vmatmul.mubr.f32.gmra.mrb[0].mxu0 %v977
        %v1048 = vpop.f32.mrb[0].mxu0
        %v1049 = vadd.f32 0.0, %v1048
        %v1050 = vpop.f32.mrb[0].mxu0
        %1051 = vmatprep.mubr.f32.mxu0 0.0
        %1052 = vmatmul.mubr.f32.gmra.mrb[0].mxu0 %v980
        %v1053 = vpop.f32.mrb[0].mxu0
        %v1054 = vadd.f32 0.0, %v1053
        %v1055 = vpop.f32.mrb[0].mxu0
        %1056 = vdwg.mxu0
        %v1057 = vadd.f32 %v967, %v1049
        %v1058 = vadd.f32 %v968, %v1054
        %v1059 = vld [vmem:[#allocation2 + $0xa] sm:$0xff]
        %v1060 = vld [vmem:[#allocation2 + $0x12] sm:$0xff]
        %s1061 = scalar_lea.vmem %s1, 320
        %v1062 = vld [vmem:[%s1061] sm:$0xff]
        %v1063 = vld [vmem:[%s1061 + $0x8] sm:$0xff]
        %v1064 = vld [vmem:[%s1061 + $0x10] sm:$0xff]
        %v1065 = vld [vmem:[%s1061 + $0x18] sm:$0xff]
        %v1067 = vsel %vm142, %v1059, 0
        %v1070 = vsel %vm142, %v1060, 0
        %1072 = vmatprep.subr.mxu0 0.0
        %1073 = vmatpush1.msra.mxu0 %v1062
        %1074 = vmatprep.subr.mxu0 0.0
        %1075 = vmatpush1.msra.mxu0 %v1063
        %1076 = vmatprep.subr.mxu0 0.0
        %1077 = vmatpush1.msra.mxu0 %v1064
        %1078 = vmatprep.subr.mxu0 0.0
        %1079 = vmatpush1.msra.mxu0 %v1065
        %1080 = vmatprep.subr.mxu0 0.0
        %1081 = vmatpush1.msra.mxu0 0.0
        %1082 = vmatprep.subr.mxu0 0.0
        %1083 = vmatpush1.msra.mxu0 0.0
        %1084 = vmatprep.subr.mxu0 0.0
        %1085 = vmatpush1.msra.mxu0 0.0
        %1086 = vmatprep.subr.mxu0 0.0
        %1087 = vmatpush1.msra.mxu0 0.0
        %1088 = vmatprep.subr.mxu0 0.0
        %1089 = vmatpush1.msra.mxu0 0.0
        %1090 = vmatprep.subr.mxu0 0.0
        %1091 = vmatpush1.msra.mxu0 0.0
        %1092 = vmatprep.subr.mxu0 0.0
        %1093 = vmatpush1.msra.mxu0 0.0
        %1094 = vmatprep.subr.mxu0 0.0
        %1095 = vmatpush1.msra.mxu0 0.0
        %1096 = vmatprep.subr.mxu0 0.0
        %1097 = vmatpush1.msra.mxu0 0.0
        %1098 = vmatprep.subr.mxu0 0.0
        %1099 = vmatpush1.msra.mxu0 0.0
        %1100 = vmatprep.subr.mxu0 0.0
        %1101 = vmatpush1.msra.mxu0 0.0
        %1102 = vmatprep.subr.mxu0 0.0
        %1103 = vmatpush1.msra.mxu0 0.0
        %1104 = vmatprep.subr.mxu0 0.0
        %1105 = vmatpush1.msra.mxu0 0.0
        %1106 = vmatprep.subr.mxu0 0.0
        %1107 = vmatpush1.msra.mxu0 0.0
        %1108 = vmatprep.subr.mxu0 0.0
        %1109 = vmatpush1.msra.mxu0 0.0
        %1110 = vmatprep.subr.mxu0 0.0
        %1111 = vmatpush1.msra.mxu0 0.0
        %1112 = vmatprep.subr.mxu0 0.0
        %1113 = vmatpush1.msra.mxu0 0.0
        %1114 = vmatprep.subr.mxu0 0.0
        %1115 = vmatpush1.msra.mxu0 0.0
        %1116 = vmatprep.subr.mxu0 0.0
        %1117 = vmatpush1.msra.mxu0 0.0
        %1118 = vmatprep.subr.mxu0 0.0
        %1119 = vmatpush1.msra.mxu0 0.0
        %1120 = vmatprep.subr.mxu0 0.0
        %1121 = vmatpush1.msra.mxu0 0.0
        %1122 = vmatprep.subr.mxu0 0.0
        %1123 = vmatpush1.msra.mxu0 0.0
        %1124 = vmatprep.subr.mxu0 0.0
        %1125 = vmatpush1.msra.mxu0 0.0
        %1126 = vmatprep.subr.mxu0 0.0
        %1127 = vmatpush1.msra.mxu0 0.0
        %1128 = vmatprep.subr.mxu0 0.0
        %1129 = vmatpush1.msra.mxu0 0.0
        %1130 = vmatprep.subr.mxu0 0.0
        %1131 = vmatpush1.msra.mxu0 0.0
        %1132 = vmatprep.subr.mxu0 0.0
        %1133 = vmatpush1.msra.mxu0 0.0
        %1134 = vmatprep.subr.mxu0 0.0
        %1135 = vmatpush1.msra.mxu0 0.0
        %1136 = vmatprep.mubr.f32.mxu0 0.0
        %1137 = vmatmul.mubr.f32.gmra.mrb[0].mxu0 %v1067
        %v1138 = vpop.f32.mrb[0].mxu0
        %v1139 = vadd.f32 0.0, %v1138
        %v1140 = vpop.f32.mrb[0].mxu0
        %1141 = vmatprep.mubr.f32.mxu0 0.0
        %1142 = vmatmul.mubr.f32.gmra.mrb[0].mxu0 %v1070
        %v1143 = vpop.f32.mrb[0].mxu0
        %v1144 = vadd.f32 0.0, %v1143
        %v1145 = vpop.f32.mrb[0].mxu0
        %1146 = vdwg.mxu0
        %v1147 = vadd.f32 %v1057, %v1139
        %v1148 = vadd.f32 %v1058, %v1144
        %v1149 = vld [vmem:[#allocation2 + $0xb] sm:$0xff]
        %v1150 = vld [vmem:[#allocation2 + $0x13] sm:$0xff]
        %s1151 = scalar_lea.vmem %s1, 352
        %v1152 = vld [vmem:[%s1151] sm:$0xff]
        %v1153 = vld [vmem:[%s1151 + $0x8] sm:$0xff]
        %v1154 = vld [vmem:[%s1151 + $0x10] sm:$0xff]
        %v1155 = vld [vmem:[%s1151 + $0x18] sm:$0xff]
        %v1157 = vsel %vm142, %v1149, 0
        %v1160 = vsel %vm142, %v1150, 0
        %1162 = vmatprep.subr.mxu0 0.0
        %1163 = vmatpush1.msra.mxu0 %v1152
        %1164 = vmatprep.subr.mxu0 0.0
        %1165 = vmatpush1.msra.mxu0 %v1153
        %1166 = vmatprep.subr.mxu0 0.0
        %1167 = vmatpush1.msra.mxu0 %v1154
        %1168 = vmatprep.subr.mxu0 0.0
        %1169 = vmatpush1.msra.mxu0 %v1155
        %1170 = vmatprep.subr.mxu0 0.0
        %1171 = vmatpush1.msra.mxu0 0.0
        %1172 = vmatprep.subr.mxu0 0.0
        %1173 = vmatpush1.msra.mxu0 0.0
        %1174 = vmatprep.subr.mxu0 0.0
        %1175 = vmatpush1.msra.mxu0 0.0
        %1176 = vmatprep.subr.mxu0 0.0
        %1177 = vmatpush1.msra.mxu0 0.0
        %1178 = vmatprep.subr.mxu0 0.0
        %1179 = vmatpush1.msra.mxu0 0.0
        %1180 = vmatprep.subr.mxu0 0.0
        %1181 = vmatpush1.msra.mxu0 0.0
        %1182 = vmatprep.subr.mxu0 0.0
        %1183 = vmatpush1.msra.mxu0 0.0
        %1184 = vmatprep.subr.mxu0 0.0
        %1185 = vmatpush1.msra.mxu0 0.0
        %1186 = vmatprep.subr.mxu0 0.0
        %1187 = vmatpush1.msra.mxu0 0.0
        %1188 = vmatprep.subr.mxu0 0.0
        %1189 = vmatpush1.msra.mxu0 0.0
        %1190 = vmatprep.subr.mxu0 0.0
        %1191 = vmatpush1.msra.mxu0 0.0
        %1192 = vmatprep.subr.mxu0 0.0
        %1193 = vmatpush1.msra.mxu0 0.0
        %1194 = vmatprep.subr.mxu0 0.0
        %1195 = vmatpush1.msra.mxu0 0.0
        %1196 = vmatprep.subr.mxu0 0.0
        %1197 = vmatpush1.msra.mxu0 0.0
        %1198 = vmatprep.subr.mxu0 0.0
        %1199 = vmatpush1.msra.mxu0 0.0
        %1200 = vmatprep.subr.mxu0 0.0
        %1201 = vmatpush1.msra.mxu0 0.0
        %1202 = vmatprep.subr.mxu0 0.0
        %1203 = vmatpush1.msra.mxu0 0.0
        %1204 = vmatprep.subr.mxu0 0.0
        %1205 = vmatpush1.msra.mxu0 0.0
        %1206 = vmatprep.subr.mxu0 0.0
        %1207 = vmatpush1.msra.mxu0 0.0
        %1208 = vmatprep.subr.mxu0 0.0
        %1209 = vmatpush1.msra.mxu0 0.0
        %1210 = vmatprep.subr.mxu0 0.0
        %1211 = vmatpush1.msra.mxu0 0.0
        %1212 = vmatprep.subr.mxu0 0.0
        %1213 = vmatpush1.msra.mxu0 0.0
        %1214 = vmatprep.subr.mxu0 0.0
        %1215 = vmatpush1.msra.mxu0 0.0
        %1216 = vmatprep.subr.mxu0 0.0
        %1217 = vmatpush1.msra.mxu0 0.0
        %1218 = vmatprep.subr.mxu0 0.0
        %1219 = vmatpush1.msra.mxu0 0.0
        %1220 = vmatprep.subr.mxu0 0.0
        %1221 = vmatpush1.msra.mxu0 0.0
        %1222 = vmatprep.subr.mxu0 0.0
        %1223 = vmatpush1.msra.mxu0 0.0
        %1224 = vmatprep.subr.mxu0 0.0
        %1225 = vmatpush1.msra.mxu0 0.0
        %1226 = vmatprep.mubr.f32.mxu0 0.0
        %1227 = vmatmul.mubr.f32.gmra.mrb[0].mxu0 %v1157
        %v1228 = vpop.f32.mrb[0].mxu0
        %v1229 = vadd.f32 0.0, %v1228
        %v1230 = vpop.f32.mrb[0].mxu0
        %1231 = vmatprep.mubr.f32.mxu0 0.0
        %1232 = vmatmul.mubr.f32.gmra.mrb[0].mxu0 %v1160
        %v1233 = vpop.f32.mrb[0].mxu0
        %v1234 = vadd.f32 0.0, %v1233
        %v1235 = vpop.f32.mrb[0].mxu0
        %1236 = vdwg.mxu0
        %v1237 = vadd.f32 %v1147, %v1229
        %v1238 = vadd.f32 %v1148, %v1234
        %v1239 = vld [vmem:[#allocation2 + $0xc] sm:$0xff]
        %v1240 = vld [vmem:[#allocation2 + $0x14] sm:$0xff]
        %s1241 = scalar_lea.vmem %s1, 384
        %v1242 = vld [vmem:[%s1241] sm:$0xff]
        %v1243 = vld [vmem:[%s1241 + $0x8] sm:$0xff]
        %v1244 = vld [vmem:[%s1241 + $0x10] sm:$0xff]
        %v1245 = vld [vmem:[%s1241 + $0x18] sm:$0xff]
        %v1247 = vsel %vm142, %v1239, 0
        %v1250 = vsel %vm142, %v1240, 0
        %1252 = vmatprep.subr.mxu0 0.0
        %1253 = vmatpush1.msra.mxu0 %v1242
        %1254 = vmatprep.subr.mxu0 0.0
        %1255 = vmatpush1.msra.mxu0 %v1243
        %1256 = vmatprep.subr.mxu0 0.0
        %1257 = vmatpush1.msra.mxu0 %v1244
        %1258 = vmatprep.subr.mxu0 0.0
        %1259 = vmatpush1.msra.mxu0 %v1245
        %1260 = vmatprep.subr.mxu0 0.0
        %1261 = vmatpush1.msra.mxu0 0.0
        %1262 = vmatprep.subr.mxu0 0.0
        %1263 = vmatpush1.msra.mxu0 0.0
        %1264 = vmatprep.subr.mxu0 0.0
        %1265 = vmatpush1.msra.mxu0 0.0
        %1266 = vmatprep.subr.mxu0 0.0
        %1267 = vmatpush1.msra.mxu0 0.0
        %1268 = vmatprep.subr.mxu0 0.0
        %1269 = vmatpush1.msra.mxu0 0.0
        %1270 = vmatprep.subr.mxu0 0.0
        %1271 = vmatpush1.msra.mxu0 0.0
        %1272 = vmatprep.subr.mxu0 0.0
        %1273 = vmatpush1.msra.mxu0 0.0
        %1274 = vmatprep.subr.mxu0 0.0
        %1275 = vmatpush1.msra.mxu0 0.0
        %1276 = vmatprep.subr.mxu0 0.0
        %1277 = vmatpush1.msra.mxu0 0.0
        %1278 = vmatprep.subr.mxu0 0.0
        %1279 = vmatpush1.msra.mxu0 0.0
        %1280 = vmatprep.subr.mxu0 0.0
        %1281 = vmatpush1.msra.mxu0 0.0
        %1282 = vmatprep.subr.mxu0 0.0
        %1283 = vmatpush1.msra.mxu0 0.0
        %1284 = vmatprep.subr.mxu0 0.0
        %1285 = vmatpush1.msra.mxu0 0.0
        %1286 = vmatprep.subr.mxu0 0.0
        %1287 = vmatpush1.msra.mxu0 0.0
        %1288 = vmatprep.subr.mxu0 0.0
        %1289 = vmatpush1.msra.mxu0 0.0
        %1290 = vmatprep.subr.mxu0 0.0
        %1291 = vmatpush1.msra.mxu0 0.0
        %1292 = vmatprep.subr.mxu0 0.0
        %1293 = vmatpush1.msra.mxu0 0.0
        %1294 = vmatprep.subr.mxu0 0.0
        %1295 = vmatpush1.msra.mxu0 0.0
        %1296 = vmatprep.subr.mxu0 0.0
        %1297 = vmatpush1.msra.mxu0 0.0
        %1298 = vmatprep.subr.mxu0 0.0
        %1299 = vmatpush1.msra.mxu0 0.0
        %1300 = vmatprep.subr.mxu0 0.0
        %1301 = vmatpush1.msra.mxu0 0.0
        %1302 = vmatprep.subr.mxu0 0.0
        %1303 = vmatpush1.msra.mxu0 0.0
        %1304 = vmatprep.subr.mxu0 0.0
        %1305 = vmatpush1.msra.mxu0 0.0
        %1306 = vmatprep.subr.mxu0 0.0
        %1307 = vmatpush1.msra.mxu0 0.0
        %1308 = vmatprep.subr.mxu0 0.0
        %1309 = vmatpush1.msra.mxu0 0.0
        %1310 = vmatprep.subr.mxu0 0.0
        %1311 = vmatpush1.msra.mxu0 0.0
        %1312 = vmatprep.subr.mxu0 0.0
        %1313 = vmatpush1.msra.mxu0 0.0
        %1314 = vmatprep.subr.mxu0 0.0
        %1315 = vmatpush1.msra.mxu0 0.0
        %1316 = vmatprep.mubr.f32.mxu0 0.0
        %1317 = vmatmul.mubr.f32.gmra.mrb[0].mxu0 %v1247
        %v1318 = vpop.f32.mrb[0].mxu0
        %v1319 = vadd.f32 0.0, %v1318
        %v1320 = vpop.f32.mrb[0].mxu0
        %1321 = vmatprep.mubr.f32.mxu0 0.0
        %1322 = vmatmul.mubr.f32.gmra.mrb[0].mxu0 %v1250
        %v1323 = vpop.f32.mrb[0].mxu0
        %v1324 = vadd.f32 0.0, %v1323
        %v1325 = vpop.f32.mrb[0].mxu0
        %1326 = vdwg.mxu0
        %v1327 = vadd.f32 %v1237, %v1319
        %v1328 = vadd.f32 %v1238, %v1324
        %v1329 = vld [vmem:[#allocation2 + $0xd] sm:$0xff]
        %v1330 = vld [vmem:[#allocation2 + $0x15] sm:$0xff]
        %s1331 = scalar_lea.vmem %s1, 416
        %v1332 = vld [vmem:[%s1331] sm:$0xff]
        %v1333 = vld [vmem:[%s1331 + $0x8] sm:$0xff]
        %v1334 = vld [vmem:[%s1331 + $0x10] sm:$0xff]
        %v1335 = vld [vmem:[%s1331 + $0x18] sm:$0xff]
        %v1337 = vsel %vm142, %v1329, 0
        %v1340 = vsel %vm142, %v1330, 0
        %1342 = vmatprep.subr.mxu0 0.0
        %1343 = vmatpush1.msra.mxu0 %v1332
        %1344 = vmatprep.subr.mxu0 0.0
        %1345 = vmatpush1.msra.mxu0 %v1333
        %1346 = vmatprep.subr.mxu0 0.0
        %1347 = vmatpush1.msra.mxu0 %v1334
        %1348 = vmatprep.subr.mxu0 0.0
        %1349 = vmatpush1.msra.mxu0 %v1335
        %1350 = vmatprep.subr.mxu0 0.0
        %1351 = vmatpush1.msra.mxu0 0.0
        %1352 = vmatprep.subr.mxu0 0.0
        %1353 = vmatpush1.msra.mxu0 0.0
        %1354 = vmatprep.subr.mxu0 0.0
        %1355 = vmatpush1.msra.mxu0 0.0
        %1356 = vmatprep.subr.mxu0 0.0
        %1357 = vmatpush1.msra.mxu0 0.0
        %1358 = vmatprep.subr.mxu0 0.0
        %1359 = vmatpush1.msra.mxu0 0.0
        %1360 = vmatprep.subr.mxu0 0.0
        %1361 = vmatpush1.msra.mxu0 0.0
        %1362 = vmatprep.subr.mxu0 0.0
        %1363 = vmatpush1.msra.mxu0 0.0
        %1364 = vmatprep.subr.mxu0 0.0
        %1365 = vmatpush1.msra.mxu0 0.0
        %1366 = vmatprep.subr.mxu0 0.0
        %1367 = vmatpush1.msra.mxu0 0.0
        %1368 = vmatprep.subr.mxu0 0.0
        %1369 = vmatpush1.msra.mxu0 0.0
        %1370 = vmatprep.subr.mxu0 0.0
        %1371 = vmatpush1.msra.mxu0 0.0
        %1372 = vmatprep.subr.mxu0 0.0
        %1373 = vmatpush1.msra.mxu0 0.0
        %1374 = vmatprep.subr.mxu0 0.0
        %1375 = vmatpush1.msra.mxu0 0.0
        %1376 = vmatprep.subr.mxu0 0.0
        %1377 = vmatpush1.msra.mxu0 0.0
        %1378 = vmatprep.subr.mxu0 0.0
        %1379 = vmatpush1.msra.mxu0 0.0
        %1380 = vmatprep.subr.mxu0 0.0
        %1381 = vmatpush1.msra.mxu0 0.0
        %1382 = vmatprep.subr.mxu0 0.0
        %1383 = vmatpush1.msra.mxu0 0.0
        %1384 = vmatprep.subr.mxu0 0.0
        %1385 = vmatpush1.msra.mxu0 0.0
        %1386 = vmatprep.subr.mxu0 0.0
        %1387 = vmatpush1.msra.mxu0 0.0
        %1388 = vmatprep.subr.mxu0 0.0
        %1389 = vmatpush1.msra.mxu0 0.0
        %1390 = vmatprep.subr.mxu0 0.0
        %1391 = vmatpush1.msra.mxu0 0.0
        %1392 = vmatprep.subr.mxu0 0.0
        %1393 = vmatpush1.msra.mxu0 0.0
        %1394 = vmatprep.subr.mxu0 0.0
        %1395 = vmatpush1.msra.mxu0 0.0
        %1396 = vmatprep.subr.mxu0 0.0
        %1397 = vmatpush1.msra.mxu0 0.0
        %1398 = vmatprep.subr.mxu0 0.0
        %1399 = vmatpush1.msra.mxu0 0.0
        %1400 = vmatprep.subr.mxu0 0.0
        %1401 = vmatpush1.msra.mxu0 0.0
        %1402 = vmatprep.subr.mxu0 0.0
        %1403 = vmatpush1.msra.mxu0 0.0
        %1404 = vmatprep.subr.mxu0 0.0
        %1405 = vmatpush1.msra.mxu0 0.0
        %1406 = vmatprep.mubr.f32.mxu0 0.0
        %1407 = vmatmul.mubr.f32.gmra.mrb[0].mxu0 %v1337
        %v1408 = vpop.f32.mrb[0].mxu0
        %v1409 = vadd.f32 0.0, %v1408
        %v1410 = vpop.f32.mrb[0].mxu0
        %1411 = vmatprep.mubr.f32.mxu0 0.0
        %1412 = vmatmul.mubr.f32.gmra.mrb[0].mxu0 %v1340
        %v1413 = vpop.f32.mrb[0].mxu0
        %v1414 = vadd.f32 0.0, %v1413
        %v1415 = vpop.f32.mrb[0].mxu0
        %1416 = vdwg.mxu0
        %v1417 = vadd.f32 %v1327, %v1409
        %v1418 = vadd.f32 %v1328, %v1414
        %v1419 = vld [vmem:[#allocation2 + $0xe] sm:$0xff]
        %v1420 = vld [vmem:[#allocation2 + $0x16] sm:$0xff]
        %s1421 = scalar_lea.vmem %s1, 448
        %v1422 = vld [vmem:[%s1421] sm:$0xff]
        %v1423 = vld [vmem:[%s1421 + $0x8] sm:$0xff]
        %v1424 = vld [vmem:[%s1421 + $0x10] sm:$0xff]
        %v1425 = vld [vmem:[%s1421 + $0x18] sm:$0xff]
        %v1427 = vsel %vm142, %v1419, 0
        %v1430 = vsel %vm142, %v1420, 0
        %1432 = vmatprep.subr.mxu0 0.0
        %1433 = vmatpush1.msra.mxu0 %v1422
        %1434 = vmatprep.subr.mxu0 0.0
        %1435 = vmatpush1.msra.mxu0 %v1423
        %1436 = vmatprep.subr.mxu0 0.0
        %1437 = vmatpush1.msra.mxu0 %v1424
        %1438 = vmatprep.subr.mxu0 0.0
        %1439 = vmatpush1.msra.mxu0 %v1425
        %1440 = vmatprep.subr.mxu0 0.0
        %1441 = vmatpush1.msra.mxu0 0.0
        %1442 = vmatprep.subr.mxu0 0.0
        %1443 = vmatpush1.msra.mxu0 0.0
        %1444 = vmatprep.subr.mxu0 0.0
        %1445 = vmatpush1.msra.mxu0 0.0
        %1446 = vmatprep.subr.mxu0 0.0
        %1447 = vmatpush1.msra.mxu0 0.0
        %1448 = vmatprep.subr.mxu0 0.0
        %1449 = vmatpush1.msra.mxu0 0.0
        %1450 = vmatprep.subr.mxu0 0.0
        %1451 = vmatpush1.msra.mxu0 0.0
        %1452 = vmatprep.subr.mxu0 0.0
        %1453 = vmatpush1.msra.mxu0 0.0
        %1454 = vmatprep.subr.mxu0 0.0
        %1455 = vmatpush1.msra.mxu0 0.0
        %1456 = vmatprep.subr.mxu0 0.0
        %1457 = vmatpush1.msra.mxu0 0.0
        %1458 = vmatprep.subr.mxu0 0.0
        %1459 = vmatpush1.msra.mxu0 0.0
        %1460 = vmatprep.subr.mxu0 0.0
        %1461 = vmatpush1.msra.mxu0 0.0
        %1462 = vmatprep.subr.mxu0 0.0
        %1463 = vmatpush1.msra.mxu0 0.0
        %1464 = vmatprep.subr.mxu0 0.0
        %1465 = vmatpush1.msra.mxu0 0.0
        %1466 = vmatprep.subr.mxu0 0.0
        %1467 = vmatpush1.msra.mxu0 0.0
        %1468 = vmatprep.subr.mxu0 0.0
        %1469 = vmatpush1.msra.mxu0 0.0
        %1470 = vmatprep.subr.mxu0 0.0
        %1471 = vmatpush1.msra.mxu0 0.0
        %1472 = vmatprep.subr.mxu0 0.0
        %1473 = vmatpush1.msra.mxu0 0.0
        %1474 = vmatprep.subr.mxu0 0.0
        %1475 = vmatpush1.msra.mxu0 0.0
        %1476 = vmatprep.subr.mxu0 0.0
        %1477 = vmatpush1.msra.mxu0 0.0
        %1478 = vmatprep.subr.mxu0 0.0
        %1479 = vmatpush1.msra.mxu0 0.0
        %1480 = vmatprep.subr.mxu0 0.0
        %1481 = vmatpush1.msra.mxu0 0.0
        %1482 = vmatprep.subr.mxu0 0.0
        %1483 = vmatpush1.msra.mxu0 0.0
        %1484 = vmatprep.subr.mxu0 0.0
        %1485 = vmatpush1.msra.mxu0 0.0
        %1486 = vmatprep.subr.mxu0 0.0
        %1487 = vmatpush1.msra.mxu0 0.0
        %1488 = vmatprep.subr.mxu0 0.0
        %1489 = vmatpush1.msra.mxu0 0.0
        %1490 = vmatprep.subr.mxu0 0.0
        %1491 = vmatpush1.msra.mxu0 0.0
        %1492 = vmatprep.subr.mxu0 0.0
        %1493 = vmatpush1.msra.mxu0 0.0
        %1494 = vmatprep.subr.mxu0 0.0
        %1495 = vmatpush1.msra.mxu0 0.0
        %1496 = vmatprep.mubr.f32.mxu0 0.0
        %1497 = vmatmul.mubr.f32.gmra.mrb[0].mxu0 %v1427
        %v1498 = vpop.f32.mrb[0].mxu0
        %v1499 = vadd.f32 0.0, %v1498
        %v1500 = vpop.f32.mrb[0].mxu0
        %1501 = vmatprep.mubr.f32.mxu0 0.0
        %1502 = vmatmul.mubr.f32.gmra.mrb[0].mxu0 %v1430
        %v1503 = vpop.f32.mrb[0].mxu0
        %v1504 = vadd.f32 0.0, %v1503
        %v1505 = vpop.f32.mrb[0].mxu0
        %1506 = vdwg.mxu0
        %v1507 = vadd.f32 %v1417, %v1499
        %v1508 = vadd.f32 %v1418, %v1504
        %v1509 = vld [vmem:[#allocation2 + $0xf] sm:$0xff]
        %v1510 = vld [vmem:[#allocation2 + $0x17] sm:$0xff]
        %s1511 = scalar_lea.vmem %s1, 480
        %v1512 = vld [vmem:[%s1511] sm:$0xff]
        %v1513 = vld [vmem:[%s1511 + $0x8] sm:$0xff]
        %v1514 = vld [vmem:[%s1511 + $0x10] sm:$0xff]
        %v1515 = vld [vmem:[%s1511 + $0x18] sm:$0xff]
        %v1517 = vsel %vm142, %v1509, 0
        %v1520 = vsel %vm142, %v1510, 0
        %1522 = vmatprep.subr.mxu0 0.0
        %1523 = vmatpush1.msra.mxu0 %v1512
        %1524 = vmatprep.subr.mxu0 0.0
        %1525 = vmatpush1.msra.mxu0 %v1513
        %1526 = vmatprep.subr.mxu0 0.0
        %1527 = vmatpush1.msra.mxu0 %v1514
        %1528 = vmatprep.subr.mxu0 0.0
        %1529 = vmatpush1.msra.mxu0 %v1515
        %1530 = vmatprep.subr.mxu0 0.0
        %1531 = vmatpush1.msra.mxu0 0.0
        %1532 = vmatprep.subr.mxu0 0.0
        %1533 = vmatpush1.msra.mxu0 0.0
        %1534 = vmatprep.subr.mxu0 0.0
        %1535 = vmatpush1.msra.mxu0 0.0
        %1536 = vmatprep.subr.mxu0 0.0
        %1537 = vmatpush1.msra.mxu0 0.0
        %1538 = vmatprep.subr.mxu0 0.0
        %1539 = vmatpush1.msra.mxu0 0.0
        %1540 = vmatprep.subr.mxu0 0.0
        %1541 = vmatpush1.msra.mxu0 0.0
        %1542 = vmatprep.subr.mxu0 0.0
        %1543 = vmatpush1.msra.mxu0 0.0
        %1544 = vmatprep.subr.mxu0 0.0
        %1545 = vmatpush1.msra.mxu0 0.0
        %1546 = vmatprep.subr.mxu0 0.0
        %1547 = vmatpush1.msra.mxu0 0.0
        %1548 = vmatprep.subr.mxu0 0.0
        %1549 = vmatpush1.msra.mxu0 0.0
        %1550 = vmatprep.subr.mxu0 0.0
        %1551 = vmatpush1.msra.mxu0 0.0
        %1552 = vmatprep.subr.mxu0 0.0
        %1553 = vmatpush1.msra.mxu0 0.0
        %1554 = vmatprep.subr.mxu0 0.0
        %1555 = vmatpush1.msra.mxu0 0.0
        %1556 = vmatprep.subr.mxu0 0.0
        %1557 = vmatpush1.msra.mxu0 0.0
        %1558 = vmatprep.subr.mxu0 0.0
        %1559 = vmatpush1.msra.mxu0 0.0
        %1560 = vmatprep.subr.mxu0 0.0
        %1561 = vmatpush1.msra.mxu0 0.0
        %1562 = vmatprep.subr.mxu0 0.0
        %1563 = vmatpush1.msra.mxu0 0.0
        %1564 = vmatprep.subr.mxu0 0.0
        %1565 = vmatpush1.msra.mxu0 0.0
        %1566 = vmatprep.subr.mxu0 0.0
        %1567 = vmatpush1.msra.mxu0 0.0
        %1568 = vmatprep.subr.mxu0 0.0
        %1569 = vmatpush1.msra.mxu0 0.0
        %1570 = vmatprep.subr.mxu0 0.0
        %1571 = vmatpush1.msra.mxu0 0.0
        %1572 = vmatprep.subr.mxu0 0.0
        %1573 = vmatpush1.msra.mxu0 0.0
        %1574 = vmatprep.subr.mxu0 0.0
        %1575 = vmatpush1.msra.mxu0 0.0
        %1576 = vmatprep.subr.mxu0 0.0
        %1577 = vmatpush1.msra.mxu0 0.0
        %1578 = vmatprep.subr.mxu0 0.0
        %1579 = vmatpush1.msra.mxu0 0.0
        %1580 = vmatprep.subr.mxu0 0.0
        %1581 = vmatpush1.msra.mxu0 0.0
        %1582 = vmatprep.subr.mxu0 0.0
        %1583 = vmatpush1.msra.mxu0 0.0
        %1584 = vmatprep.subr.mxu0 0.0
        %1585 = vmatpush1.msra.mxu0 0.0
        %1586 = vmatprep.mubr.f32.mxu0 0.0
        %1587 = vmatmul.mubr.f32.gmra.mrb[0].mxu0 %v1517
        %v1588 = vpop.f32.mrb[0].mxu0
        %v1589 = vadd.f32 0.0, %v1588
        %v1590 = vpop.f32.mrb[0].mxu0
        %1591 = vmatprep.mubr.f32.mxu0 0.0
        %1592 = vmatmul.mubr.f32.gmra.mrb[0].mxu0 %v1520
        %v1593 = vpop.f32.mrb[0].mxu0
        %v1594 = vadd.f32 0.0, %v1593
        %v1595 = vpop.f32.mrb[0].mxu0
        %1596 = vdwg.mxu0
        %v1597 = vadd.f32 %v1507, %v1589
        %v1598 = vadd.f32 %v1508, %v1594
        %vm1599 = vcmask 130048
        %1600 = vst.msk [vmem:[%s136] sm:$0xff] %vm1599, %v1597
        %1601 = vst.msk [vmem:[%s136 + $0x8] sm:$0xff] %vm1599, %v1598
        %s1602 = sand.u32 %s71, 1
        %s1603 = scalar_lea.sflag [#allocation4], %s1602
        %s1604 = sand.u32 %s71, 1
        %s1605 = smul.addr %s1604, 16
        %s1606 = scalar_lea.vmem [#allocation3], %s1605
        // Predicated region
        $region29: #{tpu_custom_call.1} parent=27 // pred_check
          %p1607 = pneg %p81
        $region30: #{tpu_custom_call.1} parent=27 // pred_check_branch
          %1609 = sbr.rel (%p1607) target = $region32
        $region31: #{tpu_custom_call.1} parent=27 // pred_region
          %s1611 = ssub.s32 256, 256
          %1612 = vsyncadd %s1603, %s1611
          %s1613 = smul.addr %s16, 2
          %s1614 = smul.addr %s1613, 128
          %s1615 = scalar_lea.hbm %s2, %s1614
          %s1616 = sshll.u32 %s1606, 4
          %s1617 = int_to_ptr.vmem [resolvable:$true] %s1616
          %1622 = dma.vmem_to_hbm [thread:$0]  %s1617, 256, %s1615, %s1603, 128, 128, 8
        $region32: #{tpu_custom_call.1} parent=27 // pred_fallthru
          _
      $region28: #{tpu_custom_call.1} parent=5 // pred_fallthru
        _
      %p1623 = scmp.le.s32.totalorder 2, %s11
      // Predicated region
      $region33: #{tpu_custom_call.1} parent=5 // pred_check
        %p1624 = pneg %p1623
      $region34: #{tpu_custom_call.1} parent=5 // pred_check_branch
        %1626 = sbr.rel (%p1624) target = $region36
      $region35: #{tpu_custom_call.1} parent=5 // pred_region
        %s1627 = ssub.s32 %s11, 2
        // Predicated region
        $region37: #{tpu_custom_call.1} parent=35 // pred_check
          %p1628 = pneg %p87
        $region38: #{tpu_custom_call.1} parent=35 // pred_check_branch
          %1630 = sbr.rel (%p1628) target = $region40
        $region39: #{tpu_custom_call.1} parent=35 // pred_region
          %s1631 = sand.u32 %s72, 1
          %s1632 = scalar_lea.sflag [#allocation4], %s1631
          %s1633 = sand.u32 %s72, 1
          %s1634 = smul.addr %s1633, 16
          %s1635 = scalar_lea.vmem [#allocation3], %s1634
          %1636 = dma.done %s1632, 256
        $region40: #{tpu_custom_call.1} parent=35 // pred_fallthru
          _
      $region36: #{tpu_custom_call.1} parent=5 // pred_fallthru
        _
    $region6: #{tpu_custom_call.1} parent=1 // loop_footer
      %s15 = sadd.s32 1, %s11
    $region7: #{tpu_custom_call.1} parent=1 // loop_footer_branch
      %10 = sbr.rel target = $region3
    $region8: #{tpu_custom_call.1} parent=1 // loop_exit
      _
    %1637 = vsyncpa [#allocation4], 1
    %s1638 = scalar_lea.sflag [#allocation4], 1
    %1639 = vsyncpa %s1638, 1

// kernel: tpu_custom_call.1
$region0: #{tpu_custom_call.1}
  #allocation0 [shape = 'u32[]', space=smem, size = 0x4, offset = 0x4, fixed_abs, tag = 'smem constant byte address 0x4 - core index']
  #allocation1 [shape = 'u32[144,128]{1,0:T(1,128)}', space=vmem, size = 0x12000, scoped, tag = 'internal scratch']
  #allocation2 [shape = 'f32[32,32]{1,0:T(8,128)}', space=vmem, size = 0x4000, scoped, tag = 'scratch operand']
  %s0 = inlined_call_operand.vmem [shape: f32[2,1,16,16], index: 0, kind: input, shape index: {}]
  %s1 = inlined_call_operand.vmem [shape: f32[16,32,16], index: 1, kind: input, shape index: {}]
  %s2 = inlined_call_operand.hbm [shape: f32[2,1,16,16], index: 2, kind: output, shape index: {}]
  %s3 = sld [smem:[#allocation0]]
  $region41: #{tpu_custom_call.1} parent=0
    _
  %s5 = ssub.s32 1, %s3
  %s6 = scalar_select 0, %s5, %s3
  $region1: #{tpu_custom_call.1} parent=0
    #allocation3 [shape = 'u8[16384]{0}', space=vmem, size = 0x4000, scoped, tag = 'output window, operand 0']
    #allocation4 [shape = 's32[2]{0}', space=sflag, size = 0x8, scoped, tag = 'scoped memory for tpu_custom_call.1']
    %7 = vsyncpa [#allocation4], 0
    %s8 = scalar_lea.sflag [#allocation4], 1
    %9 = vsyncpa %s8, 0
    loop: start=0, step=1, limit=4
    $region2: #{tpu_custom_call.1} parent=1 // loop_pre_header
      _
    $region3: #{tpu_custom_call.1} parent=1 // loop_header
      %s11 = sphi 0, %s15
      %p12 = scmp.ge.s32.totalorder %s11, 4
      %s21 = sphi 0, %s23
      %s24 = sphi 0, %s21
      %s25 = sphi 0, %s24
      %s41 = sphi 0, %s25
      %s45 = sphi 0, %s45
      %s47 = sphi 0, %s45
      %s48 = sphi 0, %s47
      %s62 = sphi 0, %s48
      %s68 = sphi 0, %s70
      %s71 = sphi 0, %s68
      %s72 = sphi 0, %s71
      %s88 = sphi 0, %s72
    $region4: #{tpu_custom_call.1} parent=1 // loop_header_branch
      %14 = sbr.rel (%p12) target = $region8
    $region5: #{tpu_custom_call.1} parent=1 // loop_body
      %s16 = ssub.s32 %s11, 1
      %s17 = ssub.s32 %s11, 2
      %s18 = sadd.s32 %s11, 1
      %s19 = ssub.s32 %s11, %s18
      %p20 = scmp.eq.s32.totalorder %s19, 0
      %s22 = sadd.s32 %s21, 1
      %s23 = scalar_select %p20, %s21, %s22
      %p26 = pneg %p20
      %p27 = scmp.eq.s32.totalorder %s11, 1
      %p28 = por %p26, %p27
      %p29 = scmp.ne.s32.totalorder %s21, %s24
      %p30 = scmp.eq.s32.totalorder %s11, 0
      %p31 = por %p29, %p30
      %p32 = scmp.ne.s32.totalorder %s21, %s24
      %p33 = scmp.eq.s32.totalorder %s16, 1
      %p34 = por %p32, %p33
      %p35 = scmp.ne.s32.totalorder %s24, %s25
      %p36 = scmp.eq.s32.totalorder %s16, 0
      %p37 = por %p35, %p36
      %p38 = scmp.ne.s32.totalorder %s24, %s25
      %p39 = scmp.eq.s32.totalorder %s17, 1
      %p40 = por %p38, %p39
      %p42 = scmp.ne.s32.totalorder %s25, %s41
      %p43 = scmp.eq.s32.totalorder %s17, 0
      %p44 = por %p42, %p43
      %s46 = sadd.s32 %s45, 1
      %p49 = scmp.eq.s32.totalorder %s11, 1
      %p50 = scmp.ne.s32.totalorder %s45, %s47
      %p51 = scmp.eq.s32.totalorder %s11, 0
      %p52 = por %p50, %p51
      %p53 = scmp.ne.s32.totalorder %s45, %s47
      %p54 = scmp.eq.s32.totalorder %s16, 1
      %p55 = por %p53, %p54
      %p56 = scmp.ne.s32.totalorder %s47, %s48
      %p57 = scmp.eq.s32.totalorder %s16, 0
      %p58 = por %p56, %p57
      %p59 = scmp.ne.s32.totalorder %s47, %s48
      %p60 = scmp.eq.s32.totalorder %s17, 1
      %p61 = por %p59, %p60
      %p63 = scmp.ne.s32.totalorder %s48, %s62
      %p64 = scmp.eq.s32.totalorder %s17, 0
      %p65 = por %p63, %p64
      %s66 = ssub.s32 %s11, %s18
      %p67 = scmp.eq.s32.totalorder %s66, 0
      %s69 = sadd.s32 %s68, 1
      %s70 = scalar_select %p67, %s68, %s69
      %p73 = pneg %p67
      %p74 = scmp.eq.s32.totalorder %s11, 1
      %p75 = por %p73, %p74
      %p76 = scmp.ne.s32.totalorder %s68, %s71
      %p77 = scmp.eq.s32.totalorder %s11, 0
      %p78 = por %p76, %p77
      %p79 = scmp.ne.s32.totalorder %s68, %s71
      %p80 = scmp.eq.s32.totalorder %s16, 1
      %p81 = por %p79, %p80
      %p82 = scmp.ne.s32.totalorder %s71, %s72
      %p83 = scmp.eq.s32.totalorder %s16, 0
      %p84 = por %p82, %p83
      %p85 = scmp.ne.s32.totalorder %s71, %s72
      %p86 = scmp.eq.s32.totalorder %s17, 1
      %p87 = por %p85, %p86
      %p89 = scmp.ne.s32.totalorder %s72, %s88
      %p90 = scmp.eq.s32.totalorder %s17, 0
      %p91 = por %p89, %p90
      %p92 = scmp.le.s32.totalorder 1, %s11
      %p93 = scmp.lt.s32.totalorder %s11, 3
      %p94 = pnand %p92, %p93
      %p95 = pneg %p94
      // Predicated region
      $region9: #{tpu_custom_call.1} parent=5 // pred_check
        _
      $region10: #{tpu_custom_call.1} parent=5 // pred_check_branch
        %97 = sbr.rel (%p94) target = $region12
      $region11: #{tpu_custom_call.1} parent=5 // pred_region
        %s98 = ssub.s32 %s11, 1
        // Predicated region
        $region13: #{tpu_custom_call.1} parent=11 // pred_check
          %p99 = pneg %p58
        $region14: #{tpu_custom_call.1} parent=11 // pred_check_branch
          %101 = sbr.rel (%p99) target = $region16
        $region15: #{tpu_custom_call.1} parent=11 // pred_region
          _
        $region16: #{tpu_custom_call.1} parent=11 // pred_fallthru
          _
      $region12: #{tpu_custom_call.1} parent=5 // pred_fallthru
        _
      %p102 = scmp.lt.s32.totalorder %s11, 2
      // Predicated region
      $region17: #{tpu_custom_call.1} parent=5 // pred_check
        %p103 = pneg %p102
      $region18: #{tpu_custom_call.1} parent=5 // pred_check_branch
        %105 = sbr.rel (%p103) target = $region20
      $region19: #{tpu_custom_call.1} parent=5 // pred_region
        // Predicated region
        $region21: #{tpu_custom_call.1} parent=19 // pred_check
          %p106 = pneg %p31
        $region22: #{tpu_custom_call.1} parent=19 // pred_check_branch
          %108 = sbr.rel (%p106) target = $region24
        $region23: #{tpu_custom_call.1} parent=19 // pred_region
          %p109 = scmp.lt.s32.totalorder %s11, 1
          %s110 = scalar_select %p109, %s11, 1
          %s111 = smul.addr %s110, 2
          %s112 = smul.addr %s111, 8
          %s113 = scalar_lea.vmem %s0, %s112
        $region24: #{tpu_custom_call.1} parent=19 // pred_fallthru
          _
      $region20: #{tpu_custom_call.1} parent=5 // pred_fallthru
        _
      %p114 = scmp.le.s32.totalorder 1, %s11
      %p115 = scmp.lt.s32.totalorder %s11, 3
      %p116 = pnand %p114, %p115
      %p117 = pneg %p116
      // Predicated region
      $region25: #{tpu_custom_call.1} parent=5 // pred_check
        _
      $region26: #{tpu_custom_call.1} parent=5 // pred_check_branch
        %119 = sbr.rel (%p116) target = $region28
      $region27: #{tpu_custom_call.1} parent=5 // pred_region
        %s120 = ssub.s32 %s11, 1
        %p121 = scmp.lt.s32.totalorder %s16, 1
        %s122 = scalar_select %p121, %s16, 1
        %s123 = smul.addr %s122, 2
        %s124 = smul.addr %s123, 8
        %s125 = scalar_lea.vmem %s0, %s124
        %p126 = pneg %p37
        %p127 = pneg %p34
        %p128 = pneg %p58
        %p129 = pneg %p55
        %p130 = pneg %p84
        %p131 = pneg %p81
        %s132 = sand.u32 %s71, 1
        %s133 = scalar_lea.sflag [#allocation4], %s132
        %s134 = sand.u32 %s71, 1
        %s135 = smul.addr %s134, 16
        %s136 = scalar_lea.vmem [#allocation3], %s135
        %p137 = scmp.lt.s32.totalorder %s16, 1
        %s138 = scalar_select %p137, %s16, 1
        %s139 = smul.addr %s138, 2
        %s140 = smul.addr %s139, 8
        %s141 = scalar_lea.vmem %s0, %s140
        %vm142 = vcmask 261120
        %143 = vst.msk [vmem:[#allocation2] sm:$0xff] %vm142, 0.0
        %144 = vst.msk [vmem:[#allocation2 + $0x18] sm:$0xff] %vm142, 0.0
        %vm145 = vcmask 64512
        %146 = vst.msk [vmem:[#allocation2 + $0x8] sm:$0xff] %vm145, 0.0
        %147 = vst.msk [vmem:[#allocation2 + $0x10] sm:$0xff] %vm145, 0.0
        %vm148 = vcmask 261312
        %149 = vst.msk [vmem:[#allocation2 + $0x8] sm:$0xff] %vm148, 0.0
        %150 = vst.msk [vmem:[#allocation2 + $0x10] sm:$0xff] %vm148, 0.0
        %v151 = vld [vmem:[%s141] sm:$0xff]
        %v152 = vld [vmem:[%s141 + $0x8] sm:$0xff]
        %155 = vrot.lane.b32.xlu0 %v151, 8
        %v156 = vpop.permute.xlu0 %155
        %157 = vrot.lane.b32.xlu0 %v152, 8
        %v158 = vpop.permute.xlu0 %157
        %vm161 = vcmask 195648
        %162 = vst.msk [vmem:[#allocation2 + $0x8] sm:$0xff] %vm161, %v156
        %163 = vst.msk [vmem:[#allocation2 + $0x10] sm:$0xff] %vm161, %v158
        %v164 = vld [vmem:[#allocation2] sm:$0xff]
        %v165 = vld [vmem:[#allocation2 + $0x8] sm:$0xff]
        %v166 = vld [vmem:[%s1] sm:$0xff]
        %v167 = vld [vmem:[%s1 + $0x8] sm:$0xff]
        %v168 = vld [vmem:[%s1 + $0x10] sm:$0xff]
        %v169 = vld [vmem:[%s1 + $0x18] sm:$0xff]
        %v170 = vld [vmem:[#allocation2 + $0x1] sm:$0xff]
        %v171 = vld [vmem:[#allocation2 + $0x9] sm:$0xff]
        %s172 = scalar_lea.vmem %s1, 32
        %v173 = vld [vmem:[%s172] sm:$0xff]
        %v174 = vld [vmem:[%s172 + $0x8] sm:$0xff]
        %v175 = vld [vmem:[%s172 + $0x10] sm:$0xff]
        %v176 = vld [vmem:[%s172 + $0x18] sm:$0xff]
        %v178 = vsel %vm142, %v170, 0
        %v181 = vsel %vm142, %v171, 0
        %183 = vmatprep.subr.mxu0 0.0
        %184 = vmatpush1.msra.mxu0 %v173
        %185 = vmatprep.subr.mxu0 0.0
        %186 = vmatpush1.msra.mxu0 %v174
        %187 = vmatprep.subr.mxu0 0.0
        %188 = vmatpush1.msra.mxu0 %v175
        %189 = vmatprep.subr.mxu0 0.0
        %190 = vmatpush1.msra.mxu0 %v176
        %191 = vmatprep.subr.mxu0 0.0
        %192 = vmatpush1.msra.mxu0 0.0
        %193 = vmatprep.subr.mxu0 0.0
        %194 = vmatpush1.msra.mxu0 0.0
        %195 = vmatprep.subr.mxu0 0.0
        %196 = vmatpush1.msra.mxu0 0.0
        %197 = vmatprep.subr.mxu0 0.0
        %198 = vmatpush1.msra.mxu0 0.0
        %199 = vmatprep.subr.mxu0 0.0
        %200 = vmatpush1.msra.mxu0 0.0
        %201 = vmatprep.subr.mxu0 0.0
        %202 = vmatpush1.msra.mxu0 0.0
        %203 = vmatprep.subr.mxu0 0.0
        %204 = vmatpush1.msra.mxu0 0.0
        %205 = vmatprep.subr.mxu0 0.0
        %206 = vmatpush1.msra.mxu0 0.0
        %207 = vmatprep.subr.mxu0 0.0
        %208 = vmatpush1.msra.mxu0 0.0
        %209 = vmatprep.subr.mxu0 0.0
        %210 = vmatpush1.msra.mxu0 0.0
        %211 = vmatprep.subr.mxu0 0.0
        %212 = vmatpush1.msra.mxu0 0.0
        %213 = vmatprep.subr.mxu0 0.0
        %214 = vmatpush1.msra.mxu0 0.0
        %215 = vmatprep.subr.mxu0 0.0
        %216 = vmatpush1.msra.mxu0 0.0
        %217 = vmatprep.subr.mxu0 0.0
        %218 = vmatpush1.msra.mxu0 0.0
        %219 = vmatprep.subr.mxu0 0.0
        %220 = vmatpush1.msra.mxu0 0.0
        %221 = vmatprep.subr.mxu0 0.0
        %222 = vmatpush1.msra.mxu0 0.0
        %223 = vmatprep.subr.mxu0 0.0
        %224 = vmatpush1.msra.mxu0 0.0
        %225 = vmatprep.subr.mxu0 0.0
        %226 = vmatpush1.msra.mxu0 0.0
        %227 = vmatprep.subr.mxu0 0.0
        %228 = vmatpush1.msra.mxu0 0.0
        %229 = vmatprep.subr.mxu0 0.0
        %230 = vmatpush1.msra.mxu0 0.0
        %231 = vmatprep.subr.mxu0 0.0
        %232 = vmatpush1.msra.mxu0 0.0
        %233 = vmatprep.subr.mxu0 0.0
        %234 = vmatpush1.msra.mxu0 0.0
        %235 = vmatprep.subr.mxu0 0.0
        %236 = vmatpush1.msra.mxu0 0.0
        %237 = vmatprep.subr.mxu0 0.0
        %238 = vmatpush1.msra.mxu0 0.0
        %239 = vmatprep.subr.mxu0 0.0
        %240 = vmatpush1.msra.mxu0 0.0
        %241 = vmatprep.subr.mxu0 0.0
        %242 = vmatpush1.msra.mxu0 0.0
        %243 = vmatprep.subr.mxu0 0.0
        %244 = vmatpush1.msra.mxu0 0.0
        %245 = vmatprep.subr.mxu0 0.0
        %246 = vmatpush1.msra.mxu0 0.0
        %247 = vmatprep.mubr.f32.mxu0 0.0
        %248 = vmatmul.mubr.f32.gmra.mrb[0].mxu0 %v178
        %v249 = vpop.f32.mrb[0].mxu0
        %v250 = vadd.f32 0.0, %v249
        %v251 = vpop.f32.mrb[0].mxu0
        %252 = vmatprep.mubr.f32.mxu0 0.0
        %253 = vmatmul.mubr.f32.gmra.mrb[0].mxu0 %v181
        %v254 = vpop.f32.mrb[0].mxu0
        %v255 = vadd.f32 0.0, %v254
        %v256 = vpop.f32.mrb[0].mxu0
        %257 = vdwg.mxu0
        %v259 = vsel %vm142, %v164, 0
        %v262 = vsel %vm142, %v165, 0
        %264 = vmatprep.subr.mxu0 0.0
        %265 = vmatpush1.msra.mxu0 %v166
        %266 = vmatprep.subr.mxu0 0.0
        %267 = vmatpush1.msra.mxu0 %v167
        %268 = vmatprep.subr.mxu0 0.0
        %269 = vmatpush1.msra.mxu0 %v168
        %270 = vmatprep.subr.mxu0 0.0
        %271 = vmatpush1.msra.mxu0 %v169
        %272 = vmatprep.subr.mxu0 0.0
        %273 = vmatpush1.msra.mxu0 0.0
        %274 = vmatprep.subr.mxu0 0.0
        %275 = vmatpush1.msra.mxu0 0.0
        %276 = vmatprep.subr.mxu0 0.0
        %277 = vmatpush1.msra.mxu0 0.0
        %278 = vmatprep.subr.mxu0 0.0
        %279 = vmatpush1.msra.mxu0 0.0
        %280 = vmatprep.subr.mxu0 0.0
        %281 = vmatpush1.msra.mxu0 0.0
        %282 = vmatprep.subr.mxu0 0.0
        %283 = vmatpush1.msra.mxu0 0.0
        %284 = vmatprep.subr.mxu0 0.0
        %285 = vmatpush1.msra.mxu0 0.0
        %286 = vmatprep.subr.mxu0 0.0
        %287 = vmatpush1.msra.mxu0 0.0
        %288 = vmatprep.subr.mxu0 0.0
        %289 = vmatpush1.msra.mxu0 0.0
        %290 = vmatprep.subr.mxu0 0.0
        %291 = vmatpush1.msra.mxu0 0.0
        %292 = vmatprep.subr.mxu0 0.0
        %293 = vmatpush1.msra.mxu0 0.0
        %294 = vmatprep.subr.mxu0 0.0
        %295 = vmatpush1.msra.mxu0 0.0
        %296 = vmatprep.subr.mxu0 0.0
        %297 = vmatpush1.msra.mxu0 0.0
        %298 = vmatprep.subr.mxu0 0.0
        %299 = vmatpush1.msra.mxu0 0.0
        %300 = vmatprep.subr.mxu0 0.0
        %301 = vmatpush1.msra.mxu0 0.0
        %302 = vmatprep.subr.mxu0 0.0
        %303 = vmatpush1.msra.mxu0 0.0
        %304 = vmatprep.subr.mxu0 0.0
        %305 = vmatpush1.msra.mxu0 0.0
        %306 = vmatprep.subr.mxu0 0.0
        %307 = vmatpush1.msra.mxu0 0.0
        %308 = vmatprep.subr.mxu0 0.0
        %309 = vmatpush1.msra.mxu0 0.0
        %310 = vmatprep.subr.mxu0 0.0
        %311 = vmatpush1.msra.mxu0 0.0
        %312 = vmatprep.subr.mxu0 0.0
        %313 = vmatpush1.msra.mxu0 0.0
        %314 = vmatprep.subr.mxu0 0.0
        %315 = vmatpush1.msra.mxu0 0.0
        %316 = vmatprep.subr.mxu0 0.0
        %317 = vmatpush1.msra.mxu0 0.0
        %318 = vmatprep.subr.mxu0 0.0
        %319 = vmatpush1.msra.mxu0 0.0
        %320 = vmatprep.subr.mxu0 0.0
        %321 = vmatpush1.msra.mxu0 0.0
        %322 = vmatprep.subr.mxu0 0.0
        %323 = vmatpush1.msra.mxu0 0.0
        %324 = vmatprep.subr.mxu0 0.0
        %325 = vmatpush1.msra.mxu0 0.0
        %326 = vmatprep.subr.mxu0 0.0
        %327 = vmatpush1.msra.mxu0 0.0
        %328 = vmatprep.mubr.f32.mxu0 0.0
        %329 = vmatmul.mubr.f32.gmra.mrb[0].mxu0 %v259
        %v330 = vpop.f32.mrb[0].mxu0
        %v331 = vadd.f32 %v250, %v330
        %v332 = vpop.f32.mrb[0].mxu0
        %333 = vmatprep.mubr.f32.mxu0 0.0
        %334 = vmatmul.mubr.f32.gmra.mrb[0].mxu0 %v262
        %v335 = vpop.f32.mrb[0].mxu0
        %v336 = vadd.f32 %v255, %v335
        %v337 = vpop.f32.mrb[0].mxu0
        %338 = vdwg.mxu0
        %v339 = vld [vmem:[#allocation2 + $0x2] sm:$0xff]
        %v340 = vld [vmem:[#allocation2 + $0xa] sm:$0xff]
        %s341 = scalar_lea.vmem %s1, 64
        %v342 = vld [vmem:[%s341] sm:$0xff]
        %v343 = vld [vmem:[%s341 + $0x8] sm:$0xff]
        %v344 = vld [vmem:[%s341 + $0x10] sm:$0xff]
        %v345 = vld [vmem:[%s341 + $0x18] sm:$0xff]
        %v347 = vsel %vm142, %v339, 0
        %v350 = vsel %vm142, %v340, 0
        %352 = vmatprep.subr.mxu0 0.0
        %353 = vmatpush1.msra.mxu0 %v342
        %354 = vmatprep.subr.mxu0 0.0
        %355 = vmatpush1.msra.mxu0 %v343
        %356 = vmatprep.subr.mxu0 0.0
        %357 = vmatpush1.msra.mxu0 %v344
        %358 = vmatprep.subr.mxu0 0.0
        %359 = vmatpush1.msra.mxu0 %v345
        %360 = vmatprep.subr.mxu0 0.0
        %361 = vmatpush1.msra.mxu0 0.0
        %362 = vmatprep.subr.mxu0 0.0
        %363 = vmatpush1.msra.mxu0 0.0
        %364 = vmatprep.subr.mxu0 0.0
        %365 = vmatpush1.msra.mxu0 0.0
        %366 = vmatprep.subr.mxu0 0.0
        %367 = vmatpush1.msra.mxu0 0.0
        %368 = vmatprep.subr.mxu0 0.0
        %369 = vmatpush1.msra.mxu0 0.0
        %370 = vmatprep.subr.mxu0 0.0
        %371 = vmatpush1.msra.mxu0 0.0
        %372 = vmatprep.subr.mxu0 0.0
        %373 = vmatpush1.msra.mxu0 0.0
        %374 = vmatprep.subr.mxu0 0.0
        %375 = vmatpush1.msra.mxu0 0.0
        %376 = vmatprep.subr.mxu0 0.0
        %377 = vmatpush1.msra.mxu0 0.0
        %378 = vmatprep.subr.mxu0 0.0
        %379 = vmatpush1.msra.mxu0 0.0
        %380 = vmatprep.subr.mxu0 0.0
        %381 = vmatpush1.msra.mxu0 0.0
        %382 = vmatprep.subr.mxu0 0.0
        %383 = vmatpush1.msra.mxu0 0.0
        %384 = vmatprep.subr.mxu0 0.0
        %385 = vmatpush1.msra.mxu0 0.0
        %386 = vmatprep.subr.mxu0 0.0
        %387 = vmatpush1.msra.mxu0 0.0
        %388 = vmatprep.subr.mxu0 0.0
        %389 = vmatpush1.msra.mxu0 0.0
        %390 = vmatprep.subr.mxu0 0.0
        %391 = vmatpush1.msra.mxu0 0.0
        %392 = vmatprep.subr.mxu0 0.0
        %393 = vmatpush1.msra.mxu0 0.0
        %394 = vmatprep.subr.mxu0 0.0
        %395 = vmatpush1.msra.mxu0 0.0
        %396 = vmatprep.subr.mxu0 0.0
        %397 = vmatpush1.msra.mxu0 0.0
        %398 = vmatprep.subr.mxu0 0.0
        %399 = vmatpush1.msra.mxu0 0.0
        %400 = vmatprep.subr.mxu0 0.0
        %401 = vmatpush1.msra.mxu0 0.0
        %402 = vmatprep.subr.mxu0 0.0
        %403 = vmatpush1.msra.mxu0 0.0
        %404 = vmatprep.subr.mxu0 0.0
        %405 = vmatpush1.msra.mxu0 0.0
        %406 = vmatprep.subr.mxu0 0.0
        %407 = vmatpush1.msra.mxu0 0.0
        %408 = vmatprep.subr.mxu0 0.0
        %409 = vmatpush1.msra.mxu0 0.0
        %410 = vmatprep.subr.mxu0 0.0
        %411 = vmatpush1.msra.mxu0 0.0
        %412 = vmatprep.subr.mxu0 0.0
        %413 = vmatpush1.msra.mxu0 0.0
        %414 = vmatprep.subr.mxu0 0.0
        %415 = vmatpush1.msra.mxu0 0.0
        %416 = vmatprep.mubr.f32.mxu0 0.0
        %417 = vmatmul.mubr.f32.gmra.mrb[0].mxu0 %v347
        %v418 = vpop.f32.mrb[0].mxu0
        %v419 = vadd.f32 0.0, %v418
        %v420 = vpop.f32.mrb[0].mxu0
        %421 = vmatprep.mubr.f32.mxu0 0.0
        %422 = vmatmul.mubr.f32.gmra.mrb[0].mxu0 %v350
        %v423 = vpop.f32.mrb[0].mxu0
        %v424 = vadd.f32 0.0, %v423
        %v425 = vpop.f32.mrb[0].mxu0
        %426 = vdwg.mxu0
        %v427 = vadd.f32 %v331, %v419
        %v428 = vadd.f32 %v336, %v424
        %v429 = vld [vmem:[#allocation2 + $0x3] sm:$0xff]
        %v430 = vld [vmem:[#allocation2 + $0xb] sm:$0xff]
        %s431 = scalar_lea.vmem %s1, 96
        %v432 = vld [vmem:[%s431] sm:$0xff]
        %v433 = vld [vmem:[%s431 + $0x8] sm:$0xff]
        %v434 = vld [vmem:[%s431 + $0x10] sm:$0xff]
        %v435 = vld [vmem:[%s431 + $0x18] sm:$0xff]
        %v437 = vsel %vm142, %v429, 0
        %v440 = vsel %vm142, %v430, 0
        %442 = vmatprep.subr.mxu0 0.0
        %443 = vmatpush1.msra.mxu0 %v432
        %444 = vmatprep.subr.mxu0 0.0
        %445 = vmatpush1.msra.mxu0 %v433
        %446 = vmatprep.subr.mxu0 0.0
        %447 = vmatpush1.msra.mxu0 %v434
        %448 = vmatprep.subr.mxu0 0.0
        %449 = vmatpush1.msra.mxu0 %v435
        %450 = vmatprep.subr.mxu0 0.0
        %451 = vmatpush1.msra.mxu0 0.0
        %452 = vmatprep.subr.mxu0 0.0
        %453 = vmatpush1.msra.mxu0 0.0
        %454 = vmatprep.subr.mxu0 0.0
        %455 = vmatpush1.msra.mxu0 0.0
        %456 = vmatprep.subr.mxu0 0.0
        %457 = vmatpush1.msra.mxu0 0.0
        %458 = vmatprep.subr.mxu0 0.0
        %459 = vmatpush1.msra.mxu0 0.0
        %460 = vmatprep.subr.mxu0 0.0
        %461 = vmatpush1.msra.mxu0 0.0
        %462 = vmatprep.subr.mxu0 0.0
        %463 = vmatpush1.msra.mxu0 0.0
        %464 = vmatprep.subr.mxu0 0.0
        %465 = vmatpush1.msra.mxu0 0.0
        %466 = vmatprep.subr.mxu0 0.0
        %467 = vmatpush1.msra.mxu0 0.0
        %468 = vmatprep.subr.mxu0 0.0
        %469 = vmatpush1.msra.mxu0 0.0
        %470 = vmatprep.subr.mxu0 0.0
        %471 = vmatpush1.msra.mxu0 0.0
        %472 = vmatprep.subr.mxu0 0.0
        %473 = vmatpush1.msra.mxu0 0.0
        %474 = vmatprep.subr.mxu0 0.0
        %475 = vmatpush1.msra.mxu0 0.0
        %476 = vmatprep.subr.mxu0 0.0
        %477 = vmatpush1.msra.mxu0 0.0
        %478 = vmatprep.subr.mxu0 0.0
        %479 = vmatpush1.msra.mxu0 0.0
        %480 = vmatprep.subr.mxu0 0.0
        %481 = vmatpush1.msra.mxu0 0.0
        %482 = vmatprep.subr.mxu0 0.0
        %483 = vmatpush1.msra.mxu0 0.0
        %484 = vmatprep.subr.mxu0 0.0
        %485 = vmatpush1.msra.mxu0 0.0
        %486 = vmatprep.subr.mxu0 0.0
        %487 = vmatpush1.msra.mxu0 0.0
        %488 = vmatprep.subr.mxu0 0.0
        %489 = vmatpush1.msra.mxu0 0.0
        %490 = vmatprep.subr.mxu0 0.0
        %491 = vmatpush1.msra.mxu0 0.0
        %492 = vmatprep.subr.mxu0 0.0
        %493 = vmatpush1.msra.mxu0 0.0
        %494 = vmatprep.subr.mxu0 0.0
        %495 = vmatpush1.msra.mxu0 0.0
        %496 = vmatprep.subr.mxu0 0.0
        %497 = vmatpush1.msra.mxu0 0.0
        %498 = vmatprep.subr.mxu0 0.0
        %499 = vmatpush1.msra.mxu0 0.0
        %500 = vmatprep.subr.mxu0 0.0
        %501 = vmatpush1.msra.mxu0 0.0
        %502 = vmatprep.subr.mxu0 0.0
        %503 = vmatpush1.msra.mxu0 0.0
        %504 = vmatprep.subr.mxu0 0.0
        %505 = vmatpush1.msra.mxu0 0.0
        %506 = vmatprep.mubr.f32.mxu0 0.0
        %507 = vmatmul.mubr.f32.gmra.mrb[0].mxu0 %v437
        %v508 = vpop.f32.mrb[0].mxu0
        %v509 = vadd.f32 0.0, %v508
        %v510 = vpop.f32.mrb[0].mxu0
        %511 = vmatprep.mubr.f32.mxu0 0.0
        %512 = vmatmul.mubr.f32.gmra.mrb[0].mxu0 %v440
        %v513 = vpop.f32.mrb[0].mxu0
        %v514 = vadd.f32 0.0, %v513
        %v515 = vpop.f32.mrb[0].mxu0
        %516 = vdwg.mxu0
        %v517 = vadd.f32 %v427, %v509
        %v518 = vadd.f32 %v428, %v514
        %v519 = vld [vmem:[#allocation2 + $0x4] sm:$0xff]
        %v520 = vld [vmem:[#allocation2 + $0xc] sm:$0xff]
        %s521 = scalar_lea.vmem %s1, 128
        %v522 = vld [vmem:[%s521] sm:$0xff]
        %v523 = vld [vmem:[%s521 + $0x8] sm:$0xff]
        %v524 = vld [vmem:[%s521 + $0x10] sm:$0xff]
        %v525 = vld [vmem:[%s521 + $0x18] sm:$0xff]
        %v527 = vsel %vm142, %v519, 0
        %v530 = vsel %vm142, %v520, 0
        %532 = vmatprep.subr.mxu0 0.0
        %533 = vmatpush1.msra.mxu0 %v522
        %534 = vmatprep.subr.mxu0 0.0
        %535 = vmatpush1.msra.mxu0 %v523
        %536 = vmatprep.subr.mxu0 0.0
        %537 = vmatpush1.msra.mxu0 %v524
        %538 = vmatprep.subr.mxu0 0.0
        %539 = vmatpush1.msra.mxu0 %v525
        %540 = vmatprep.subr.mxu0 0.0
        %541 = vmatpush1.msra.mxu0 0.0
        %542 = vmatprep.subr.mxu0 0.0
        %543 = vmatpush1.msra.mxu0 0.0
        %544 = vmatprep.subr.mxu0 0.0
        %545 = vmatpush1.msra.mxu0 0.0
        %546 = vmatprep.subr.mxu0 0.0
        %547 = vmatpush1.msra.mxu0 0.0
        %548 = vmatprep.subr.mxu0 0.0
        %549 = vmatpush1.msra.mxu0 0.0
        %550 = vmatprep.subr.mxu0 0.0
        %551 = vmatpush1.msra.mxu0 0.0
        %552 = vmatprep.subr.mxu0 0.0
        %553 = vmatpush1.msra.mxu0 0.0
        %554 = vmatprep.subr.mxu0 0.0
        %555 = vmatpush1.msra.mxu0 0.0
        %556 = vmatprep.subr.mxu0 0.0
        %557 = vmatpush1.msra.mxu0 0.0
        %558 = vmatprep.subr.mxu0 0.0
        %559 = vmatpush1.msra.mxu0 0.0
        %560 = vmatprep.subr.mxu0 0.0
        %561 = vmatpush1.msra.mxu0 0.0
        %562 = vmatprep.subr.mxu0 0.0
        %563 = vmatpush1.msra.mxu0 0.0
        %564 = vmatprep.subr.mxu0 0.0
        %565 = vmatpush1.msra.mxu0 0.0
        %566 = vmatprep.subr.mxu0 0.0
        %567 = vmatpush1.msra.mxu0 0.0
        %568 = vmatprep.subr.mxu0 0.0
        %569 = vmatpush1.msra.mxu0 0.0
        %570 = vmatprep.subr.mxu0 0.0
        %571 = vmatpush1.msra.mxu0 0.0
        %572 = vmatprep.subr.mxu0 0.0
        %573 = vmatpush1.msra.mxu0 0.0
        %574 = vmatprep.subr.mxu0 0.0
        %575 = vmatpush1.msra.mxu0 0.0
        %576 = vmatprep.subr.mxu0 0.0
        %577 = vmatpush1.msra.mxu0 0.0
        %578 = vmatprep.subr.mxu0 0.0
        %579 = vmatpush1.msra.mxu0 0.0
        %580 = vmatprep.subr.mxu0 0.0
        %581 = vmatpush1.msra.mxu0 0.0
        %582 = vmatprep.subr.mxu0 0.0
        %583 = vmatpush1.msra.mxu0 0.0
        %584 = vmatprep.subr.mxu0 0.0
        %585 = vmatpush1.msra.mxu0 0.0
        %586 = vmatprep.subr.mxu0 0.0
        %587 = vmatpush1.msra.mxu0 0.0
        %588 = vmatprep.subr.mxu0 0.0
        %589 = vmatpush1.msra.mxu0 0.0
        %590 = vmatprep.subr.mxu0 0.0
        %591 = vmatpush1.msra.mxu0 0.0
        %592 = vmatprep.subr.mxu0 0.0
        %593 = vmatpush1.msra.mxu0 0.0
        %594 = vmatprep.subr.mxu0 0.0
        %595 = vmatpush1.msra.mxu0 0.0
        %596 = vmatprep.mubr.f32.mxu0 0.0
        %597 = vmatmul.mubr.f32.gmra.mrb[0].mxu0 %v527
        %v598 = vpop.f32.mrb[0].mxu0
        %v599 = vadd.f32 0.0, %v598
        %v600 = vpop.f32.mrb[0].mxu0
        %601 = vmatprep.mubr.f32.mxu0 0.0
        %602 = vmatmul.mubr.f32.gmra.mrb[0].mxu0 %v530
        %v603 = vpop.f32.mrb[0].mxu0
        %v604 = vadd.f32 0.0, %v603
        %v605 = vpop.f32.mrb[0].mxu0
        %606 = vdwg.mxu0
        %v607 = vadd.f32 %v517, %v599
        %v608 = vadd.f32 %v518, %v604
        %v609 = vld [vmem:[#allocation2 + $0x5] sm:$0xff]
        %v610 = vld [vmem:[#allocation2 + $0xd] sm:$0xff]
        %s611 = scalar_lea.vmem %s1, 160
        %v612 = vld [vmem:[%s611] sm:$0xff]
        %v613 = vld [vmem:[%s611 + $0x8] sm:$0xff]
        %v614 = vld [vmem:[%s611 + $0x10] sm:$0xff]
        %v615 = vld [vmem:[%s611 + $0x18] sm:$0xff]
        %v617 = vsel %vm142, %v609, 0
        %v620 = vsel %vm142, %v610, 0
        %622 = vmatprep.subr.mxu0 0.0
        %623 = vmatpush1.msra.mxu0 %v612
        %624 = vmatprep.subr.mxu0 0.0
        %625 = vmatpush1.msra.mxu0 %v613
        %626 = vmatprep.subr.mxu0 0.0
        %627 = vmatpush1.msra.mxu0 %v614
        %628 = vmatprep.subr.mxu0 0.0
        %629 = vmatpush1.msra.mxu0 %v615
        %630 = vmatprep.subr.mxu0 0.0
        %631 = vmatpush1.msra.mxu0 0.0
        %632 = vmatprep.subr.mxu0 0.0
        %633 = vmatpush1.msra.mxu0 0.0
        %634 = vmatprep.subr.mxu0 0.0
        %635 = vmatpush1.msra.mxu0 0.0
        %636 = vmatprep.subr.mxu0 0.0
        %637 = vmatpush1.msra.mxu0 0.0
        %638 = vmatprep.subr.mxu0 0.0
        %639 = vmatpush1.msra.mxu0 0.0
        %640 = vmatprep.subr.mxu0 0.0
        %641 = vmatpush1.msra.mxu0 0.0
        %642 = vmatprep.subr.mxu0 0.0
        %643 = vmatpush1.msra.mxu0 0.0
        %644 = vmatprep.subr.mxu0 0.0
        %645 = vmatpush1.msra.mxu0 0.0
        %646 = vmatprep.subr.mxu0 0.0
        %647 = vmatpush1.msra.mxu0 0.0
        %648 = vmatprep.subr.mxu0 0.0
        %649 = vmatpush1.msra.mxu0 0.0
        %650 = vmatprep.subr.mxu0 0.0
        %651 = vmatpush1.msra.mxu0 0.0
        %652 = vmatprep.subr.mxu0 0.0
        %653 = vmatpush1.msra.mxu0 0.0
        %654 = vmatprep.subr.mxu0 0.0
        %655 = vmatpush1.msra.mxu0 0.0
        %656 = vmatprep.subr.mxu0 0.0
        %657 = vmatpush1.msra.mxu0 0.0
        %658 = vmatprep.subr.mxu0 0.0
        %659 = vmatpush1.msra.mxu0 0.0
        %660 = vmatprep.subr.mxu0 0.0
        %661 = vmatpush1.msra.mxu0 0.0
        %662 = vmatprep.subr.mxu0 0.0
        %663 = vmatpush1.msra.mxu0 0.0
        %664 = vmatprep.subr.mxu0 0.0
        %665 = vmatpush1.msra.mxu0 0.0
        %666 = vmatprep.subr.mxu0 0.0
        %667 = vmatpush1.msra.mxu0 0.0
        %668 = vmatprep.subr.mxu0 0.0
        %669 = vmatpush1.msra.mxu0 0.0
        %670 = vmatprep.subr.mxu0 0.0
        %671 = vmatpush1.msra.mxu0 0.0
        %672 = vmatprep.subr.mxu0 0.0
        %673 = vmatpush1.msra.mxu0 0.0
        %674 = vmatprep.subr.mxu0 0.0
        %675 = vmatpush1.msra.mxu0 0.0
        %676 = vmatprep.subr.mxu0 0.0
        %677 = vmatpush1.msra.mxu0 0.0
        %678 = vmatprep.subr.mxu0 0.0
        %679 = vmatpush1.msra.mxu0 0.0
        %680 = vmatprep.subr.mxu0 0.0
        %681 = vmatpush1.msra.mxu0 0.0
        %682 = vmatprep.subr.mxu0 0.0
        %683 = vmatpush1.msra.mxu0 0.0
        %684 = vmatprep.subr.mxu0 0.0
        %685 = vmatpush1.msra.mxu0 0.0
        %686 = vmatprep.mubr.f32.mxu0 0.0
        %687 = vmatmul.mubr.f32.gmra.mrb[0].mxu0 %v617
        %v688 = vpop.f32.mrb[0].mxu0
        %v689 = vadd.f32 0.0, %v688
        %v690 = vpop.f32.mrb[0].mxu0
        %691 = vmatprep.mubr.f32.mxu0 0.0
        %692 = vmatmul.mubr.f32.gmra.mrb[0].mxu0 %v620
        %v693 = vpop.f32.mrb[0].mxu0
        %v694 = vadd.f32 0.0, %v693
        %v695 = vpop.f32.mrb[0].mxu0
        %696 = vdwg.mxu0
        %v697 = vadd.f32 %v607, %v689
        %v698 = vadd.f32 %v608, %v694
        %v699 = vld [vmem:[#allocation2 + $0x6] sm:$0xff]
        %v700 = vld [vmem:[#allocation2 + $0xe] sm:$0xff]
        %s701 = scalar_lea.vmem %s1, 192
        %v702 = vld [vmem:[%s701] sm:$0xff]
        %v703 = vld [vmem:[%s701 + $0x8] sm:$0xff]
        %v704 = vld [vmem:[%s701 + $0x10] sm:$0xff]
        %v705 = vld [vmem:[%s701 + $0x18] sm:$0xff]
        %v707 = vsel %vm142, %v699, 0
        %v710 = vsel %vm142, %v700, 0
        %712 = vmatprep.subr.mxu0 0.0
        %713 = vmatpush1.msra.mxu0 %v702
        %714 = vmatprep.subr.mxu0 0.0
        %715 = vmatpush1.msra.mxu0 %v703
        %716 = vmatprep.subr.mxu0 0.0
        %717 = vmatpush1.msra.mxu0 %v704
        %718 = vmatprep.subr.mxu0 0.0
        %719 = vmatpush1.msra.mxu0 %v705
        %720 = vmatprep.subr.mxu0 0.0
        %721 = vmatpush1.msra.mxu0 0.0
        %722 = vmatprep.subr.mxu0 0.0
        %723 = vmatpush1.msra.mxu0 0.0
        %724 = vmatprep.subr.mxu0 0.0
        %725 = vmatpush1.msra.mxu0 0.0
        %726 = vmatprep.subr.mxu0 0.0
        %727 = vmatpush1.msra.mxu0 0.0
        %728 = vmatprep.subr.mxu0 0.0
        %729 = vmatpush1.msra.mxu0 0.0
        %730 = vmatprep.subr.mxu0 0.0
        %731 = vmatpush1.msra.mxu0 0.0
        %732 = vmatprep.subr.mxu0 0.0
        %733 = vmatpush1.msra.mxu0 0.0
        %734 = vmatprep.subr.mxu0 0.0
        %735 = vmatpush1.msra.mxu0 0.0
        %736 = vmatprep.subr.mxu0 0.0
        %737 = vmatpush1.msra.mxu0 0.0
        %738 = vmatprep.subr.mxu0 0.0
        %739 = vmatpush1.msra.mxu0 0.0
        %740 = vmatprep.subr.mxu0 0.0
        %741 = vmatpush1.msra.mxu0 0.0
        %742 = vmatprep.subr.mxu0 0.0
        %743 = vmatpush1.msra.mxu0 0.0
        %744 = vmatprep.subr.mxu0 0.0
        %745 = vmatpush1.msra.mxu0 0.0
        %746 = vmatprep.subr.mxu0 0.0
        %747 = vmatpush1.msra.mxu0 0.0
        %748 = vmatprep.subr.mxu0 0.0
        %749 = vmatpush1.msra.mxu0 0.0
        %750 = vmatprep.subr.mxu0 0.0
        %751 = vmatpush1.msra.mxu0 0.0
        %752 = vmatprep.subr.mxu0 0.0
        %753 = vmatpush1.msra.mxu0 0.0
        %754 = vmatprep.subr.mxu0 0.0
        %755 = vmatpush1.msra.mxu0 0.0
        %756 = vmatprep.subr.mxu0 0.0
        %757 = vmatpush1.msra.mxu0 0.0
        %758 = vmatprep.subr.mxu0 0.0
        %759 = vmatpush1.msra.mxu0 0.0
        %760 = vmatprep.subr.mxu0 0.0
        %761 = vmatpush1.msra.mxu0 0.0
        %762 = vmatprep.subr.mxu0 0.0
        %763 = vmatpush1.msra.mxu0 0.0
        %764 = vmatprep.subr.mxu0 0.0
        %765 = vmatpush1.msra.mxu0 0.0
        %766 = vmatprep.subr.mxu0 0.0
        %767 = vmatpush1.msra.mxu0 0.0
        %768 = vmatprep.subr.mxu0 0.0
        %769 = vmatpush1.msra.mxu0 0.0
        %770 = vmatprep.subr.mxu0 0.0
        %771 = vmatpush1.msra.mxu0 0.0
        %772 = vmatprep.subr.mxu0 0.0
        %773 = vmatpush1.msra.mxu0 0.0
        %774 = vmatprep.subr.mxu0 0.0
        %775 = vmatpush1.msra.mxu0 0.0
        %776 = vmatprep.mubr.f32.mxu0 0.0
        %777 = vmatmul.mubr.f32.gmra.mrb[0].mxu0 %v707
        %v778 = vpop.f32.mrb[0].mxu0
        %v779 = vadd.f32 0.0, %v778
        %v780 = vpop.f32.mrb[0].mxu0
        %781 = vmatprep.mubr.f32.mxu0 0.0
        %782 = vmatmul.mubr.f32.gmra.mrb[0].mxu0 %v710
        %v783 = vpop.f32.mrb[0].mxu0
        %v784 = vadd.f32 0.0, %v783
        %v785 = vpop.f32.mrb[0].mxu0
        %786 = vdwg.mxu0
        %v787 = vadd.f32 %v697, %v779
        %v788 = vadd.f32 %v698, %v784
        %v789 = vld [vmem:[#allocation2 + $0x7] sm:$0xff]
        %v790 = vld [vmem:[#allocation2 + $0xf] sm:$0xff]
        %s791 = scalar_lea.vmem %s1, 224
        %v792 = vld [vmem:[%s791] sm:$0xff]
        %v793 = vld [vmem:[%s791 + $0x8] sm:$0xff]
        %v794 = vld [vmem:[%s791 + $0x10] sm:$0xff]
        %v795 = vld [vmem:[%s791 + $0x18] sm:$0xff]
        %v797 = vsel %vm142, %v789, 0
        %v800 = vsel %vm142, %v790, 0
        %802 = vmatprep.subr.mxu0 0.0
        %803 = vmatpush1.msra.mxu0 %v792
        %804 = vmatprep.subr.mxu0 0.0
        %805 = vmatpush1.msra.mxu0 %v793
        %806 = vmatprep.subr.mxu0 0.0
        %807 = vmatpush1.msra.mxu0 %v794
        %808 = vmatprep.subr.mxu0 0.0
        %809 = vmatpush1.msra.mxu0 %v795
        %810 = vmatprep.subr.mxu0 0.0
        %811 = vmatpush1.msra.mxu0 0.0
        %812 = vmatprep.subr.mxu0 0.0
        %813 = vmatpush1.msra.mxu0 0.0
        %814 = vmatprep.subr.mxu0 0.0
        %815 = vmatpush1.msra.mxu0 0.0
        %816 = vmatprep.subr.mxu0 0.0
        %817 = vmatpush1.msra.mxu0 0.0
        %818 = vmatprep.subr.mxu0 0.0
        %819 = vmatpush1.msra.mxu0 0.0
        %820 = vmatprep.subr.mxu0 0.0
        %821 = vmatpush1.msra.mxu0 0.0
        %822 = vmatprep.subr.mxu0 0.0
        %823 = vmatpush1.msra.mxu0 0.0
        %824 = vmatprep.subr.mxu0 0.0
        %825 = vmatpush1.msra.mxu0 0.0
        %826 = vmatprep.subr.mxu0 0.0
        %827 = vmatpush1.msra.mxu0 0.0
        %828 = vmatprep.subr.mxu0 0.0
        %829 = vmatpush1.msra.mxu0 0.0
        %830 = vmatprep.subr.mxu0 0.0
        %831 = vmatpush1.msra.mxu0 0.0
        %832 = vmatprep.subr.mxu0 0.0
        %833 = vmatpush1.msra.mxu0 0.0
        %834 = vmatprep.subr.mxu0 0.0
        %835 = vmatpush1.msra.mxu0 0.0
        %836 = vmatprep.subr.mxu0 0.0
        %837 = vmatpush1.msra.mxu0 0.0
        %838 = vmatprep.subr.mxu0 0.0
        %839 = vmatpush1.msra.mxu0 0.0
        %840 = vmatprep.subr.mxu0 0.0
        %841 = vmatpush1.msra.mxu0 0.0
        %842 = vmatprep.subr.mxu0 0.0
        %843 = vmatpush1.msra.mxu0 0.0
        %844 = vmatprep.subr.mxu0 0.0
        %845 = vmatpush1.msra.mxu0 0.0
        %846 = vmatprep.subr.mxu0 0.0
        %847 = vmatpush1.msra.mxu0 0.0
        %848 = vmatprep.subr.mxu0 0.0
        %849 = vmatpush1.msra.mxu0 0.0
        %850 = vmatprep.subr.mxu0 0.0
        %851 = vmatpush1.msra.mxu0 0.0
        %852 = vmatprep.subr.mxu0 0.0
        %853 = vmatpush1.msra.mxu0 0.0
        %854 = vmatprep.subr.mxu0 0.0
        %855 = vmatpush1.msra.mxu0 0.0
        %856 = vmatprep.subr.mxu0 0.0
        %857 = vmatpush1.msra.mxu0 0.0
        %858 = vmatprep.subr.mxu0 0.0
        %859 = vmatpush1.msra.mxu0 0.0
        %860 = vmatprep.subr.mxu0 0.0
        %861 = vmatpush1.msra.mxu0 0.0
        %862 = vmatprep.subr.mxu0 0.0
        %863 = vmatpush1.msra.mxu0 0.0
        %864 = vmatprep.subr.mxu0 0.0
        %865 = vmatpush1.msra.mxu0 0.0
        %866 = vmatprep.mubr.f32.mxu0 0.0
        %867 = vmatmul.mubr.f32.gmra.mrb[0].mxu0 %v797
        %v868 = vpop.f32.mrb[0].mxu0
        %v869 = vadd.f32 0.0, %v868
        %v870 = vpop.f32.mrb[0].mxu0
        %871 = vmatprep.mubr.f32.mxu0 0.0
        %872 = vmatmul.mubr.f32.gmra.mrb[0].mxu0 %v800
        %v873 = vpop.f32.mrb[0].mxu0
        %v874 = vadd.f32 0.0, %v873
        %v875 = vpop.f32.mrb[0].mxu0
        %876 = vdwg.mxu0
        %v877 = vadd.f32 %v787, %v869
        %v878 = vadd.f32 %v788, %v874
        %v879 = vld [vmem:[#allocation2 + $0x8] sm:$0xff]
        %v880 = vld [vmem:[#allocation2 + $0x10] sm:$0xff]
        %s881 = scalar_lea.vmem %s1, 256
        %v882 = vld [vmem:[%s881] sm:$0xff]
        %v883 = vld [vmem:[%s881 + $0x8] sm:$0xff]
        %v884 = vld [vmem:[%s881 + $0x10] sm:$0xff]
        %v885 = vld [vmem:[%s881 + $0x18] sm:$0xff]
        %v887 = vsel %vm142, %v879, 0
        %v890 = vsel %vm142, %v880, 0
        %892 = vmatprep.subr.mxu0 0.0
        %893 = vmatpush1.msra.mxu0 %v882
        %894 = vmatprep.subr.mxu0 0.0
        %895 = vmatpush1.msra.mxu0 %v883
        %896 = vmatprep.subr.mxu0 0.0
        %897 = vmatpush1.msra.mxu0 %v884
        %898 = vmatprep.subr.mxu0 0.0
        %899 = vmatpush1.msra.mxu0 %v885
        %900 = vmatprep.subr.mxu0 0.0
        %901 = vmatpush1.msra.mxu0 0.0
        %902 = vmatprep.subr.mxu0 0.0
        %903 = vmatpush1.msra.mxu0 0.0
        %904 = vmatprep.subr.mxu0 0.0
        %905 = vmatpush1.msra.mxu0 0.0
        %906 = vmatprep.subr.mxu0 0.0
        %907 = vmatpush1.msra.mxu0 0.0
        %908 = vmatprep.subr.mxu0 0.0
        %909 = vmatpush1.msra.mxu0 0.0
        %910 = vmatprep.subr.mxu0 0.0
        %911 = vmatpush1.msra.mxu0 0.0
        %912 = vmatprep.subr.mxu0 0.0
        %913 = vmatpush1.msra.mxu0 0.0
        %914 = vmatprep.subr.mxu0 0.0
        %915 = vmatpush1.msra.mxu0 0.0
        %916 = vmatprep.subr.mxu0 0.0
        %917 = vmatpush1.msra.mxu0 0.0
        %918 = vmatprep.subr.mxu0 0.0
        %919 = vmatpush1.msra.mxu0 0.0
        %920 = vmatprep.subr.mxu0 0.0
        %921 = vmatpush1.msra.mxu0 0.0
        %922 = vmatprep.subr.mxu0 0.0
        %923 = vmatpush1.msra.mxu0 0.0
        %924 = vmatprep.subr.mxu0 0.0
        %925 = vmatpush1.msra.mxu0 0.0
        %926 = vmatprep.subr.mxu0 0.0
        %927 = vmatpush1.msra.mxu0 0.0
        %928 = vmatprep.subr.mxu0 0.0
        %929 = vmatpush1.msra.mxu0 0.0
        %930 = vmatprep.subr.mxu0 0.0
        %931 = vmatpush1.msra.mxu0 0.0
        %932 = vmatprep.subr.mxu0 0.0
        %933 = vmatpush1.msra.mxu0 0.0
        %934 = vmatprep.subr.mxu0 0.0
        %935 = vmatpush1.msra.mxu0 0.0
        %936 = vmatprep.subr.mxu0 0.0
        %937 = vmatpush1.msra.mxu0 0.0
        %938 = vmatprep.subr.mxu0 0.0
        %939 = vmatpush1.msra.mxu0 0.0
        %940 = vmatprep.subr.mxu0 0.0
        %941 = vmatpush1.msra.mxu0 0.0
        %942 = vmatprep.subr.mxu0 0.0
        %943 = vmatpush1.msra.mxu0 0.0
        %944 = vmatprep.subr.mxu0 0.0
        %945 = vmatpush1.msra.mxu0 0.0
        %946 = vmatprep.subr.mxu0 0.0
        %947 = vmatpush1.msra.mxu0 0.0
        %948 = vmatprep.subr.mxu0 0.0
        %949 = vmatpush1.msra.mxu0 0.0
        %950 = vmatprep.subr.mxu0 0.0
        %951 = vmatpush1.msra.mxu0 0.0
        %952 = vmatprep.subr.mxu0 0.0
        %953 = vmatpush1.msra.mxu0 0.0
        %954 = vmatprep.subr.mxu0 0.0
        %955 = vmatpush1.msra.mxu0 0.0
        %956 = vmatprep.mubr.f32.mxu0 0.0
        %957 = vmatmul.mubr.f32.gmra.mrb[0].mxu0 %v887
        %v958 = vpop.f32.mrb[0].mxu0
        %v959 = vadd.f32 0.0, %v958
        %v960 = vpop.f32.mrb[0].mxu0
        %961 = vmatprep.mubr.f32.mxu0 0.0
        %962 = vmatmul.mubr.f32.gmra.mrb[0].mxu0 %v890
        %v963 = vpop.f32.mrb[0].mxu0
        %v964 = vadd.f32 0.0, %v963
        %v965 = vpop.f32.mrb[0].mxu0
        %966 = vdwg.mxu0
        %v967 = vadd.f32 %v877, %v959
        %v968 = vadd.f32 %v878, %v964
        %v969 = vld [vmem:[#allocation2 + $0x9] sm:$0xff]
        %v970 = vld [vmem:[#allocation2 + $0x11] sm:$0xff]
        %s971 = scalar_lea.vmem %s1, 288
        %v972 = vld [vmem:[%s971] sm:$0xff]
        %v973 = vld [vmem:[%s971 + $0x8] sm:$0xff]
        %v974 = vld [vmem:[%s971 + $0x10] sm:$0xff]
        %v975 = vld [vmem:[%s971 + $0x18] sm:$0xff]
        %v977 = vsel %vm142, %v969, 0
        %v980 = vsel %vm142, %v970, 0
        %982 = vmatprep.subr.mxu0 0.0
        %983 = vmatpush1.msra.mxu0 %v972
        %984 = vmatprep.subr.mxu0 0.0
        %985 = vmatpush1.msra.mxu0 %v973
        %986 = vmatprep.subr.mxu0 0.0
        %987 = vmatpush1.msra.mxu0 %v974
        %988 = vmatprep.subr.mxu0 0.0
        %989 = vmatpush1.msra.mxu0 %v975
        %990 = vmatprep.subr.mxu0 0.0
        %991 = vmatpush1.msra.mxu0 0.0
        %992 = vmatprep.subr.mxu0 0.0
        %993 = vmatpush1.msra.mxu0 0.0
        %994 = vmatprep.subr.mxu0 0.0
        %995 = vmatpush1.msra.mxu0 0.0
        %996 = vmatprep.subr.mxu0 0.0
        %997 = vmatpush1.msra.mxu0 0.0
        %998 = vmatprep.subr.mxu0 0.0
        %999 = vmatpush1.msra.mxu0 0.0
        %1000 = vmatprep.subr.mxu0 0.0
        %1001 = vmatpush1.msra.mxu0 0.0
        %1002 = vmatprep.subr.mxu0 0.0
        %1003 = vmatpush1.msra.mxu0 0.0
        %1004 = vmatprep.subr.mxu0 0.0
        %1005 = vmatpush1.msra.mxu0 0.0
        %1006 = vmatprep.subr.mxu0 0.0
        %1007 = vmatpush1.msra.mxu0 0.0
        %1008 = vmatprep.subr.mxu0 0.0
        %1009 = vmatpush1.msra.mxu0 0.0
        %1010 = vmatprep.subr.mxu0 0.0
        %1011 = vmatpush1.msra.mxu0 0.0
        %1012 = vmatprep.subr.mxu0 0.0
        %1013 = vmatpush1.msra.mxu0 0.0
        %1014 = vmatprep.subr.mxu0 0.0
        %1015 = vmatpush1.msra.mxu0 0.0
        %1016 = vmatprep.subr.mxu0 0.0
        %1017 = vmatpush1.msra.mxu0 0.0
        %1018 = vmatprep.subr.mxu0 0.0
        %1019 = vmatpush1.msra.mxu0 0.0
        %1020 = vmatprep.subr.mxu0 0.0
        %1021 = vmatpush1.msra.mxu0 0.0
        %1022 = vmatprep.subr.mxu0 0.0
        %1023 = vmatpush1.msra.mxu0 0.0
        %1024 = vmatprep.subr.mxu0 0.0
        %1025 = vmatpush1.msra.mxu0 0.0
        %1026 = vmatprep.subr.mxu0 0.0
        %1027 = vmatpush1.msra.mxu0 0.0
        %1028 = vmatprep.subr.mxu0 0.0
        %1029 = vmatpush1.msra.mxu0 0.0
        %1030 = vmatprep.subr.mxu0 0.0
        %1031 = vmatpush1.msra.mxu0 0.0
        %1032 = vmatprep.subr.mxu0 0.0
        %1033 = vmatpush1.msra.mxu0 0.0
        %1034 = vmatprep.subr.mxu0 0.0
        %1035 = vmatpush1.msra.mxu0 0.0
        %1036 = vmatprep.subr.mxu0 0.0
        %1037 = vmatpush1.msra.mxu0 0.0
        %1038 = vmatprep.subr.mxu0 0.0
        %1039 = vmatpush1.msra.mxu0 0.0
        %1040 = vmatprep.subr.mxu0 0.0
        %1041 = vmatpush1.msra.mxu0 0.0
        %1042 = vmatprep.subr.mxu0 0.0
        %1043 = vmatpush1.msra.mxu0 0.0
        %1044 = vmatprep.subr.mxu0 0.0
        %1045 = vmatpush1.msra.mxu0 0.0
        %1046 = vmatprep.mubr.f32.mxu0 0.0
        %1047 = vmatmul.mubr.f32.gmra.mrb[0].mxu0 %v977
        %v1048 = vpop.f32.mrb[0].mxu0
        %v1049 = vadd.f32 0.0, %v1048
        %v1050 = vpop.f32.mrb[0].mxu0
        %1051 = vmatprep.mubr.f32.mxu0 0.0
        %1052 = vmatmul.mubr.f32.gmra.mrb[0].mxu0 %v980
        %v1053 = vpop.f32.mrb[0].mxu0
        %v1054 = vadd.f32 0.0, %v1053
        %v1055 = vpop.f32.mrb[0].mxu0
        %1056 = vdwg.mxu0
        %v1057 = vadd.f32 %v967, %v1049
        %v1058 = vadd.f32 %v968, %v1054
        %v1059 = vld [vmem:[#allocation2 + $0xa] sm:$0xff]
        %v1060 = vld [vmem:[#allocation2 + $0x12] sm:$0xff]
        %s1061 = scalar_lea.vmem %s1, 320
        %v1062 = vld [vmem:[%s1061] sm:$0xff]
        %v1063 = vld [vmem:[%s1061 + $0x8] sm:$0xff]
        %v1064 = vld [vmem:[%s1061 + $0x10] sm:$0xff]
        %v1065 = vld [vmem:[%s1061 + $0x18] sm:$0xff]
        %v1067 = vsel %vm142, %v1059, 0
        %v1070 = vsel %vm142, %v1060, 0
        %1072 = vmatprep.subr.mxu0 0.0
        %1073 = vmatpush1.msra.mxu0 %v1062
        %1074 = vmatprep.subr.mxu0 0.0
        %1075 = vmatpush1.msra.mxu0 %v1063
        %1076 = vmatprep.subr.mxu0 0.0
        %1077 = vmatpush1.msra.mxu0 %v1064
        %1078 = vmatprep.subr.mxu0 0.0
        %1079 = vmatpush1.msra.mxu0 %v1065
        %1080 = vmatprep.subr.mxu0 0.0
        %1081 = vmatpush1.msra.mxu0 0.0
        %1082 = vmatprep.subr.mxu0 0.0
        %1083 = vmatpush1.msra.mxu0 0.0
        %1084 = vmatprep.subr.mxu0 0.0
        %1085 = vmatpush1.msra.mxu0 0.0
        %1086 = vmatprep.subr.mxu0 0.0
        %1087 = vmatpush1.msra.mxu0 0.0
        %1088 = vmatprep.subr.mxu0 0.0
        %1089 = vmatpush1.msra.mxu0 0.0
        %1090 = vmatprep.subr.mxu0 0.0
        %1091 = vmatpush1.msra.mxu0 0.0
        %1092 = vmatprep.subr.mxu0 0.0
        %1093 = vmatpush1.msra.mxu0 0.0
        %1094 = vmatprep.subr.mxu0 0.0
        %1095 = vmatpush1.msra.mxu0 0.0
        %1096 = vmatprep.subr.mxu0 0.0
        %1097 = vmatpush1.msra.mxu0 0.0
        %1098 = vmatprep.subr.mxu0 0.0
        %1099 = vmatpush1.msra.mxu0 0.0
        %1100 = vmatprep.subr.mxu0 0.0
        %1101 = vmatpush1.msra.mxu0 0.0
        %1102 = vmatprep.subr.mxu0 0.0
        %1103 = vmatpush1.msra.mxu0 0.0
        %1104 = vmatprep.subr.mxu0 0.0
        %1105 = vmatpush1.msra.mxu0 0.0
        %1106 = vmatprep.subr.mxu0 0.0
        %1107 = vmatpush1.msra.mxu0 0.0
        %1108 = vmatprep.subr.mxu0 0.0
        %1109 = vmatpush1.msra.mxu0 0.0
        %1110 = vmatprep.subr.mxu0 0.0
        %1111 = vmatpush1.msra.mxu0 0.0
        %1112 = vmatprep.subr.mxu0 0.0
        %1113 = vmatpush1.msra.mxu0 0.0
        %1114 = vmatprep.subr.mxu0 0.0
        %1115 = vmatpush1.msra.mxu0 0.0
        %1116 = vmatprep.subr.mxu0 0.0
        %1117 = vmatpush1.msra.mxu0 0.0
        %1118 = vmatprep.subr.mxu0 0.0
        %1119 = vmatpush1.msra.mxu0 0.0
        %1120 = vmatprep.subr.mxu0 0.0
        %1121 = vmatpush1.msra.mxu0 0.0
        %1122 = vmatprep.subr.mxu0 0.0
        %1123 = vmatpush1.msra.mxu0 0.0
        %1124 = vmatprep.subr.mxu0 0.0
        %1125 = vmatpush1.msra.mxu0 0.0
        %1126 = vmatprep.subr.mxu0 0.0
        %1127 = vmatpush1.msra.mxu0 0.0
        %1128 = vmatprep.subr.mxu0 0.0
        %1129 = vmatpush1.msra.mxu0 0.0
        %1130 = vmatprep.subr.mxu0 0.0
        %1131 = vmatpush1.msra.mxu0 0.0
        %1132 = vmatprep.subr.mxu0 0.0
        %1133 = vmatpush1.msra.mxu0 0.0
        %1134 = vmatprep.subr.mxu0 0.0
        %1135 = vmatpush1.msra.mxu0 0.0
        %1136 = vmatprep.mubr.f32.mxu0 0.0
        %1137 = vmatmul.mubr.f32.gmra.mrb[0].mxu0 %v1067
        %v1138 = vpop.f32.mrb[0].mxu0
        %v1139 = vadd.f32 0.0, %v1138
        %v1140 = vpop.f32.mrb[0].mxu0
        %1141 = vmatprep.mubr.f32.mxu0 0.0
        %1142 = vmatmul.mubr.f32.gmra.mrb[0].mxu0 %v1070
        %v1143 = vpop.f32.mrb[0].mxu0
        %v1144 = vadd.f32 0.0, %v1143
        %v1145 = vpop.f32.mrb[0].mxu0
        %1146 = vdwg.mxu0
        %v1147 = vadd.f32 %v1057, %v1139
        %v1148 = vadd.f32 %v1058, %v1144
        %v1149 = vld [vmem:[#allocation2 + $0xb] sm:$0xff]
        %v1150 = vld [vmem:[#allocation2 + $0x13] sm:$0xff]
        %s1151 = scalar_lea.vmem %s1, 352
        %v1152 = vld [vmem:[%s1151] sm:$0xff]
        %v1153 = vld [vmem:[%s1151 + $0x8] sm:$0xff]
        %v1154 = vld [vmem:[%s1151 + $0x10] sm:$0xff]
        %v1155 = vld [vmem:[%s1151 + $0x18] sm:$0xff]
        %v1157 = vsel %vm142, %v1149, 0
        %v1160 = vsel %vm142, %v1150, 0
        %1162 = vmatprep.subr.mxu0 0.0
        %1163 = vmatpush1.msra.mxu0 %v1152
        %1164 = vmatprep.subr.mxu0 0.0
        %1165 = vmatpush1.msra.mxu0 %v1153
        %1166 = vmatprep.subr.mxu0 0.0
        %1167 = vmatpush1.msra.mxu0 %v1154
        %1168 = vmatprep.subr.mxu0 0.0
        %1169 = vmatpush1.msra.mxu0 %v1155
        %1170 = vmatprep.subr.mxu0 0.0
        %1171 = vmatpush1.msra.mxu0 0.0
        %1172 = vmatprep.subr.mxu0 0.0
        %1173 = vmatpush1.msra.mxu0 0.0
        %1174 = vmatprep.subr.mxu0 0.0
        %1175 = vmatpush1.msra.mxu0 0.0
        %1176 = vmatprep.subr.mxu0 0.0
        %1177 = vmatpush1.msra.mxu0 0.0
        %1178 = vmatprep.subr.mxu0 0.0
        %1179 = vmatpush1.msra.mxu0 0.0
        %1180 = vmatprep.subr.mxu0 0.0
        %1181 = vmatpush1.msra.mxu0 0.0
        %1182 = vmatprep.subr.mxu0 0.0
        %1183 = vmatpush1.msra.mxu0 0.0
        %1184 = vmatprep.subr.mxu0 0.0
        %1185 = vmatpush1.msra.mxu0 0.0
        %1186 = vmatprep.subr.mxu0 0.0
        %1187 = vmatpush1.msra.mxu0 0.0
        %1188 = vmatprep.subr.mxu0 0.0
        %1189 = vmatpush1.msra.mxu0 0.0
        %1190 = vmatprep.subr.mxu0 0.0
        %1191 = vmatpush1.msra.mxu0 0.0
        %1192 = vmatprep.subr.mxu0 0.0
        %1193 = vmatpush1.msra.mxu0 0.0
        %1194 = vmatprep.subr.mxu0 0.0
        %1195 = vmatpush1.msra.mxu0 0.0
        %1196 = vmatprep.subr.mxu0 0.0
        %1197 = vmatpush1.msra.mxu0 0.0
        %1198 = vmatprep.subr.mxu0 0.0
        %1199 = vmatpush1.msra.mxu0 0.0
        %1200 = vmatprep.subr.mxu0 0.0
        %1201 = vmatpush1.msra.mxu0 0.0
        %1202 = vmatprep.subr.mxu0 0.0
        %1203 = vmatpush1.msra.mxu0 0.0
        %1204 = vmatprep.subr.mxu0 0.0
        %1205 = vmatpush1.msra.mxu0 0.0
        %1206 = vmatprep.subr.mxu0 0.0
        %1207 = vmatpush1.msra.mxu0 0.0
        %1208 = vmatprep.subr.mxu0 0.0
        %1209 = vmatpush1.msra.mxu0 0.0
        %1210 = vmatprep.subr.mxu0 0.0
        %1211 = vmatpush1.msra.mxu0 0.0
        %1212 = vmatprep.subr.mxu0 0.0
        %1213 = vmatpush1.msra.mxu0 0.0
        %1214 = vmatprep.subr.mxu0 0.0
        %1215 = vmatpush1.msra.mxu0 0.0
        %1216 = vmatprep.subr.mxu0 0.0
        %1217 = vmatpush1.msra.mxu0 0.0
        %1218 = vmatprep.subr.mxu0 0.0
        %1219 = vmatpush1.msra.mxu0 0.0
        %1220 = vmatprep.subr.mxu0 0.0
        %1221 = vmatpush1.msra.mxu0 0.0
        %1222 = vmatprep.subr.mxu0 0.0
        %1223 = vmatpush1.msra.mxu0 0.0
        %1224 = vmatprep.subr.mxu0 0.0
        %1225 = vmatpush1.msra.mxu0 0.0
        %1226 = vmatprep.mubr.f32.mxu0 0.0
        %1227 = vmatmul.mubr.f32.gmra.mrb[0].mxu0 %v1157
        %v1228 = vpop.f32.mrb[0].mxu0
        %v1229 = vadd.f32 0.0, %v1228
        %v1230 = vpop.f32.mrb[0].mxu0
        %1231 = vmatprep.mubr.f32.mxu0 0.0
        %1232 = vmatmul.mubr.f32.gmra.mrb[0].mxu0 %v1160
        %v1233 = vpop.f32.mrb[0].mxu0
        %v1234 = vadd.f32 0.0, %v1233
        %v1235 = vpop.f32.mrb[0].mxu0
        %1236 = vdwg.mxu0
        %v1237 = vadd.f32 %v1147, %v1229
        %v1238 = vadd.f32 %v1148, %v1234
        %v1239 = vld [vmem:[#allocation2 + $0xc] sm:$0xff]
        %v1240 = vld [vmem:[#allocation2 + $0x14] sm:$0xff]
        %s1241 = scalar_lea.vmem %s1, 384
        %v1242 = vld [vmem:[%s1241] sm:$0xff]
        %v1243 = vld [vmem:[%s1241 + $0x8] sm:$0xff]
        %v1244 = vld [vmem:[%s1241 + $0x10] sm:$0xff]
        %v1245 = vld [vmem:[%s1241 + $0x18] sm:$0xff]
        %v1247 = vsel %vm142, %v1239, 0
        %v1250 = vsel %vm142, %v1240, 0
        %1252 = vmatprep.subr.mxu0 0.0
        %1253 = vmatpush1.msra.mxu0 %v1242
        %1254 = vmatprep.subr.mxu0 0.0
        %1255 = vmatpush1.msra.mxu0 %v1243
        %1256 = vmatprep.subr.mxu0 0.0
        %1257 = vmatpush1.msra.mxu0 %v1244
        %1258 = vmatprep.subr.mxu0 0.0
        %1259 = vmatpush1.msra.mxu0 %v1245
        %1260 = vmatprep.subr.mxu0 0.0
        %1261 = vmatpush1.msra.mxu0 0.0
        %1262 = vmatprep.subr.mxu0 0.0
        %1263 = vmatpush1.msra.mxu0 0.0
        %1264 = vmatprep.subr.mxu0 0.0
        %1265 = vmatpush1.msra.mxu0 0.0
        %1266 = vmatprep.subr.mxu0 0.0
        %1267 = vmatpush1.msra.mxu0 0.0
        %1268 = vmatprep.subr.mxu0 0.0
        %1269 = vmatpush1.msra.mxu0 0.0
        %1270 = vmatprep.subr.mxu0 0.0
        %1271 = vmatpush1.msra.mxu0 0.0
        %1272 = vmatprep.subr.mxu0 0.0
        %1273 = vmatpush1.msra.mxu0 0.0
        %1274 = vmatprep.subr.mxu0 0.0
        %1275 = vmatpush1.msra.mxu0 0.0
        %1276 = vmatprep.subr.mxu0 0.0
        %1277 = vmatpush1.msra.mxu0 0.0
        %1278 = vmatprep.subr.mxu0 0.0
        %1279 = vmatpush1.msra.mxu0 0.0
        %1280 = vmatprep.subr.mxu0 0.0
        %1281 = vmatpush1.msra.mxu0 0.0
        %1282 = vmatprep.subr.mxu0 0.0
        %1283 = vmatpush1.msra.mxu0 0.0
        %1284 = vmatprep.subr.mxu0 0.0
        %1285 = vmatpush1.msra.mxu0 0.0
        %1286 = vmatprep.subr.mxu0 0.0
        %1287 = vmatpush1.msra.mxu0 0.0
        %1288 = vmatprep.subr.mxu0 0.0
        %1289 = vmatpush1.msra.mxu0 0.0
        %1290 = vmatprep.subr.mxu0 0.0
        %1291 = vmatpush1.msra.mxu0 0.0
        %1292 = vmatprep.subr.mxu0 0.0
        %1293 = vmatpush1.msra.mxu0 0.0
        %1294 = vmatprep.subr.mxu0 0.0
        %1295 = vmatpush1.msra.mxu0 0.0
        %1296 = vmatprep.subr.mxu0 0.0
        %1297 = vmatpush1.msra.mxu0 0.0
        %1298 = vmatprep.subr.mxu0 0.0
        %1299 = vmatpush1.msra.mxu0 0.0
        %1300 = vmatprep.subr.mxu0 0.0
        %1301 = vmatpush1.msra.mxu0 0.0
        %1302 = vmatprep.subr.mxu0 0.0
        %1303 = vmatpush1.msra.mxu0 0.0
        %1304 = vmatprep.subr.mxu0 0.0
        %1305 = vmatpush1.msra.mxu0 0.0
        %1306 = vmatprep.subr.mxu0 0.0
        %1307 = vmatpush1.msra.mxu0 0.0
        %1308 = vmatprep.subr.mxu0 0.0
        %1309 = vmatpush1.msra.mxu0 0.0
        %1310 = vmatprep.subr.mxu0 0.0
        %1311 = vmatpush1.msra.mxu0 0.0
        %1312 = vmatprep.subr.mxu0 0.0
        %1313 = vmatpush1.msra.mxu0 0.0
        %1314 = vmatprep.subr.mxu0 0.0
        %1315 = vmatpush1.msra.mxu0 0.0
        %1316 = vmatprep.mubr.f32.mxu0 0.0
        %1317 = vmatmul.mubr.f32.gmra.mrb[0].mxu0 %v1247
        %v1318 = vpop.f32.mrb[0].mxu0
        %v1319 = vadd.f32 0.0, %v1318
        %v1320 = vpop.f32.mrb[0].mxu0
        %1321 = vmatprep.mubr.f32.mxu0 0.0
        %1322 = vmatmul.mubr.f32.gmra.mrb[0].mxu0 %v1250
        %v1323 = vpop.f32.mrb[0].mxu0
        %v1324 = vadd.f32 0.0, %v1323
        %v1325 = vpop.f32.mrb[0].mxu0
        %1326 = vdwg.mxu0
        %v1327 = vadd.f32 %v1237, %v1319
        %v1328 = vadd.f32 %v1238, %v1324
        %v1329 = vld [vmem:[#allocation2 + $0xd] sm:$0xff]
        %v1330 = vld [vmem:[#allocation2 + $0x15] sm:$0xff]
        %s1331 = scalar_lea.vmem %s1, 416
        %v1332 = vld [vmem:[%s1331] sm:$0xff]
        %v1333 = vld [vmem:[%s1331 + $0x8] sm:$0xff]
        %v1334 = vld [vmem:[%s1331 + $0x10] sm:$0xff]
        %v1335 = vld [vmem:[%s1331 + $0x18] sm:$0xff]
        %v1337 = vsel %vm142, %v1329, 0
        %v1340 = vsel %vm142, %v1330, 0
        %1342 = vmatprep.subr.mxu0 0.0
        %1343 = vmatpush1.msra.mxu0 %v1332
        %1344 = vmatprep.subr.mxu0 0.0
        %1345 = vmatpush1.msra.mxu0 %v1333
        %1346 = vmatprep.subr.mxu0 0.0
        %1347 = vmatpush1.msra.mxu0 %v1334
        %1348 = vmatprep.subr.mxu0 0.0
        %1349 = vmatpush1.msra.mxu0 %v1335
        %1350 = vmatprep.subr.mxu0 0.0
        %1351 = vmatpush1.msra.mxu0 0.0
        %1352 = vmatprep.subr.mxu0 0.0
        %1353 = vmatpush1.msra.mxu0 0.0
        %1354 = vmatprep.subr.mxu0 0.0
        %1355 = vmatpush1.msra.mxu0 0.0
        %1356 = vmatprep.subr.mxu0 0.0
        %1357 = vmatpush1.msra.mxu0 0.0
        %1358 = vmatprep.subr.mxu0 0.0
        %1359 = vmatpush1.msra.mxu0 0.0
        %1360 = vmatprep.subr.mxu0 0.0
        %1361 = vmatpush1.msra.mxu0 0.0
        %1362 = vmatprep.subr.mxu0 0.0
        %1363 = vmatpush1.msra.mxu0 0.0
        %1364 = vmatprep.subr.mxu0 0.0
        %1365 = vmatpush1.msra.mxu0 0.0
        %1366 = vmatprep.subr.mxu0 0.0
        %1367 = vmatpush1.msra.mxu0 0.0
        %1368 = vmatprep.subr.mxu0 0.0
        %1369 = vmatpush1.msra.mxu0 0.0
        %1370 = vmatprep.subr.mxu0 0.0
        %1371 = vmatpush1.msra.mxu0 0.0
        %1372 = vmatprep.subr.mxu0 0.0
        %1373 = vmatpush1.msra.mxu0 0.0
        %1374 = vmatprep.subr.mxu0 0.0
        %1375 = vmatpush1.msra.mxu0 0.0
        %1376 = vmatprep.subr.mxu0 0.0
        %1377 = vmatpush1.msra.mxu0 0.0
        %1378 = vmatprep.subr.mxu0 0.0
        %1379 = vmatpush1.msra.mxu0 0.0
        %1380 = vmatprep.subr.mxu0 0.0
        %1381 = vmatpush1.msra.mxu0 0.0
        %1382 = vmatprep.subr.mxu0 0.0
        %1383 = vmatpush1.msra.mxu0 0.0
        %1384 = vmatprep.subr.mxu0 0.0
        %1385 = vmatpush1.msra.mxu0 0.0
        %1386 = vmatprep.subr.mxu0 0.0
        %1387 = vmatpush1.msra.mxu0 0.0
        %1388 = vmatprep.subr.mxu0 0.0
        %1389 = vmatpush1.msra.mxu0 0.0
        %1390 = vmatprep.subr.mxu0 0.0
        %1391 = vmatpush1.msra.mxu0 0.0
        %1392 = vmatprep.subr.mxu0 0.0
        %1393 = vmatpush1.msra.mxu0 0.0
        %1394 = vmatprep.subr.mxu0 0.0
        %1395 = vmatpush1.msra.mxu0 0.0
        %1396 = vmatprep.subr.mxu0 0.0
        %1397 = vmatpush1.msra.mxu0 0.0
        %1398 = vmatprep.subr.mxu0 0.0
        %1399 = vmatpush1.msra.mxu0 0.0
        %1400 = vmatprep.subr.mxu0 0.0
        %1401 = vmatpush1.msra.mxu0 0.0
        %1402 = vmatprep.subr.mxu0 0.0
        %1403 = vmatpush1.msra.mxu0 0.0
        %1404 = vmatprep.subr.mxu0 0.0
        %1405 = vmatpush1.msra.mxu0 0.0
        %1406 = vmatprep.mubr.f32.mxu0 0.0
        %1407 = vmatmul.mubr.f32.gmra.mrb[0].mxu0 %v1337
        %v1408 = vpop.f32.mrb[0].mxu0
        %v1409 = vadd.f32 0.0, %v1408
        %v1410 = vpop.f32.mrb[0].mxu0
        %1411 = vmatprep.mubr.f32.mxu0 0.0
        %1412 = vmatmul.mubr.f32.gmra.mrb[0].mxu0 %v1340
        %v1413 = vpop.f32.mrb[0].mxu0
        %v1414 = vadd.f32 0.0, %v1413
        %v1415 = vpop.f32.mrb[0].mxu0
        %1416 = vdwg.mxu0
        %v1417 = vadd.f32 %v1327, %v1409
        %v1418 = vadd.f32 %v1328, %v1414
        %v1419 = vld [vmem:[#allocation2 + $0xe] sm:$0xff]
        %v1420 = vld [vmem:[#allocation2 + $0x16] sm:$0xff]
        %s1421 = scalar_lea.vmem %s1, 448
        %v1422 = vld [vmem:[%s1421] sm:$0xff]
        %v1423 = vld [vmem:[%s1421 + $0x8] sm:$0xff]
        %v1424 = vld [vmem:[%s1421 + $0x10] sm:$0xff]
        %v1425 = vld [vmem:[%s1421 + $0x18] sm:$0xff]
        %v1427 = vsel %vm142, %v1419, 0
        %v1430 = vsel %vm142, %v1420, 0
        %1432 = vmatprep.subr.mxu0 0.0
        %1433 = vmatpush1.msra.mxu0 %v1422
        %1434 = vmatprep.subr.mxu0 0.0
        %1435 = vmatpush1.msra.mxu0 %v1423
        %1436 = vmatprep.subr.mxu0 0.0
        %1437 = vmatpush1.msra.mxu0 %v1424
        %1438 = vmatprep.subr.mxu0 0.0
        %1439 = vmatpush1.msra.mxu0 %v1425
        %1440 = vmatprep.subr.mxu0 0.0
        %1441 = vmatpush1.msra.mxu0 0.0
        %1442 = vmatprep.subr.mxu0 0.0
        %1443 = vmatpush1.msra.mxu0 0.0
        %1444 = vmatprep.subr.mxu0 0.0
        %1445 = vmatpush1.msra.mxu0 0.0
        %1446 = vmatprep.subr.mxu0 0.0
        %1447 = vmatpush1.msra.mxu0 0.0
        %1448 = vmatprep.subr.mxu0 0.0
        %1449 = vmatpush1.msra.mxu0 0.0
        %1450 = vmatprep.subr.mxu0 0.0
        %1451 = vmatpush1.msra.mxu0 0.0
        %1452 = vmatprep.subr.mxu0 0.0
        %1453 = vmatpush1.msra.mxu0 0.0
        %1454 = vmatprep.subr.mxu0 0.0
        %1455 = vmatpush1.msra.mxu0 0.0
        %1456 = vmatprep.subr.mxu0 0.0
        %1457 = vmatpush1.msra.mxu0 0.0
        %1458 = vmatprep.subr.mxu0 0.0
        %1459 = vmatpush1.msra.mxu0 0.0
        %1460 = vmatprep.subr.mxu0 0.0
        %1461 = vmatpush1.msra.mxu0 0.0
        %1462 = vmatprep.subr.mxu0 0.0
        %1463 = vmatpush1.msra.mxu0 0.0
        %1464 = vmatprep.subr.mxu0 0.0
        %1465 = vmatpush1.msra.mxu0 0.0
        %1466 = vmatprep.subr.mxu0 0.0
        %1467 = vmatpush1.msra.mxu0 0.0
        %1468 = vmatprep.subr.mxu0 0.0
        %1469 = vmatpush1.msra.mxu0 0.0
        %1470 = vmatprep.subr.mxu0 0.0
        %1471 = vmatpush1.msra.mxu0 0.0
        %1472 = vmatprep.subr.mxu0 0.0
        %1473 = vmatpush1.msra.mxu0 0.0
        %1474 = vmatprep.subr.mxu0 0.0
        %1475 = vmatpush1.msra.mxu0 0.0
        %1476 = vmatprep.subr.mxu0 0.0
        %1477 = vmatpush1.msra.mxu0 0.0
        %1478 = vmatprep.subr.mxu0 0.0
        %1479 = vmatpush1.msra.mxu0 0.0
        %1480 = vmatprep.subr.mxu0 0.0
        %1481 = vmatpush1.msra.mxu0 0.0
        %1482 = vmatprep.subr.mxu0 0.0
        %1483 = vmatpush1.msra.mxu0 0.0
        %1484 = vmatprep.subr.mxu0 0.0
        %1485 = vmatpush1.msra.mxu0 0.0
        %1486 = vmatprep.subr.mxu0 0.0
        %1487 = vmatpush1.msra.mxu0 0.0
        %1488 = vmatprep.subr.mxu0 0.0
        %1489 = vmatpush1.msra.mxu0 0.0
        %1490 = vmatprep.subr.mxu0 0.0
        %1491 = vmatpush1.msra.mxu0 0.0
        %1492 = vmatprep.subr.mxu0 0.0
        %1493 = vmatpush1.msra.mxu0 0.0
        %1494 = vmatprep.subr.mxu0 0.0
        %1495 = vmatpush1.msra.mxu0 0.0
        %1496 = vmatprep.mubr.f32.mxu0 0.0
        %1497 = vmatmul.mubr.f32.gmra.mrb[0].mxu0 %v1427
        %v1498 = vpop.f32.mrb[0].mxu0
        %v1499 = vadd.f32 0.0, %v1498
        %v1500 = vpop.f32.mrb[0].mxu0
        %1501 = vmatprep.mubr.f32.mxu0 0.0
        %1502 = vmatmul.mubr.f32.gmra.mrb[0].mxu0 %v1430
        %v1503 = vpop.f32.mrb[0].mxu0
        %v1504 = vadd.f32 0.0, %v1503
        %v1505 = vpop.f32.mrb[0].mxu0
        %1506 = vdwg.mxu0
        %v1507 = vadd.f32 %v1417, %v1499
        %v1508 = vadd.f32 %v1418, %v1504
        %v1509 = vld [vmem:[#allocation2 + $0xf] sm:$0xff]
        %v1510 = vld [vmem:[#allocation2 + $0x17] sm:$0xff]
        %s1511 = scalar_lea.vmem %s1, 480
        %v1512 = vld [vmem:[%s1511] sm:$0xff]
        %v1513 = vld [vmem:[%s1511 + $0x8] sm:$0xff]
        %v1514 = vld [vmem:[%s1511 + $0x10] sm:$0xff]
        %v1515 = vld [vmem:[%s1511 + $0x18] sm:$0xff]
        %v1517 = vsel %vm142, %v1509, 0
        %v1520 = vsel %vm142, %v1510, 0
        %1522 = vmatprep.subr.mxu0 0.0
        %1523 = vmatpush1.msra.mxu0 %v1512
        %1524 = vmatprep.subr.mxu0 0.0
        %1525 = vmatpush1.msra.mxu0 %v1513
        %1526 = vmatprep.subr.mxu0 0.0
        %1527 = vmatpush1.msra.mxu0 %v1514
        %1528 = vmatprep.subr.mxu0 0.0
        %1529 = vmatpush1.msra.mxu0 %v1515
        %1530 = vmatprep.subr.mxu0 0.0
        %1531 = vmatpush1.msra.mxu0 0.0
        %1532 = vmatprep.subr.mxu0 0.0
        %1533 = vmatpush1.msra.mxu0 0.0
        %1534 = vmatprep.subr.mxu0 0.0
        %1535 = vmatpush1.msra.mxu0 0.0
        %1536 = vmatprep.subr.mxu0 0.0
        %1537 = vmatpush1.msra.mxu0 0.0
        %1538 = vmatprep.subr.mxu0 0.0
        %1539 = vmatpush1.msra.mxu0 0.0
        %1540 = vmatprep.subr.mxu0 0.0
        %1541 = vmatpush1.msra.mxu0 0.0
        %1542 = vmatprep.subr.mxu0 0.0
        %1543 = vmatpush1.msra.mxu0 0.0
        %1544 = vmatprep.subr.mxu0 0.0
        %1545 = vmatpush1.msra.mxu0 0.0
        %1546 = vmatprep.subr.mxu0 0.0
        %1547 = vmatpush1.msra.mxu0 0.0
        %1548 = vmatprep.subr.mxu0 0.0
        %1549 = vmatpush1.msra.mxu0 0.0
        %1550 = vmatprep.subr.mxu0 0.0
        %1551 = vmatpush1.msra.mxu0 0.0
        %1552 = vmatprep.subr.mxu0 0.0
        %1553 = vmatpush1.msra.mxu0 0.0
        %1554 = vmatprep.subr.mxu0 0.0
        %1555 = vmatpush1.msra.mxu0 0.0
        %1556 = vmatprep.subr.mxu0 0.0
        %1557 = vmatpush1.msra.mxu0 0.0
        %1558 = vmatprep.subr.mxu0 0.0
        %1559 = vmatpush1.msra.mxu0 0.0
        %1560 = vmatprep.subr.mxu0 0.0
        %1561 = vmatpush1.msra.mxu0 0.0
        %1562 = vmatprep.subr.mxu0 0.0
        %1563 = vmatpush1.msra.mxu0 0.0
        %1564 = vmatprep.subr.mxu0 0.0
        %1565 = vmatpush1.msra.mxu0 0.0
        %1566 = vmatprep.subr.mxu0 0.0
        %1567 = vmatpush1.msra.mxu0 0.0
        %1568 = vmatprep.subr.mxu0 0.0
        %1569 = vmatpush1.msra.mxu0 0.0
        %1570 = vmatprep.subr.mxu0 0.0
        %1571 = vmatpush1.msra.mxu0 0.0
        %1572 = vmatprep.subr.mxu0 0.0
        %1573 = vmatpush1.msra.mxu0 0.0
        %1574 = vmatprep.subr.mxu0 0.0
        %1575 = vmatpush1.msra.mxu0 0.0
        %1576 = vmatprep.subr.mxu0 0.0
        %1577 = vmatpush1.msra.mxu0 0.0
        %1578 = vmatprep.subr.mxu0 0.0
        %1579 = vmatpush1.msra.mxu0 0.0
        %1580 = vmatprep.subr.mxu0 0.0
        %1581 = vmatpush1.msra.mxu0 0.0
        %1582 = vmatprep.subr.mxu0 0.0
        %1583 = vmatpush1.msra.mxu0 0.0
        %1584 = vmatprep.subr.mxu0 0.0
        %1585 = vmatpush1.msra.mxu0 0.0
        %1586 = vmatprep.mubr.f32.mxu0 0.0
        %1587 = vmatmul.mubr.f32.gmra.mrb[0].mxu0 %v1517
        %v1588 = vpop.f32.mrb[0].mxu0
        %v1589 = vadd.f32 0.0, %v1588
        %v1590 = vpop.f32.mrb[0].mxu0
        %1591 = vmatprep.mubr.f32.mxu0 0.0
        %1592 = vmatmul.mubr.f32.gmra.mrb[0].mxu0 %v1520
        %v1593 = vpop.f32.mrb[0].mxu0
        %v1594 = vadd.f32 0.0, %v1593
        %v1595 = vpop.f32.mrb[0].mxu0
        %1596 = vdwg.mxu0
        %v1597 = vadd.f32 %v1507, %v1589
        %v1598 = vadd.f32 %v1508, %v1594
        %vm1599 = vcmask 130048
        %1600 = vst.msk [vmem:[%s136] sm:$0xff] %vm1599, %v1597
        %1601 = vst.msk [vmem:[%s136 + $0x8] sm:$0xff] %vm1599, %v1598
        %s1602 = sand.u32 %s71, 1
        %s1603 = scalar_lea.sflag [#allocation4], %s1602
        %s1604 = sand.u32 %s71, 1
        %s1605 = smul.addr %s1604, 16
        %s1606 = scalar_lea.vmem [#allocation3], %s1605
        // Predicated region
        $region29: #{tpu_custom_call.1} parent=27 // pred_check
          %p1607 = pneg %p81
        $region30: #{tpu_custom_call.1} parent=27 // pred_check_branch
          %1609 = sbr.rel (%p1607) target = $region32
        $region31: #{tpu_custom_call.1} parent=27 // pred_region
          %s1611 = ssub.s32 256, 256
          %1612 = vsyncadd %s1603, %s1611
          %s1613 = smul.addr %s16, 2
          %s1614 = smul.addr %s1613, 128
          %s1615 = scalar_lea.hbm %s2, %s1614
          %s1616 = sshll.u32 %s1606, 4
          %s1617 = int_to_ptr.vmem [resolvable:$true] %s1616
          %1622 = dma.vmem_to_hbm [thread:$0]  %s1617, 256, %s1615, %s1603, 128, 128, 8
        $region32: #{tpu_custom_call.1} parent=27 // pred_fallthru
          _
      $region28: #{tpu_custom_call.1} parent=5 // pred_fallthru
        _
      %p1623 = scmp.le.s32.totalorder 2, %s11
      // Predicated region
      $region33: #{tpu_custom_call.1} parent=5 // pred_check
        %p1624 = pneg %p1623
      $region34: #{tpu_custom_call.1} parent=5 // pred_check_branch
        %1626 = sbr.rel (%p1624) target = $region36
      $region35: #{tpu_custom_call.1} parent=5 // pred_region
        %s1627 = ssub.s32 %s11, 2
        // Predicated region
        $region37: #{tpu_custom_call.1} parent=35 // pred_check
          %p1628 = pneg %p87
        $region38: #{tpu_custom_call.1} parent=35 // pred_check_branch
          %1630 = sbr.rel (%p1628) target = $region40
        $region39: #{tpu_custom_call.1} parent=35 // pred_region
          %s1631 = sand.u32 %s72, 1
          %s1632 = scalar_lea.sflag [#allocation4], %s1631
          %s1633 = sand.u32 %s72, 1
          %s1634 = smul.addr %s1633, 16
          %s1635 = scalar_lea.vmem [#allocation3], %s1634
          %1636 = dma.done %s1632, 256
        $region40: #{tpu_custom_call.1} parent=35 // pred_fallthru
          _
      $region36: #{tpu_custom_call.1} parent=5 // pred_fallthru
        _
    $region6: #{tpu_custom_call.1} parent=1 // loop_footer
      %s15 = sadd.s32 1, %s11
    $region7: #{tpu_custom_call.1} parent=1 // loop_footer_branch
      %10 = sbr.rel target = $region3
    $region8: #{tpu_custom_call.1} parent=1 // loop_exit
      _
    %1637 = vsyncpa [#allocation4], 1
    %s1638 = scalar_lea.sflag [#allocation4], 1
    %1639 = vsyncpa %s1638, 1

</llo_original>
